<compile_context>
chip_gen: v7x
topology: tpu7x:2x2x1
jax: 0.10.0
libtpu: 0.0.40
codegen_flags: <defaults>
</compile_context>

<pallas_src>
import math

import numpy as np
import jax
import jax.numpy as jnp
from jax import lax
from jax.experimental import pallas as pl
from jax.experimental.pallas import tpu as pltpu

# ---------------- configuration ----------------
C = 128               # channels (lane-dense: multiple of 128)
HEADS = 4
DH = C // HEADS       # 32
HIDDEN = 2 * C
G = 4                 # independent GPSConv forward instances batched per pallas_call
NT_PAD = 128          # padded node axis per instance (MXU-native 128 rows)
BN_EPS = 1e-5
NEG_INF = -1e30       # additive mask; score/softmax path stays f32
MM_DT = jnp.bfloat16  # MXU operand dtype (f32 accumulation everywhere)


# ---------------- fused GPSConv kernel ----------------
def gps_kernel(nvalid_ref,                               # scalar prefetch: (G,) int32
               seg_col_ref, seg_row_ref, h_ref,
               wqkv_ref, bqkv_ref, wo_ref, bo_ref,
               g2_ref, be2_ref, w1_ref, b1_ref, w2_ref, b2_ref,
               g3_ref, be3_ref, o_ref):
    g = pl.program_id(0)
    nv = nvalid_ref[g]                                   # valid node count (int32 scalar)
    inv_n = 1.0 / nv.astype(jnp.float32)

    x = h_ref[...]                                       # (NT_PAD, C) f32

    # Row-validity and segment masks built in-kernel (O(N) inputs, no O(N^2) DMA).
    row_ids = lax.broadcasted_iota(jnp.int32, (NT_PAD, 1), 0)
    rowmask = (row_ids < nv).astype(jnp.float32)         # (NT_PAD, 1)
    seg_eq = seg_col_ref[...] == seg_row_ref[...]        # (NT_PAD, NT_PAD) bool

    # Fused QKV projection (1/sqrt(DH) pre-folded into q); bf16 operands, f32 acc.
    qkv = jnp.dot(x.astype(MM_DT), wqkv_ref[...],
                  preferred_element_type=jnp.float32) + bqkv_ref[...]   # (NP, 3C) f32
    wo = wo_ref[...]                                     # (C, C) bf16

    # Per-head attention with the output projection folded into the accumulation.
    attn = None
    for hh in range(HEADS):
        qh = qkv[:, hh * DH:(hh + 1) * DH].astype(MM_DT)
        kh = qkv[:, C + hh * DH:C + (hh + 1) * DH].astype(MM_DT)
        vh = qkv[:, 2 * C + hh * DH:2 * C + (hh + 1) * DH].astype(MM_DT)
        # Contract kh's last dim directly: no explicit transposed value materialized.
        s = lax.dot_general(qh, kh, dimension_numbers=(((1,), (1,)), ((), ())),
                            preferred_element_type=jnp.float32)         # (NP, NP) f32
        s = jnp.where(seg_eq, s, NEG_INF)                # segment mask (VPU select)
        m = jnp.max(s, axis=-1, keepdims=True)
        e = jnp.exp(s - m)
        p = e * pl.reciprocal(jnp.sum(e, axis=-1, keepdims=True), approx=True)
        oh = jnp.dot(p.astype(MM_DT), vh, preferred_element_type=jnp.float32)
        ho = jnp.dot(oh.astype(MM_DT), wo[hh * DH:(hh + 1) * DH, :],
                     preferred_element_type=jnp.float32)
        attn = ho if attn is None else attn + ho

    # dropout(p=0) + residual, then norm2: BatchNorm1d training-mode stats over the
    # nv valid rows; mean and E[x^2] reduced in ONE sublane pass (lane-axis concat).
    y = (attn + bo_ref[...] + x) * rowmask
    stats2 = jnp.sum(jnp.concatenate([y, y * y], axis=-1),
                     axis=0, keepdims=True) * inv_n      # (1, 2C)
    mean2 = stats2[:, :C]
    var2 = stats2[:, C:] - mean2 * mean2
    y = (y - mean2) * lax.rsqrt(var2 + BN_EPS) * g2_ref[...] + be2_ref[...]

    # out = sum(hs) = y (conv is None); MLP branch + residual.
    z = jnp.dot(y.astype(MM_DT), w1_ref[...],
                preferred_element_type=jnp.float32) + b1_ref[...]
    z = jnp.maximum(z, 0.0)                              # ReLU
    z = jnp.dot(z.astype(MM_DT), w2_ref[...],
                preferred_element_type=jnp.float32) + b2_ref[...]
    out = y + z

    # norm3: BatchNorm1d, training-mode stats over valid rows (fused reduction).
    om = out * rowmask
    stats3 = jnp.sum(jnp.concatenate([om, om * om], axis=-1),
                     axis=0, keepdims=True) * inv_n
    mean3 = stats3[:, :C]
    var3 = stats3[:, C:] - mean3 * mean3
    o_ref[...] = (out - mean3) * lax.rsqrt(var3 + BN_EPS) * g3_ref[...] + be3_ref[...]


# ---------------- wrapper ----------------
def _inst3(shape2d):
    # Per-instance input: leading G axis indexed by the grid and squeezed in-kernel.
    return pl.BlockSpec((None,) + shape2d, lambda g, nv: (g, 0, 0))


def _shared(shape2d):
    # Weights: constant block index across the grid -> fetched once, kept resident.
    return pl.BlockSpec(shape2d, lambda g, nv: (0, 0))


def gps_conv_forward(h, seg_col, seg_row, nvalid, params):
    """h: (G, NT_PAD, C) f32 (padded rows ignored); seg_*: int32; nvalid: (G,) int32."""
    grid_spec = pltpu.PrefetchScalarGridSpec(
        num_scalar_prefetch=1,
        grid=(G,),
        in_specs=[
            _inst3((NT_PAD, 1)),            # seg_col
            _inst3((1, NT_PAD)),            # seg_row
            _inst3((NT_PAD, C)),            # h
            _shared((C, 3 * C)), _shared((1, 3 * C)),      # wqkv, bqkv
            _shared((C, C)), _shared((1, C)),              # wo, bo
            _shared((1, C)), _shared((1, C)),              # g2, be2
            _shared((C, HIDDEN)), _shared((1, HIDDEN)),    # w1, b1
            _shared((HIDDEN, C)), _shared((1, C)),         # w2, b2
            _shared((1, C)), _shared((1, C)),              # g3, be3
        ],
        out_specs=_inst3((NT_PAD, C)),
    )
    return pl.pallas_call(
        gps_kernel,
        out_shape=jax.ShapeDtypeStruct((G, NT_PAD, C), jnp.float32),
        grid_spec=grid_spec,
        compiler_params=pltpu.CompilerParams(
            dimension_semantics=("parallel",),          # shard instances across TCs
            vmem_limit_bytes=32 * 1024 * 1024,          # explicit; << v7x 64 MiB physical
        ),
    )(nvalid, seg_col, seg_row, h,
      params["wqkv_t"], params["bqkv"], params["wo_t"], params["bo"],
      params["g2"], params["be2"],
      params["w1_t"], params["b1"], params["w2_t"], params["b2"],
      params["g3"], params["be3"])


def build_batch_inputs(instance_sizes):
    """Host-side segment/id construction, done ONCE (not per forward). O(N) data only."""
    seg = np.full((G, NT_PAD), -1, dtype=np.int32)      # padded rows get seg id -1
    nvalid = np.zeros((G,), dtype=np.int32)
    for g, sizes in enumerate(instance_sizes):
        ids = np.repeat(np.arange(len(sizes)), sizes).astype(np.int32)
        n = ids.shape[0]
        assert n <= NT_PAD
        seg[g, :n] = ids
        nvalid[g] = n
    seg_col = jnp.asarray(seg[:, :, None])              # (G, NT_PAD, 1) int32
    seg_row = jnp.asarray(seg[:, None, :])              # (G, 1, NT_PAD) int32
    return seg_col, seg_row, jnp.asarray(nvalid), nvalid


def init_params(key):
    ks = jax.random.split(key, 8)
    f32 = jnp.float32
    # MultiheadAttention: in_proj_weight (3C,C), in_proj_bias (3C), out_proj (C,C)+bias.
    in_proj_w = jax.random.normal(ks[0], (3 * C, C), f32) / math.sqrt(C)
    in_proj_b = jax.random.normal(ks[1], (3 * C,), f32) * 0.02
    out_proj_w = jax.random.normal(ks[2], (C, C), f32) / math.sqrt(C)
    out_proj_b = jax.random.normal(ks[3], (C,), f32) * 0.02
    # MLP: Linear(C, 2C), Linear(2C, C)   (PyTorch weight layout is (out, in)).
    w1 = jax.random.normal(ks[4], (HIDDEN, C), f32) / math.sqrt(C)
    b1 = jax.random.normal(ks[5], (HIDDEN,), f32) * 0.02
    w2 = jax.random.normal(ks[6], (C, HIDDEN), f32) / math.sqrt(HIDDEN)
    b2 = jax.random.normal(ks[7], (C,), f32) * 0.02

    # Fold the 1/sqrt(DH) attention scale into the q projection (weights AND bias).
    scale = 1.0 / math.sqrt(DH)
    wqkv_t = in_proj_w.T
    wqkv_t = wqkv_t.at[:, :C].multiply(scale)
    bqkv = in_proj_b.reshape(1, 3 * C)
    bqkv = bqkv.at[:, :C].multiply(scale)

    ones = jnp.ones((1, C), f32)
    zeros = jnp.zeros((1, C), f32)
    return {
        # MXU operands shipped as bf16 (f32 accumulation in-kernel); biases stay f32.
        "wqkv_t": wqkv_t.astype(MM_DT),                 # (C, 3C), q-scaled
        "bqkv": bqkv,                                   # (1, 3C) f32, q-scaled
        "wo_t": out_proj_w.T.astype(MM_DT),             # (C, C)
        "bo": out_proj_b.reshape(1, C),
        "w1_t": w1.T.astype(MM_DT),                     # (C, 2C)
        "b1": b1.reshape(1, HIDDEN),
        "w2_t": w2.T.astype(MM_DT),                     # (2C, C)
        "b2": b2.reshape(1, C),
        "g2": ones, "be2": zeros,                       # BatchNorm1d defaults
        "g3": ones, "be3": zeros,
    }


if __name__ == "__main__":
    key = jax.random.PRNGKey(0)
    k_h, k_p = jax.random.split(key)

    # G independent GPSConv forward instances, each a multi-graph batch of nodes.
    instance_sizes = [
        [40, 32, 28, 20],          # 120 nodes
        [64, 40],                  # 104 nodes
        [30, 30, 30, 30, 8],       # 128 nodes
        [96, 16],                  # 112 nodes
    ]
    seg_col, seg_row, nvalid_dev, nvalid_np = build_batch_inputs(instance_sizes)

    # Node features, padded node axis; zero the padded rows (they never influence
    # valid outputs, masked out of attention and of both BatchNorm reductions).
    h = jax.random.normal(k_h, (G, NT_PAD, C), jnp.float32)
    valid = (np.arange(NT_PAD)[None, :] < nvalid_np[:, None]).astype(np.float32)
    h = h * jnp.asarray(valid)[:, :, None]

    params = init_params(k_p)
    out = gps_conv_forward(h, seg_col, seg_row, nvalid_dev, params)
    out = jax.block_until_ready(out)

    assert out.shape == (G, NT_PAD, C) and out.dtype == jnp.float32
    assert bool(jnp.all(jnp.isfinite(out)))
    # Per-instance valid node outputs are out[g, :nvalid_np[g], :].
    print("KERNEL_OK")
</pallas_src>

<mosaic_0001>
module attributes {stable_mosaic.version = 11 : i64} {
  func.func @gps_kernel(%arg0: i32, %arg1: memref<4xi32, #tpu.memory_space<smem>>, %arg2: memref<1x128x1xi32, #tpu.memory_space<vmem>>, %arg3: memref<1x1x128xi32, #tpu.memory_space<vmem>>, %arg4: memref<1x128x128xf32, #tpu.memory_space<vmem>>, %arg5: memref<128x384xbf16, #tpu.memory_space<vmem>>, %arg6: memref<1x384xf32, #tpu.memory_space<vmem>>, %arg7: memref<128x128xbf16, #tpu.memory_space<vmem>>, %arg8: memref<1x128xf32, #tpu.memory_space<vmem>>, %arg9: memref<1x128xf32, #tpu.memory_space<vmem>>, %arg10: memref<1x128xf32, #tpu.memory_space<vmem>>, %arg11: memref<128x256xbf16, #tpu.memory_space<vmem>>, %arg12: memref<1x256xf32, #tpu.memory_space<vmem>>, %arg13: memref<256x128xbf16, #tpu.memory_space<vmem>>, %arg14: memref<1x128xf32, #tpu.memory_space<vmem>>, %arg15: memref<1x128xf32, #tpu.memory_space<vmem>>, %arg16: memref<1x128xf32, #tpu.memory_space<vmem>>, %arg17: memref<1x128x128xf32, #tpu.memory_space<vmem>>) attributes {dimension_semantics = [#tpu.dimension_semantics<parallel>], iteration_bounds = array<i64: 4>, scalar_prefetch = 1 : i64, scratch_operands = 0 : i64, tpu.core_type = #tpu.core_type<tc>, window_params = [{transform_indices = @transform_0, window_bounds = array<i64: 1, 128, 1>}, {transform_indices = @transform_1, window_bounds = array<i64: 1, 1, 128>}, {transform_indices = @transform_2, window_bounds = array<i64: 1, 128, 128>}, {pipeline_mode = #tpu.pipeline_mode<synchronous>, transform_indices = @transform_3, window_bounds = array<i64: 128, 384>}, {pipeline_mode = #tpu.pipeline_mode<synchronous>, transform_indices = @transform_4, window_bounds = array<i64: 1, 384>}, {pipeline_mode = #tpu.pipeline_mode<synchronous>, transform_indices = @transform_5, window_bounds = array<i64: 128, 128>}, {pipeline_mode = #tpu.pipeline_mode<synchronous>, transform_indices = @transform_6, window_bounds = array<i64: 1, 128>}, {pipeline_mode = #tpu.pipeline_mode<synchronous>, transform_indices = @transform_7, window_bounds = array<i64: 1, 128>}, {pipeline_mode = #tpu.pipeline_mode<synchronous>, transform_indices = @transform_8, window_bounds = array<i64: 1, 128>}, {pipeline_mode = #tpu.pipeline_mode<synchronous>, transform_indices = @transform_9, window_bounds = array<i64: 128, 256>}, {pipeline_mode = #tpu.pipeline_mode<synchronous>, transform_indices = @transform_10, window_bounds = array<i64: 1, 256>}, {pipeline_mode = #tpu.pipeline_mode<synchronous>, transform_indices = @transform_11, window_bounds = array<i64: 256, 128>}, {pipeline_mode = #tpu.pipeline_mode<synchronous>, transform_indices = @transform_12, window_bounds = array<i64: 1, 128>}, {pipeline_mode = #tpu.pipeline_mode<synchronous>, transform_indices = @transform_13, window_bounds = array<i64: 1, 128>}, {pipeline_mode = #tpu.pipeline_mode<synchronous>, transform_indices = @transform_14, window_bounds = array<i64: 1, 128>}, {transform_indices = @transform_15, window_bounds = array<i64: 1, 128, 128>}]} {
    %0 = arith.index_cast %arg0 : i32 to index
    %1 = memref.load %arg1[%0] : memref<4xi32, #tpu.memory_space<smem>>
    %2 = arith.sitofp %1 : i32 to f32
    %cst = arith.constant 1.000000e+00 : f32
    %3 = arith.divf %cst, %2 : f32
    %c0 = arith.constant 0 : index
    %c0_0 = arith.constant 0 : index
    %c0_1 = arith.constant 0 : index
    %4 = vector.load %arg4[%c0, %c0_0, %c0_1] : memref<1x128x128xf32, #tpu.memory_space<vmem>>, vector<1x128x128xf32>
    %5 = vector.shape_cast %4 : vector<1x128x128xf32> to vector<128x128xf32>
    %6 = tpu.iota {dimensions = array<i32: 0>} : vector<128x1xi32>
    %7 = vector.broadcast %1 : i32 to vector<128x1xi32>
    %8 = arith.cmpi slt, %6, %7 : vector<128x1xi32>
    %9 = arith.extui %8 : vector<128x1xi1> to vector<128x1xi32>
    %10 = arith.sitofp %9 : vector<128x1xi32> to vector<128x1xf32>
    %c0_2 = arith.constant 0 : index
    %c0_3 = arith.constant 0 : index
    %c0_4 = arith.constant 0 : index
    %11 = vector.load %arg2[%c0_2, %c0_3, %c0_4] : memref<1x128x1xi32, #tpu.memory_space<vmem>>, vector<1x128x1xi32>
    %12 = vector.shape_cast %11 : vector<1x128x1xi32> to vector<128x1xi32>
    %c0_5 = arith.constant 0 : index
    %c0_6 = arith.constant 0 : index
    %c0_7 = arith.constant 0 : index
    %13 = vector.load %arg3[%c0_5, %c0_6, %c0_7] : memref<1x1x128xi32, #tpu.memory_space<vmem>>, vector<1x1x128xi32>
    %14 = vector.shape_cast %13 : vector<1x1x128xi32> to vector<1x128xi32>
    %15 = vector.broadcast %12 : vector<128x1xi32> to vector<128x128xi32>
    %16 = vector.broadcast %14 : vector<1x128xi32> to vector<128x128xi32>
    %17 = arith.cmpi eq, %15, %16 : vector<128x128xi32>
    %18 = arith.truncf %5 : vector<128x128xf32> to vector<128x128xbf16>
    %c0_8 = arith.constant 0 : index
    %c0_9 = arith.constant 0 : index
    %19 = vector.load %arg5[%c0_8, %c0_9] : memref<128x384xbf16, #tpu.memory_space<vmem>>, vector<128x384xbf16>
    %cst_10 = arith.constant dense<0.000000e+00> : vector<128x384xf32>
    %20 = tpu.matmul %18, %19, %cst_10 {dimension_numbers = #tpu.dot_dimension_numbers<[1], [0], [0], [1], [0, 0, 1, 1], [], []>} : vector<128x128xbf16>, vector<128x384xbf16>, vector<128x384xf32> -> vector<128x384xf32>
    %c0_11 = arith.constant 0 : index
    %c0_12 = arith.constant 0 : index
    %21 = vector.load %arg6[%c0_11, %c0_12] : memref<1x384xf32, #tpu.memory_space<vmem>>, vector<1x384xf32>
    %22 = vector.broadcast %21 : vector<1x384xf32> to vector<128x384xf32>
    %23 = arith.addf %20, %22 : vector<128x384xf32>
    %c0_13 = arith.constant 0 : index
    %c0_14 = arith.constant 0 : index
    %24 = vector.load %arg7[%c0_13, %c0_14] : memref<128x128xbf16, #tpu.memory_space<vmem>>, vector<128x128xbf16>
    %25 = vector.extract_strided_slice %23 {offsets = [0, 0], sizes = [128, 32], strides = [1, 1]} : vector<128x384xf32> to vector<128x32xf32>
    %26 = arith.truncf %25 : vector<128x32xf32> to vector<128x32xbf16>
    %27 = vector.extract_strided_slice %23 {offsets = [0, 128], sizes = [128, 32], strides = [1, 1]} : vector<128x384xf32> to vector<128x32xf32>
    %28 = arith.truncf %27 : vector<128x32xf32> to vector<128x32xbf16>
    %29 = vector.extract_strided_slice %23 {offsets = [0, 256], sizes = [128, 32], strides = [1, 1]} : vector<128x384xf32> to vector<128x32xf32>
    %30 = arith.truncf %29 : vector<128x32xf32> to vector<128x32xbf16>
    %cst_15 = arith.constant dense<0.000000e+00> : vector<128x128xf32>
    %31 = tpu.matmul %26, %28, %cst_15 {dimension_numbers = #tpu.dot_dimension_numbers<[1], [1], [0], [0], [0, 0, 1, 0], [], []>} : vector<128x32xbf16>, vector<128x32xbf16>, vector<128x128xf32> -> vector<128x128xf32>
    %cst_16 = arith.constant -1.000000e+30 : f32
    %32 = vector.broadcast %cst_16 : f32 to vector<128x128xf32>
    %33 = arith.select %17, %31, %32 : vector<128x128xi1>, vector<128x128xf32>
    %cst_17 = arith.constant dense<0xFF800000> : vector<128xf32>
    %34 = vector.multi_reduction <maximumf>, %33, %cst_17 [1] : vector<128x128xf32> to vector<128xf32>
    %35 = vector.shape_cast %34 : vector<128xf32> to vector<128x1xf32>
    %36 = vector.broadcast %35 : vector<128x1xf32> to vector<128x128xf32>
    %37 = arith.subf %33, %36 : vector<128x128xf32>
    %38 = math.exp %37 : vector<128x128xf32>
    %cst_18 = arith.constant dense<0.000000e+00> : vector<128xf32>
    %39 = vector.multi_reduction <add>, %38, %cst_18 [1] : vector<128x128xf32> to vector<128xf32>
    %40 = vector.shape_cast %39 : vector<128xf32> to vector<128x1xf32>
    %41 = tpu.reciprocal %40 {approx = true} : vector<128x1xf32> -> vector<128x1xf32>
    %42 = vector.broadcast %41 : vector<128x1xf32> to vector<128x128xf32>
    %43 = arith.mulf %38, %42 : vector<128x128xf32>
    %44 = arith.truncf %43 : vector<128x128xf32> to vector<128x128xbf16>
    %cst_19 = arith.constant dense<0.000000e+00> : vector<128x32xf32>
    %45 = tpu.matmul %44, %30, %cst_19 {dimension_numbers = #tpu.dot_dimension_numbers<[1], [0], [0], [1], [0, 0, 1, 1], [], []>} : vector<128x128xbf16>, vector<128x32xbf16>, vector<128x32xf32> -> vector<128x32xf32>
    %46 = arith.truncf %45 : vector<128x32xf32> to vector<128x32xbf16>
    %47 = vector.extract_strided_slice %24 {offsets = [0, 0], sizes = [32, 128], strides = [1, 1]} : vector<128x128xbf16> to vector<32x128xbf16>
    %cst_20 = arith.constant dense<0.000000e+00> : vector<128x128xf32>
    %48 = tpu.matmul %46, %47, %cst_20 {dimension_numbers = #tpu.dot_dimension_numbers<[1], [0], [0], [1], [0, 0, 1, 1], [], []>} : vector<128x32xbf16>, vector<32x128xbf16>, vector<128x128xf32> -> vector<128x128xf32>
    %49 = vector.extract_strided_slice %23 {offsets = [0, 32], sizes = [128, 32], strides = [1, 1]} : vector<128x384xf32> to vector<128x32xf32>
    %50 = arith.truncf %49 : vector<128x32xf32> to vector<128x32xbf16>
    %51 = vector.extract_strided_slice %23 {offsets = [0, 160], sizes = [128, 32], strides = [1, 1]} : vector<128x384xf32> to vector<128x32xf32>
    %52 = arith.truncf %51 : vector<128x32xf32> to vector<128x32xbf16>
    %53 = vector.extract_strided_slice %23 {offsets = [0, 288], sizes = [128, 32], strides = [1, 1]} : vector<128x384xf32> to vector<128x32xf32>
    %54 = arith.truncf %53 : vector<128x32xf32> to vector<128x32xbf16>
    %cst_21 = arith.constant dense<0.000000e+00> : vector<128x128xf32>
    %55 = tpu.matmul %50, %52, %cst_21 {dimension_numbers = #tpu.dot_dimension_numbers<[1], [1], [0], [0], [0, 0, 1, 0], [], []>} : vector<128x32xbf16>, vector<128x32xbf16>, vector<128x128xf32> -> vector<128x128xf32>
    %cst_22 = arith.constant -1.000000e+30 : f32
    %56 = vector.broadcast %cst_22 : f32 to vector<128x128xf32>
    %57 = arith.select %17, %55, %56 : vector<128x128xi1>, vector<128x128xf32>
    %cst_23 = arith.constant dense<0xFF800000> : vector<128xf32>
    %58 = vector.multi_reduction <maximumf>, %57, %cst_23 [1] : vector<128x128xf32> to vector<128xf32>
    %59 = vector.shape_cast %58 : vector<128xf32> to vector<128x1xf32>
    %60 = vector.broadcast %59 : vector<128x1xf32> to vector<128x128xf32>
    %61 = arith.subf %57, %60 : vector<128x128xf32>
    %62 = math.exp %61 : vector<128x128xf32>
    %cst_24 = arith.constant dense<0.000000e+00> : vector<128xf32>
    %63 = vector.multi_reduction <add>, %62, %cst_24 [1] : vector<128x128xf32> to vector<128xf32>
    %64 = vector.shape_cast %63 : vector<128xf32> to vector<128x1xf32>
    %65 = tpu.reciprocal %64 {approx = true} : vector<128x1xf32> -> vector<128x1xf32>
    %66 = vector.broadcast %65 : vector<128x1xf32> to vector<128x128xf32>
    %67 = arith.mulf %62, %66 : vector<128x128xf32>
    %68 = arith.truncf %67 : vector<128x128xf32> to vector<128x128xbf16>
    %cst_25 = arith.constant dense<0.000000e+00> : vector<128x32xf32>
    %69 = tpu.matmul %68, %54, %cst_25 {dimension_numbers = #tpu.dot_dimension_numbers<[1], [0], [0], [1], [0, 0, 1, 1], [], []>} : vector<128x128xbf16>, vector<128x32xbf16>, vector<128x32xf32> -> vector<128x32xf32>
    %70 = arith.truncf %69 : vector<128x32xf32> to vector<128x32xbf16>
    %71 = vector.extract_strided_slice %24 {offsets = [32, 0], sizes = [32, 128], strides = [1, 1]} : vector<128x128xbf16> to vector<32x128xbf16>
    %cst_26 = arith.constant dense<0.000000e+00> : vector<128x128xf32>
    %72 = tpu.matmul %70, %71, %cst_26 {dimension_numbers = #tpu.dot_dimension_numbers<[1], [0], [0], [1], [0, 0, 1, 1], [], []>} : vector<128x32xbf16>, vector<32x128xbf16>, vector<128x128xf32> -> vector<128x128xf32>
    %73 = arith.addf %48, %72 : vector<128x128xf32>
    %74 = vector.extract_strided_slice %23 {offsets = [0, 64], sizes = [128, 32], strides = [1, 1]} : vector<128x384xf32> to vector<128x32xf32>
    %75 = arith.truncf %74 : vector<128x32xf32> to vector<128x32xbf16>
    %76 = vector.extract_strided_slice %23 {offsets = [0, 192], sizes = [128, 32], strides = [1, 1]} : vector<128x384xf32> to vector<128x32xf32>
    %77 = arith.truncf %76 : vector<128x32xf32> to vector<128x32xbf16>
    %78 = vector.extract_strided_slice %23 {offsets = [0, 320], sizes = [128, 32], strides = [1, 1]} : vector<128x384xf32> to vector<128x32xf32>
    %79 = arith.truncf %78 : vector<128x32xf32> to vector<128x32xbf16>
    %cst_27 = arith.constant dense<0.000000e+00> : vector<128x128xf32>
    %80 = tpu.matmul %75, %77, %cst_27 {dimension_numbers = #tpu.dot_dimension_numbers<[1], [1], [0], [0], [0, 0, 1, 0], [], []>} : vector<128x32xbf16>, vector<128x32xbf16>, vector<128x128xf32> -> vector<128x128xf32>
    %cst_28 = arith.constant -1.000000e+30 : f32
    %81 = vector.broadcast %cst_28 : f32 to vector<128x128xf32>
    %82 = arith.select %17, %80, %81 : vector<128x128xi1>, vector<128x128xf32>
    %cst_29 = arith.constant dense<0xFF800000> : vector<128xf32>
    %83 = vector.multi_reduction <maximumf>, %82, %cst_29 [1] : vector<128x128xf32> to vector<128xf32>
    %84 = vector.shape_cast %83 : vector<128xf32> to vector<128x1xf32>
    %85 = vector.broadcast %84 : vector<128x1xf32> to vector<128x128xf32>
    %86 = arith.subf %82, %85 : vector<128x128xf32>
    %87 = math.exp %86 : vector<128x128xf32>
    %cst_30 = arith.constant dense<0.000000e+00> : vector<128xf32>
    %88 = vector.multi_reduction <add>, %87, %cst_30 [1] : vector<128x128xf32> to vector<128xf32>
    %89 = vector.shape_cast %88 : vector<128xf32> to vector<128x1xf32>
    %90 = tpu.reciprocal %89 {approx = true} : vector<128x1xf32> -> vector<128x1xf32>
    %91 = vector.broadcast %90 : vector<128x1xf32> to vector<128x128xf32>
    %92 = arith.mulf %87, %91 : vector<128x128xf32>
    %93 = arith.truncf %92 : vector<128x128xf32> to vector<128x128xbf16>
    %cst_31 = arith.constant dense<0.000000e+00> : vector<128x32xf32>
    %94 = tpu.matmul %93, %79, %cst_31 {dimension_numbers = #tpu.dot_dimension_numbers<[1], [0], [0], [1], [0, 0, 1, 1], [], []>} : vector<128x128xbf16>, vector<128x32xbf16>, vector<128x32xf32> -> vector<128x32xf32>
    %95 = arith.truncf %94 : vector<128x32xf32> to vector<128x32xbf16>
    %96 = vector.extract_strided_slice %24 {offsets = [64, 0], sizes = [32, 128], strides = [1, 1]} : vector<128x128xbf16> to vector<32x128xbf16>
    %cst_32 = arith.constant dense<0.000000e+00> : vector<128x128xf32>
    %97 = tpu.matmul %95, %96, %cst_32 {dimension_numbers = #tpu.dot_dimension_numbers<[1], [0], [0], [1], [0, 0, 1, 1], [], []>} : vector<128x32xbf16>, vector<32x128xbf16>, vector<128x128xf32> -> vector<128x128xf32>
    %98 = arith.addf %73, %97 : vector<128x128xf32>
    %99 = vector.extract_strided_slice %23 {offsets = [0, 96], sizes = [128, 32], strides = [1, 1]} : vector<128x384xf32> to vector<128x32xf32>
    %100 = arith.truncf %99 : vector<128x32xf32> to vector<128x32xbf16>
    %101 = vector.extract_strided_slice %23 {offsets = [0, 224], sizes = [128, 32], strides = [1, 1]} : vector<128x384xf32> to vector<128x32xf32>
    %102 = arith.truncf %101 : vector<128x32xf32> to vector<128x32xbf16>
    %103 = vector.extract_strided_slice %23 {offsets = [0, 352], sizes = [128, 32], strides = [1, 1]} : vector<128x384xf32> to vector<128x32xf32>
    %104 = arith.truncf %103 : vector<128x32xf32> to vector<128x32xbf16>
    %cst_33 = arith.constant dense<0.000000e+00> : vector<128x128xf32>
    %105 = tpu.matmul %100, %102, %cst_33 {dimension_numbers = #tpu.dot_dimension_numbers<[1], [1], [0], [0], [0, 0, 1, 0], [], []>} : vector<128x32xbf16>, vector<128x32xbf16>, vector<128x128xf32> -> vector<128x128xf32>
    %cst_34 = arith.constant -1.000000e+30 : f32
    %106 = vector.broadcast %cst_34 : f32 to vector<128x128xf32>
    %107 = arith.select %17, %105, %106 : vector<128x128xi1>, vector<128x128xf32>
    %cst_35 = arith.constant dense<0xFF800000> : vector<128xf32>
    %108 = vector.multi_reduction <maximumf>, %107, %cst_35 [1] : vector<128x128xf32> to vector<128xf32>
    %109 = vector.shape_cast %108 : vector<128xf32> to vector<128x1xf32>
    %110 = vector.broadcast %109 : vector<128x1xf32> to vector<128x128xf32>
    %111 = arith.subf %107, %110 : vector<128x128xf32>
    %112 = math.exp %111 : vector<128x128xf32>
    %cst_36 = arith.constant dense<0.000000e+00> : vector<128xf32>
    %113 = vector.multi_reduction <add>, %112, %cst_36 [1] : vector<128x128xf32> to vector<128xf32>
    %114 = vector.shape_cast %113 : vector<128xf32> to vector<128x1xf32>
    %115 = tpu.reciprocal %114 {approx = true} : vector<128x1xf32> -> vector<128x1xf32>
    %116 = vector.broadcast %115 : vector<128x1xf32> to vector<128x128xf32>
    %117 = arith.mulf %112, %116 : vector<128x128xf32>
    %118 = arith.truncf %117 : vector<128x128xf32> to vector<128x128xbf16>
    %cst_37 = arith.constant dense<0.000000e+00> : vector<128x32xf32>
    %119 = tpu.matmul %118, %104, %cst_37 {dimension_numbers = #tpu.dot_dimension_numbers<[1], [0], [0], [1], [0, 0, 1, 1], [], []>} : vector<128x128xbf16>, vector<128x32xbf16>, vector<128x32xf32> -> vector<128x32xf32>
    %120 = arith.truncf %119 : vector<128x32xf32> to vector<128x32xbf16>
    %121 = vector.extract_strided_slice %24 {offsets = [96, 0], sizes = [32, 128], strides = [1, 1]} : vector<128x128xbf16> to vector<32x128xbf16>
    %cst_38 = arith.constant dense<0.000000e+00> : vector<128x128xf32>
    %122 = tpu.matmul %120, %121, %cst_38 {dimension_numbers = #tpu.dot_dimension_numbers<[1], [0], [0], [1], [0, 0, 1, 1], [], []>} : vector<128x32xbf16>, vector<32x128xbf16>, vector<128x128xf32> -> vector<128x128xf32>
    %123 = arith.addf %98, %122 : vector<128x128xf32>
    %c0_39 = arith.constant 0 : index
    %c0_40 = arith.constant 0 : index
    %124 = vector.load %arg8[%c0_39, %c0_40] : memref<1x128xf32, #tpu.memory_space<vmem>>, vector<1x128xf32>
    %125 = vector.broadcast %124 : vector<1x128xf32> to vector<128x128xf32>
    %126 = arith.addf %123, %125 : vector<128x128xf32>
    %127 = arith.addf %126, %5 : vector<128x128xf32>
    %128 = vector.broadcast %10 : vector<128x1xf32> to vector<128x128xf32>
    %129 = arith.mulf %127, %128 : vector<128x128xf32>
    %130 = arith.mulf %129, %129 : vector<128x128xf32>
    %131 = tpu.concatenate %129, %130 in 1 : vector<128x128xf32>, vector<128x128xf32> -> vector<128x256xf32>
    %cst_41 = arith.constant dense<0.000000e+00> : vector<256xf32>
    %132 = vector.multi_reduction <add>, %131, %cst_41 [0] : vector<128x256xf32> to vector<256xf32>
    %133 = vector.shape_cast %132 : vector<256xf32> to vector<1x256xf32>
    %134 = vector.broadcast %3 : f32 to vector<1x256xf32>
    %135 = arith.mulf %133, %134 : vector<1x256xf32>
    %136 = vector.extract_strided_slice %135 {offsets = [0, 0], sizes = [1, 128], strides = [1, 1]} : vector<1x256xf32> to vector<1x128xf32>
    %137 = vector.extract_strided_slice %135 {offsets = [0, 128], sizes = [1, 128], strides = [1, 1]} : vector<1x256xf32> to vector<1x128xf32>
    %138 = arith.mulf %136, %136 : vector<1x128xf32>
    %139 = arith.subf %137, %138 : vector<1x128xf32>
    %140 = vector.broadcast %136 : vector<1x128xf32> to vector<128x128xf32>
    %141 = arith.subf %129, %140 : vector<128x128xf32>
    %cst_42 = arith.constant 9.99999974E-6 : f32
    %142 = vector.broadcast %cst_42 : f32 to vector<1x128xf32>
    %143 = arith.addf %139, %142 : vector<1x128xf32>
    %144 = math.rsqrt %143 : vector<1x128xf32>
    %145 = vector.broadcast %144 : vector<1x128xf32> to vector<128x128xf32>
    %146 = arith.mulf %141, %145 : vector<128x128xf32>
    %c0_43 = arith.constant 0 : index
    %c0_44 = arith.constant 0 : index
    %147 = vector.load %arg9[%c0_43, %c0_44] : memref<1x128xf32, #tpu.memory_space<vmem>>, vector<1x128xf32>
    %148 = vector.broadcast %147 : vector<1x128xf32> to vector<128x128xf32>
    %149 = arith.mulf %146, %148 : vector<128x128xf32>
    %c0_45 = arith.constant 0 : index
    %c0_46 = arith.constant 0 : index
    %150 = vector.load %arg10[%c0_45, %c0_46] : memref<1x128xf32, #tpu.memory_space<vmem>>, vector<1x128xf32>
    %151 = vector.broadcast %150 : vector<1x128xf32> to vector<128x128xf32>
    %152 = arith.addf %149, %151 : vector<128x128xf32>
    %153 = arith.truncf %152 : vector<128x128xf32> to vector<128x128xbf16>
    %c0_47 = arith.constant 0 : index
    %c0_48 = arith.constant 0 : index
    %154 = vector.load %arg11[%c0_47, %c0_48] : memref<128x256xbf16, #tpu.memory_space<vmem>>, vector<128x256xbf16>
    %cst_49 = arith.constant dense<0.000000e+00> : vector<128x256xf32>
    %155 = tpu.matmul %153, %154, %cst_49 {dimension_numbers = #tpu.dot_dimension_numbers<[1], [0], [0], [1], [0, 0, 1, 1], [], []>} : vector<128x128xbf16>, vector<128x256xbf16>, vector<128x256xf32> -> vector<128x256xf32>
    %c0_50 = arith.constant 0 : index
    %c0_51 = arith.constant 0 : index
    %156 = vector.load %arg12[%c0_50, %c0_51] : memref<1x256xf32, #tpu.memory_space<vmem>>, vector<1x256xf32>
    %157 = vector.broadcast %156 : vector<1x256xf32> to vector<128x256xf32>
    %158 = arith.addf %155, %157 : vector<128x256xf32>
    %cst_52 = arith.constant 0.000000e+00 : f32
    %159 = vector.broadcast %cst_52 : f32 to vector<128x256xf32>
    %160 = arith.maximumf %158, %159 : vector<128x256xf32>
    %161 = arith.truncf %160 : vector<128x256xf32> to vector<128x256xbf16>
    %c0_53 = arith.constant 0 : index
    %c0_54 = arith.constant 0 : index
    %162 = vector.load %arg13[%c0_53, %c0_54] : memref<256x128xbf16, #tpu.memory_space<vmem>>, vector<256x128xbf16>
    %cst_55 = arith.constant dense<0.000000e+00> : vector<128x128xf32>
    %163 = tpu.matmul %161, %162, %cst_55 {dimension_numbers = #tpu.dot_dimension_numbers<[1], [0], [0], [1], [0, 0, 1, 1], [], []>} : vector<128x256xbf16>, vector<256x128xbf16>, vector<128x128xf32> -> vector<128x128xf32>
    %c0_56 = arith.constant 0 : index
    %c0_57 = arith.constant 0 : index
    %164 = vector.load %arg14[%c0_56, %c0_57] : memref<1x128xf32, #tpu.memory_space<vmem>>, vector<1x128xf32>
    %165 = vector.broadcast %164 : vector<1x128xf32> to vector<128x128xf32>
    %166 = arith.addf %163, %165 : vector<128x128xf32>
    %167 = arith.addf %152, %166 : vector<128x128xf32>
    %168 = vector.broadcast %10 : vector<128x1xf32> to vector<128x128xf32>
    %169 = arith.mulf %167, %168 : vector<128x128xf32>
    %170 = arith.mulf %169, %169 : vector<128x128xf32>
    %171 = tpu.concatenate %169, %170 in 1 : vector<128x128xf32>, vector<128x128xf32> -> vector<128x256xf32>
    %cst_58 = arith.constant dense<0.000000e+00> : vector<256xf32>
    %172 = vector.multi_reduction <add>, %171, %cst_58 [0] : vector<128x256xf32> to vector<256xf32>
    %173 = vector.shape_cast %172 : vector<256xf32> to vector<1x256xf32>
    %174 = vector.broadcast %3 : f32 to vector<1x256xf32>
    %175 = arith.mulf %173, %174 : vector<1x256xf32>
    %176 = vector.extract_strided_slice %175 {offsets = [0, 0], sizes = [1, 128], strides = [1, 1]} : vector<1x256xf32> to vector<1x128xf32>
    %177 = vector.extract_strided_slice %175 {offsets = [0, 128], sizes = [1, 128], strides = [1, 1]} : vector<1x256xf32> to vector<1x128xf32>
    %178 = arith.mulf %176, %176 : vector<1x128xf32>
    %179 = arith.subf %177, %178 : vector<1x128xf32>
    %180 = vector.broadcast %176 : vector<1x128xf32> to vector<128x128xf32>
    %181 = arith.subf %167, %180 : vector<128x128xf32>
    %cst_59 = arith.constant 9.99999974E-6 : f32
    %182 = vector.broadcast %cst_59 : f32 to vector<1x128xf32>
    %183 = arith.addf %179, %182 : vector<1x128xf32>
    %184 = math.rsqrt %183 : vector<1x128xf32>
    %185 = vector.broadcast %184 : vector<1x128xf32> to vector<128x128xf32>
    %186 = arith.mulf %181, %185 : vector<128x128xf32>
    %c0_60 = arith.constant 0 : index
    %c0_61 = arith.constant 0 : index
    %187 = vector.load %arg15[%c0_60, %c0_61] : memref<1x128xf32, #tpu.memory_space<vmem>>, vector<1x128xf32>
    %188 = vector.broadcast %187 : vector<1x128xf32> to vector<128x128xf32>
    %189 = arith.mulf %186, %188 : vector<128x128xf32>
    %c0_62 = arith.constant 0 : index
    %c0_63 = arith.constant 0 : index
    %190 = vector.load %arg16[%c0_62, %c0_63] : memref<1x128xf32, #tpu.memory_space<vmem>>, vector<1x128xf32>
    %191 = vector.broadcast %190 : vector<1x128xf32> to vector<128x128xf32>
    %192 = arith.addf %189, %191 : vector<128x128xf32>
    %c0_64 = arith.constant 0 : index
    %c0_65 = arith.constant 0 : index
    %c0_66 = arith.constant 0 : index
    %193 = vector.load %arg17[%c0_64, %c0_65, %c0_66] : memref<1x128x128xf32, #tpu.memory_space<vmem>>, vector<1x128x128xf32>
    %194 = vector.shape_cast %193 : vector<1x128x128xf32> to vector<128x128xf32>
    %195 = vector.shape_cast %192 : vector<128x128xf32> to vector<1x128x128xf32>
    tpu.vector_store %arg17[%c0_64, %c0_65, %c0_66], %195 {strides = array<i32>} : memref<1x128x128xf32, #tpu.memory_space<vmem>>, vector<1x128x128xf32>,
    return
  }
  func.func @transform_0(%arg0: i32, %arg1: memref<4xi32, #tpu.memory_space<smem>>) -> (i32, i32, i32) {
    %c0_i32 = arith.constant 0 : i32
    %c0_i32_0 = arith.constant 0 : i32
    %c0_i32_1 = arith.constant 0 : i32
    return %arg0, %c0_i32, %c0_i32_0 : i32, i32, i32
  }
  func.func @transform_1(%arg0: i32, %arg1: memref<4xi32, #tpu.memory_space<smem>>) -> (i32, i32, i32) {
    %c0_i32 = arith.constant 0 : i32
    %c0_i32_0 = arith.constant 0 : i32
    %c0_i32_1 = arith.constant 0 : i32
    return %arg0, %c0_i32, %c0_i32_0 : i32, i32, i32
  }
  func.func @transform_2(%arg0: i32, %arg1: memref<4xi32, #tpu.memory_space<smem>>) -> (i32, i32, i32) {
    %c0_i32 = arith.constant 0 : i32
    %c0_i32_0 = arith.constant 0 : i32
    %c0_i32_1 = arith.constant 0 : i32
    return %arg0, %c0_i32, %c0_i32_0 : i32, i32, i32
  }
  func.func @transform_3(%arg0: i32, %arg1: memref<4xi32, #tpu.memory_space<smem>>) -> (i32, i32) {
    %c0_i32 = arith.constant 0 : i32
    %c0_i32_0 = arith.constant 0 : i32
    %c0_i32_1 = arith.constant 0 : i32
    return %c0_i32, %c0_i32_0 : i32, i32
  }
  func.func @transform_4(%arg0: i32, %arg1: memref<4xi32, #tpu.memory_space<smem>>) -> (i32, i32) {
    %c0_i32 = arith.constant 0 : i32
    %c0_i32_0 = arith.constant 0 : i32
    %c0_i32_1 = arith.constant 0 : i32
    return %c0_i32, %c0_i32_0 : i32, i32
  }
  func.func @transform_5(%arg0: i32, %arg1: memref<4xi32, #tpu.memory_space<smem>>) -> (i32, i32) {
    %c0_i32 = arith.constant 0 : i32
    %c0_i32_0 = arith.constant 0 : i32
    %c0_i32_1 = arith.constant 0 : i32
    return %c0_i32, %c0_i32_0 : i32, i32
  }
  func.func @transform_6(%arg0: i32, %arg1: memref<4xi32, #tpu.memory_space<smem>>) -> (i32, i32) {
    %c0_i32 = arith.constant 0 : i32
    %c0_i32_0 = arith.constant 0 : i32
    %c0_i32_1 = arith.constant 0 : i32
    return %c0_i32, %c0_i32_0 : i32, i32
  }
  func.func @transform_7(%arg0: i32, %arg1: memref<4xi32, #tpu.memory_space<smem>>) -> (i32, i32) {
    %c0_i32 = arith.constant 0 : i32
    %c0_i32_0 = arith.constant 0 : i32
    %c0_i32_1 = arith.constant 0 : i32
    return %c0_i32, %c0_i32_0 : i32, i32
  }
  func.func @transform_8(%arg0: i32, %arg1: memref<4xi32, #tpu.memory_space<smem>>) -> (i32, i32) {
    %c0_i32 = arith.constant 0 : i32
    %c0_i32_0 = arith.constant 0 : i32
    %c0_i32_1 = arith.constant 0 : i32
    return %c0_i32, %c0_i32_0 : i32, i32
  }
  func.func @transform_9(%arg0: i32, %arg1: memref<4xi32, #tpu.memory_space<smem>>) -> (i32, i32) {
    %c0_i32 = arith.constant 0 : i32
    %c0_i32_0 = arith.constant 0 : i32
    %c0_i32_1 = arith.constant 0 : i32
    return %c0_i32, %c0_i32_0 : i32, i32
  }
  func.func @transform_10(%arg0: i32, %arg1: memref<4xi32, #tpu.memory_space<smem>>) -> (i32, i32) {
    %c0_i32 = arith.constant 0 : i32
    %c0_i32_0 = arith.constant 0 : i32
    %c0_i32_1 = arith.constant 0 : i32
    return %c0_i32, %c0_i32_0 : i32, i32
  }
  func.func @transform_11(%arg0: i32, %arg1: memref<4xi32, #tpu.memory_space<smem>>) -> (i32, i32) {
    %c0_i32 = arith.constant 0 : i32
    %c0_i32_0 = arith.constant 0 : i32
    %c0_i32_1 = arith.constant 0 : i32
    return %c0_i32, %c0_i32_0 : i32, i32
  }
  func.func @transform_12(%arg0: i32, %arg1: memref<4xi32, #tpu.memory_space<smem>>) -> (i32, i32) {
    %c0_i32 = arith.constant 0 : i32
    %c0_i32_0 = arith.constant 0 : i32
    %c0_i32_1 = arith.constant 0 : i32
    return %c0_i32, %c0_i32_0 : i32, i32
  }
  func.func @transform_13(%arg0: i32, %arg1: memref<4xi32, #tpu.memory_space<smem>>) -> (i32, i32) {
    %c0_i32 = arith.constant 0 : i32
    %c0_i32_0 = arith.constant 0 : i32
    %c0_i32_1 = arith.constant 0 : i32
    return %c0_i32, %c0_i32_0 : i32, i32
  }
  func.func @transform_14(%arg0: i32, %arg1: memref<4xi32, #tpu.memory_space<smem>>) -> (i32, i32) {
    %c0_i32 = arith.constant 0 : i32
    %c0_i32_0 = arith.constant 0 : i32
    %c0_i32_1 = arith.constant 0 : i32
    return %c0_i32, %c0_i32_0 : i32, i32
  }
  func.func @transform_15(%arg0: i32, %arg1: memref<4xi32, #tpu.memory_space<smem>>) -> (i32, i32, i32) {
    %c0_i32 = arith.constant 0 : i32
    %c0_i32_0 = arith.constant 0 : i32
    %c0_i32_1 = arith.constant 0 : i32
    return %arg0, %c0_i32, %c0_i32_0 : i32, i32, i32
  }
}

</mosaic_0001>

<llo_original>
// kernel: tpu_custom_call.1
$region0: #{tpu_custom_call.1}
  #allocation0 [shape = 'u32[]', space=smem, size = 0x4, offset = 0x4, fixed_abs, tag = 'smem constant byte address 0x4 - core index']
  #allocation1 [shape = 'u32[144,128]{1,0:T(1,128)}', space=vmem, size = 0x12000, scoped, tag = 'internal scratch']
  #allocation2 [shape = 's32[1]{0}', space=sflag, size = 0x4, scoped, tag = 'scoped memory for tpu_custom_call.1']
  #allocation3 [shape = 'u8[512]{0}', space=smem, size = 0x200, scoped, tag = 'prefetched SMEM operand 0']
  %s0 = inlined_call_operand.vmem [shape: s32[4], index: 0, kind: input, shape index: {}]
  %s1 = inlined_call_operand.vmem [shape: s32[4,128,1], index: 1, kind: input, shape index: {}]
  %s2 = inlined_call_operand.vmem [shape: s32[4,1,128], index: 2, kind: input, shape index: {}]
  %s3 = inlined_call_operand.vmem [shape: f32[4,128,128], index: 3, kind: input, shape index: {}]
  %s4 = inlined_call_operand.hbm [shape: bf16[128,384], index: 4, kind: input, shape index: {}]
  %s5 = inlined_call_operand.vmem [shape: f32[1,384], index: 5, kind: input, shape index: {}]
  %s6 = inlined_call_operand.hbm [shape: bf16[128,128], index: 6, kind: input, shape index: {}]
  %s7 = inlined_call_operand.vmem [shape: f32[1,128], index: 7, kind: input, shape index: {}]
  %s8 = inlined_call_operand.vmem [shape: f32[1,128], index: 8, kind: input, shape index: {}]
  %s9 = inlined_call_operand.vmem [shape: f32[1,128], index: 9, kind: input, shape index: {}]
  %s10 = inlined_call_operand.hbm [shape: bf16[128,256], index: 10, kind: input, shape index: {}]
  %s11 = inlined_call_operand.vmem [shape: f32[1,256], index: 11, kind: input, shape index: {}]
  %s12 = inlined_call_operand.hbm [shape: bf16[256,128], index: 12, kind: input, shape index: {}]
  %s13 = inlined_call_operand.vmem [shape: f32[1,128], index: 13, kind: input, shape index: {}]
  %s14 = inlined_call_operand.vmem [shape: f32[1,128], index: 14, kind: input, shape index: {}]
  %s15 = inlined_call_operand.vmem [shape: f32[1,128], index: 15, kind: input, shape index: {}]
  %s16 = inlined_call_operand.hbm [shape: f32[4,128,128], index: 16, kind: output, shape index: {}]
  %s17 = sld [smem:[#allocation0]]
  $region109: #{tpu_custom_call.1} parent=0
    _
  %s19 = ssub.s32 1, %s17
  %s20 = scalar_select 0, %s19, %s17
  %s21 = sshll.u32 %s0, 4
  %s22 = int_to_ptr.vmem [resolvable:$true] %s21
  %24 = dma.vmem_to_smem %s22, 16, [#allocation3], [#allocation2]
  %25 = dma.done [#allocation2], 16
  %26 = sfence
  $region1: #{tpu_custom_call.1} parent=0
    #allocation4 [shape = 'u8[98304]{0}', space=vmem, size = 0x18000, scoped, tag = 'input window, operand 4, single buffered']
    #allocation5 [shape = 's32[2]{0}', space=sflag, size = 0x8, scoped, tag = 'scoped memory for tpu_custom_call.1']
    #allocation6 [shape = 's32[2]{0}', space=sflag, size = 0x8, scoped, tag = 'scoped memory for tpu_custom_call.1']
    #allocation7 [shape = 'u8[32768]{0}', space=vmem, size = 0x8000, scoped, tag = 'input window, operand 6, single buffered']
    #allocation8 [shape = 's32[1]{0}', space=sflag, size = 0x4, scoped, tag = 'scoped memory for tpu_custom_call.1']
    #allocation9 [shape = 'u8[65536]{0}', space=vmem, size = 0x10000, scoped, tag = 'input window, operand 10, single buffered']
    #allocation10 [shape = 'u8[65536]{0}', space=vmem, size = 0x10000, scoped, tag = 'input window, operand 12, single buffered']
    #allocation11 [shape = 's32[1]{0}', space=sflag, size = 0x4, scoped, tag = 'scoped memory for tpu_custom_call.1']
    #allocation12 [shape = 'u8[131072]{0}', space=vmem, size = 0x20000, scoped, tag = 'output window, operand 0']
    %27 = vsyncpa [#allocation5], 0
    %28 = vsyncpa [#allocation8], 0
    %29 = vsyncpa [#allocation11], 0
    %30 = vsyncpa [#allocation6], 0
    %s31 = scalar_lea.sflag [#allocation6], 1
    %32 = vsyncpa %s31, 0
    loop: start=0, step=1, limit=6
    $region2: #{tpu_custom_call.1} parent=1 // loop_pre_header
      _
    $region3: #{tpu_custom_call.1} parent=1 // loop_header
      %s34 = sphi 0, %s38
      %p35 = scmp.ge.s32.totalorder %s34, 6
      %s44 = sphi 0, %s46
      %s47 = sphi 0, %s44
      %s48 = sphi 0, %s47
      %s64 = sphi 0, %s48
      %s70 = sphi 0, %s72
      %s73 = sphi 0, %s70
      %s74 = sphi 0, %s73
      %s90 = sphi 0, %s74
      %s96 = sphi 0, %s98
      %s99 = sphi 0, %s96
      %s100 = sphi 0, %s99
      %s116 = sphi 0, %s100
      %s120 = sphi 0, %s120
      %s122 = sphi 0, %s120
      %s123 = sphi 0, %s122
      %s137 = sphi 0, %s123
      %s141 = sphi 0, %s141
      %s143 = sphi 0, %s141
      %s144 = sphi 0, %s143
      %s158 = sphi 0, %s144
      %s162 = sphi 0, %s162
      %s164 = sphi 0, %s162
      %s165 = sphi 0, %s164
      %s179 = sphi 0, %s165
      %s183 = sphi 0, %s183
      %s185 = sphi 0, %s183
      %s186 = sphi 0, %s185
      %s200 = sphi 0, %s186
      %s204 = sphi 0, %s204
      %s206 = sphi 0, %s204
      %s207 = sphi 0, %s206
      %s221 = sphi 0, %s207
      %s225 = sphi 0, %s225
      %s227 = sphi 0, %s225
      %s228 = sphi 0, %s227
      %s242 = sphi 0, %s228
      %s246 = sphi 0, %s246
      %s248 = sphi 0, %s246
      %s249 = sphi 0, %s248
      %s263 = sphi 0, %s249
      %s267 = sphi 0, %s267
      %s269 = sphi 0, %s267
      %s270 = sphi 0, %s269
      %s284 = sphi 0, %s270
      %s288 = sphi 0, %s288
      %s290 = sphi 0, %s288
      %s291 = sphi 0, %s290
      %s305 = sphi 0, %s291
      %s309 = sphi 0, %s309
      %s311 = sphi 0, %s309
      %s312 = sphi 0, %s311
      %s326 = sphi 0, %s312
      %s330 = sphi 0, %s330
      %s332 = sphi 0, %s330
      %s333 = sphi 0, %s332
      %s347 = sphi 0, %s333
      %s351 = sphi 0, %s351
      %s353 = sphi 0, %s351
      %s354 = sphi 0, %s353
      %s368 = sphi 0, %s354
      %s374 = sphi 0, %s376
      %s377 = sphi 0, %s374
      %s378 = sphi 0, %s377
      %s394 = sphi 0, %s378
    $region4: #{tpu_custom_call.1} parent=1 // loop_header_branch
      %37 = sbr.rel (%p35) target = $region8
    $region5: #{tpu_custom_call.1} parent=1 // loop_body
      %s39 = ssub.s32 %s34, 1
      %s40 = ssub.s32 %s34, 2
      %s41 = sadd.s32 %s34, 1
      %s42 = ssub.s32 %s34, %s41
      %p43 = scmp.eq.s32.totalorder %s42, 0
      %s45 = sadd.s32 %s44, 1
      %s46 = scalar_select %p43, %s44, %s45
      %p49 = pneg %p43
      %p50 = scmp.eq.s32.totalorder %s34, 3
      %p51 = por %p49, %p50
      %p52 = scmp.ne.s32.totalorder %s44, %s47
      %p53 = scmp.eq.s32.totalorder %s34, 0
      %p54 = por %p52, %p53
      %p55 = scmp.ne.s32.totalorder %s44, %s47
      %p56 = scmp.eq.s32.totalorder %s39, 3
      %p57 = por %p55, %p56
      %p58 = scmp.ne.s32.totalorder %s47, %s48
      %p59 = scmp.eq.s32.totalorder %s39, 0
      %p60 = por %p58, %p59
      %p61 = scmp.ne.s32.totalorder %s47, %s48
      %p62 = scmp.eq.s32.totalorder %s40, 3
      %p63 = por %p61, %p62
      %p65 = scmp.ne.s32.totalorder %s48, %s64
      %p66 = scmp.eq.s32.totalorder %s40, 0
      %p67 = por %p65, %p66
      %s68 = ssub.s32 %s34, %s41
      %p69 = scmp.eq.s32.totalorder %s68, 0
      %s71 = sadd.s32 %s70, 1
      %s72 = scalar_select %p69, %s70, %s71
      %p75 = pneg %p69
      %p76 = scmp.eq.s32.totalorder %s34, 3
      %p77 = por %p75, %p76
      %p78 = scmp.ne.s32.totalorder %s70, %s73
      %p79 = scmp.eq.s32.totalorder %s34, 0
      %p80 = por %p78, %p79
      %p81 = scmp.ne.s32.totalorder %s70, %s73
      %p82 = scmp.eq.s32.totalorder %s39, 3
      %p83 = por %p81, %p82
      %p84 = scmp.ne.s32.totalorder %s73, %s74
      %p85 = scmp.eq.s32.totalorder %s39, 0
      %p86 = por %p84, %p85
      %p87 = scmp.ne.s32.totalorder %s73, %s74
      %p88 = scmp.eq.s32.totalorder %s40, 3
      %p89 = por %p87, %p88
      %p91 = scmp.ne.s32.totalorder %s74, %s90
      %p92 = scmp.eq.s32.totalorder %s40, 0
      %p93 = por %p91, %p92
      %s94 = ssub.s32 %s34, %s41
      %p95 = scmp.eq.s32.totalorder %s94, 0
      %s97 = sadd.s32 %s96, 1
      %s98 = scalar_select %p95, %s96, %s97
      %p101 = pneg %p95
      %p102 = scmp.eq.s32.totalorder %s34, 3
      %p103 = por %p101, %p102
      %p104 = scmp.ne.s32.totalorder %s96, %s99
      %p105 = scmp.eq.s32.totalorder %s34, 0
      %p106 = por %p104, %p105
      %p107 = scmp.ne.s32.totalorder %s96, %s99
      %p108 = scmp.eq.s32.totalorder %s39, 3
      %p109 = por %p107, %p108
      %p110 = scmp.ne.s32.totalorder %s99, %s100
      %p111 = scmp.eq.s32.totalorder %s39, 0
      %p112 = por %p110, %p111
      %p113 = scmp.ne.s32.totalorder %s99, %s100
      %p114 = scmp.eq.s32.totalorder %s40, 3
      %p115 = por %p113, %p114
      %p117 = scmp.ne.s32.totalorder %s100, %s116
      %p118 = scmp.eq.s32.totalorder %s40, 0
      %p119 = por %p117, %p118
      %s121 = sadd.s32 %s120, 1
      %p124 = scmp.eq.s32.totalorder %s34, 3
      %p125 = scmp.ne.s32.totalorder %s120, %s122
      %p126 = scmp.eq.s32.totalorder %s34, 0
      %p127 = por %p125, %p126
      %p128 = scmp.ne.s32.totalorder %s120, %s122
      %p129 = scmp.eq.s32.totalorder %s39, 3
      %p130 = por %p128, %p129
      %p131 = scmp.ne.s32.totalorder %s122, %s123
      %p132 = scmp.eq.s32.totalorder %s39, 0
      %p133 = por %p131, %p132
      %p134 = scmp.ne.s32.totalorder %s122, %s123
      %p135 = scmp.eq.s32.totalorder %s40, 3
      %p136 = por %p134, %p135
      %p138 = scmp.ne.s32.totalorder %s123, %s137
      %p139 = scmp.eq.s32.totalorder %s40, 0
      %p140 = por %p138, %p139
      %s142 = sadd.s32 %s141, 1
      %p145 = scmp.eq.s32.totalorder %s34, 3
      %p146 = scmp.ne.s32.totalorder %s141, %s143
      %p147 = scmp.eq.s32.totalorder %s34, 0
      %p148 = por %p146, %p147
      %p149 = scmp.ne.s32.totalorder %s141, %s143
      %p150 = scmp.eq.s32.totalorder %s39, 3
      %p151 = por %p149, %p150
      %p152 = scmp.ne.s32.totalorder %s143, %s144
      %p153 = scmp.eq.s32.totalorder %s39, 0
      %p154 = por %p152, %p153
      %p155 = scmp.ne.s32.totalorder %s143, %s144
      %p156 = scmp.eq.s32.totalorder %s40, 3
      %p157 = por %p155, %p156
      %p159 = scmp.ne.s32.totalorder %s144, %s158
      %p160 = scmp.eq.s32.totalorder %s40, 0
      %p161 = por %p159, %p160
      %s163 = sadd.s32 %s162, 1
      %p166 = scmp.eq.s32.totalorder %s34, 3
      %p167 = scmp.ne.s32.totalorder %s162, %s164
      %p168 = scmp.eq.s32.totalorder %s34, 0
      %p169 = por %p167, %p168
      %p170 = scmp.ne.s32.totalorder %s162, %s164
      %p171 = scmp.eq.s32.totalorder %s39, 3
      %p172 = por %p170, %p171
      %p173 = scmp.ne.s32.totalorder %s164, %s165
      %p174 = scmp.eq.s32.totalorder %s39, 0
      %p175 = por %p173, %p174
      %p176 = scmp.ne.s32.totalorder %s164, %s165
      %p177 = scmp.eq.s32.totalorder %s40, 3
      %p178 = por %p176, %p177
      %p180 = scmp.ne.s32.totalorder %s165, %s179
      %p181 = scmp.eq.s32.totalorder %s40, 0
      %p182 = por %p180, %p181
      %s184 = sadd.s32 %s183, 1
      %p187 = scmp.eq.s32.totalorder %s34, 3
      %p188 = scmp.ne.s32.totalorder %s183, %s185
      %p189 = scmp.eq.s32.totalorder %s34, 0
      %p190 = por %p188, %p189
      %p191 = scmp.ne.s32.totalorder %s183, %s185
      %p192 = scmp.eq.s32.totalorder %s39, 3
      %p193 = por %p191, %p192
      %p194 = scmp.ne.s32.totalorder %s185, %s186
      %p195 = scmp.eq.s32.totalorder %s39, 0
      %p196 = por %p194, %p195
      %p197 = scmp.ne.s32.totalorder %s185, %s186
      %p198 = scmp.eq.s32.totalorder %s40, 3
      %p199 = por %p197, %p198
      %p201 = scmp.ne.s32.totalorder %s186, %s200
      %p202 = scmp.eq.s32.totalorder %s40, 0
      %p203 = por %p201, %p202
      %s205 = sadd.s32 %s204, 1
      %p208 = scmp.eq.s32.totalorder %s34, 3
      %p209 = scmp.ne.s32.totalorder %s204, %s206
      %p210 = scmp.eq.s32.totalorder %s34, 0
      %p211 = por %p209, %p210
      %p212 = scmp.ne.s32.totalorder %s204, %s206
      %p213 = scmp.eq.s32.totalorder %s39, 3
      %p214 = por %p212, %p213
      %p215 = scmp.ne.s32.totalorder %s206, %s207
      %p216 = scmp.eq.s32.totalorder %s39, 0
      %p217 = por %p215, %p216
      %p218 = scmp.ne.s32.totalorder %s206, %s207
      %p219 = scmp.eq.s32.totalorder %s40, 3
      %p220 = por %p218, %p219
      %p222 = scmp.ne.s32.totalorder %s207, %s221
      %p223 = scmp.eq.s32.totalorder %s40, 0
      %p224 = por %p222, %p223
      %s226 = sadd.s32 %s225, 1
      %p229 = scmp.eq.s32.totalorder %s34, 3
      %p230 = scmp.ne.s32.totalorder %s225, %s227
      %p231 = scmp.eq.s32.totalorder %s34, 0
      %p232 = por %p230, %p231
      %p233 = scmp.ne.s32.totalorder %s225, %s227
      %p234 = scmp.eq.s32.totalorder %s39, 3
      %p235 = por %p233, %p234
      %p236 = scmp.ne.s32.totalorder %s227, %s228
      %p237 = scmp.eq.s32.totalorder %s39, 0
      %p238 = por %p236, %p237
      %p239 = scmp.ne.s32.totalorder %s227, %s228
      %p240 = scmp.eq.s32.totalorder %s40, 3
      %p241 = por %p239, %p240
      %p243 = scmp.ne.s32.totalorder %s228, %s242
      %p244 = scmp.eq.s32.totalorder %s40, 0
      %p245 = por %p243, %p244
      %s247 = sadd.s32 %s246, 1
      %p250 = scmp.eq.s32.totalorder %s34, 3
      %p251 = scmp.ne.s32.totalorder %s246, %s248
      %p252 = scmp.eq.s32.totalorder %s34, 0
      %p253 = por %p251, %p252
      %p254 = scmp.ne.s32.totalorder %s246, %s248
      %p255 = scmp.eq.s32.totalorder %s39, 3
      %p256 = por %p254, %p255
      %p257 = scmp.ne.s32.totalorder %s248, %s249
      %p258 = scmp.eq.s32.totalorder %s39, 0
      %p259 = por %p257, %p258
      %p260 = scmp.ne.s32.totalorder %s248, %s249
      %p261 = scmp.eq.s32.totalorder %s40, 3
      %p262 = por %p260, %p261
      %p264 = scmp.ne.s32.totalorder %s249, %s263
      %p265 = scmp.eq.s32.totalorder %s40, 0
      %p266 = por %p264, %p265
      %s268 = sadd.s32 %s267, 1
      %p271 = scmp.eq.s32.totalorder %s34, 3
      %p272 = scmp.ne.s32.totalorder %s267, %s269
      %p273 = scmp.eq.s32.totalorder %s34, 0
      %p274 = por %p272, %p273
      %p275 = scmp.ne.s32.totalorder %s267, %s269
      %p276 = scmp.eq.s32.totalorder %s39, 3
      %p277 = por %p275, %p276
      %p278 = scmp.ne.s32.totalorder %s269, %s270
      %p279 = scmp.eq.s32.totalorder %s39, 0
      %p280 = por %p278, %p279
      %p281 = scmp.ne.s32.totalorder %s269, %s270
      %p282 = scmp.eq.s32.totalorder %s40, 3
      %p283 = por %p281, %p282
      %p285 = scmp.ne.s32.totalorder %s270, %s284
      %p286 = scmp.eq.s32.totalorder %s40, 0
      %p287 = por %p285, %p286
      %s289 = sadd.s32 %s288, 1
      %p292 = scmp.eq.s32.totalorder %s34, 3
      %p293 = scmp.ne.s32.totalorder %s288, %s290
      %p294 = scmp.eq.s32.totalorder %s34, 0
      %p295 = por %p293, %p294
      %p296 = scmp.ne.s32.totalorder %s288, %s290
      %p297 = scmp.eq.s32.totalorder %s39, 3
      %p298 = por %p296, %p297
      %p299 = scmp.ne.s32.totalorder %s290, %s291
      %p300 = scmp.eq.s32.totalorder %s39, 0
      %p301 = por %p299, %p300
      %p302 = scmp.ne.s32.totalorder %s290, %s291
      %p303 = scmp.eq.s32.totalorder %s40, 3
      %p304 = por %p302, %p303
      %p306 = scmp.ne.s32.totalorder %s291, %s305
      %p307 = scmp.eq.s32.totalorder %s40, 0
      %p308 = por %p306, %p307
      %s310 = sadd.s32 %s309, 1
      %p313 = scmp.eq.s32.totalorder %s34, 3
      %p314 = scmp.ne.s32.totalorder %s309, %s311
      %p315 = scmp.eq.s32.totalorder %s34, 0
      %p316 = por %p314, %p315
      %p317 = scmp.ne.s32.totalorder %s309, %s311
      %p318 = scmp.eq.s32.totalorder %s39, 3
      %p319 = por %p317, %p318
      %p320 = scmp.ne.s32.totalorder %s311, %s312
      %p321 = scmp.eq.s32.totalorder %s39, 0
      %p322 = por %p320, %p321
      %p323 = scmp.ne.s32.totalorder %s311, %s312
      %p324 = scmp.eq.s32.totalorder %s40, 3
      %p325 = por %p323, %p324
      %p327 = scmp.ne.s32.totalorder %s312, %s326
      %p328 = scmp.eq.s32.totalorder %s40, 0
      %p329 = por %p327, %p328
      %s331 = sadd.s32 %s330, 1
      %p334 = scmp.eq.s32.totalorder %s34, 3
      %p335 = scmp.ne.s32.totalorder %s330, %s332
      %p336 = scmp.eq.s32.totalorder %s34, 0
      %p337 = por %p335, %p336
      %p338 = scmp.ne.s32.totalorder %s330, %s332
      %p339 = scmp.eq.s32.totalorder %s39, 3
      %p340 = por %p338, %p339
      %p341 = scmp.ne.s32.totalorder %s332, %s333
      %p342 = scmp.eq.s32.totalorder %s39, 0
      %p343 = por %p341, %p342
      %p344 = scmp.ne.s32.totalorder %s332, %s333
      %p345 = scmp.eq.s32.totalorder %s40, 3
      %p346 = por %p344, %p345
      %p348 = scmp.ne.s32.totalorder %s333, %s347
      %p349 = scmp.eq.s32.totalorder %s40, 0
      %p350 = por %p348, %p349
      %s352 = sadd.s32 %s351, 1
      %p355 = scmp.eq.s32.totalorder %s34, 3
      %p356 = scmp.ne.s32.totalorder %s351, %s353
      %p357 = scmp.eq.s32.totalorder %s34, 0
      %p358 = por %p356, %p357
      %p359 = scmp.ne.s32.totalorder %s351, %s353
      %p360 = scmp.eq.s32.totalorder %s39, 3
      %p361 = por %p359, %p360
      %p362 = scmp.ne.s32.totalorder %s353, %s354
      %p363 = scmp.eq.s32.totalorder %s39, 0
      %p364 = por %p362, %p363
      %p365 = scmp.ne.s32.totalorder %s353, %s354
      %p366 = scmp.eq.s32.totalorder %s40, 3
      %p367 = por %p365, %p366
      %p369 = scmp.ne.s32.totalorder %s354, %s368
      %p370 = scmp.eq.s32.totalorder %s40, 0
      %p371 = por %p369, %p370
      %s372 = ssub.s32 %s34, %s41
      %p373 = scmp.eq.s32.totalorder %s372, 0
      %s375 = sadd.s32 %s374, 1
      %s376 = scalar_select %p373, %s374, %s375
      %p379 = pneg %p373
      %p380 = scmp.eq.s32.totalorder %s34, 3
      %p381 = por %p379, %p380
      %p382 = scmp.ne.s32.totalorder %s374, %s377
      %p383 = scmp.eq.s32.totalorder %s34, 0
      %p384 = por %p382, %p383
      %p385 = scmp.ne.s32.totalorder %s374, %s377
      %p386 = scmp.eq.s32.totalorder %s39, 3
      %p387 = por %p385, %p386
      %p388 = scmp.ne.s32.totalorder %s377, %s378
      %p389 = scmp.eq.s32.totalorder %s39, 0
      %p390 = por %p388, %p389
      %p391 = scmp.ne.s32.totalorder %s377, %s378
      %p392 = scmp.eq.s32.totalorder %s40, 3
      %p393 = por %p391, %p392
      %p395 = scmp.ne.s32.totalorder %s378, %s394
      %p396 = scmp.eq.s32.totalorder %s40, 0
      %p397 = por %p395, %p396
      %p398 = scmp.le.s32.totalorder 1, %s34
      %p399 = scmp.lt.s32.totalorder %s34, 5
      %p400 = pnand %p398, %p399
      %p401 = pneg %p400
      // Predicated region
      $region9: #{tpu_custom_call.1} parent=5 // pred_check
        _
      $region10: #{tpu_custom_call.1} parent=5 // pred_check_branch
        %403 = sbr.rel (%p400) target = $region12
      $region11: #{tpu_custom_call.1} parent=5 // pred_region
        %s404 = ssub.s32 %s34, 1
        // Predicated region
        $region13: #{tpu_custom_call.1} parent=11 // pred_check
          %p405 = pneg %p133
        $region14: #{tpu_custom_call.1} parent=11 // pred_check_branch
          %407 = sbr.rel (%p405) target = $region16
        $region15: #{tpu_custom_call.1} parent=11 // pred_region
          %s409 = ssub.s32 3072, 3072
          %410 = vsyncadd [#allocation5], %s409
          %s411 = sshll.u32 [#allocation4], 4
          %s412 = int_to_ptr.vmem [resolvable:$true] %s411
          %417 = dma.hbm_to_vmem [thread:$0]  %s4, 3072, %s412, [#allocation5], 192, 192, 12
        $region16: #{tpu_custom_call.1} parent=11 // pred_fallthru
          _
        // Predicated region
        $region17: #{tpu_custom_call.1} parent=11 // pred_check
          %p418 = pneg %p154
        $region18: #{tpu_custom_call.1} parent=11 // pred_check_branch
          %420 = sbr.rel (%p418) target = $region20
        $region19: #{tpu_custom_call.1} parent=11 // pred_region
          _
        $region20: #{tpu_custom_call.1} parent=11 // pred_fallthru
          _
        // Predicated region
        $region21: #{tpu_custom_call.1} parent=11 // pred_check
          %p421 = pneg %p175
        $region22: #{tpu_custom_call.1} parent=11 // pred_check_branch
          %423 = sbr.rel (%p421) target = $region24
        $region23: #{tpu_custom_call.1} parent=11 // pred_region
          %s425 = ssub.s32 1024, 1024
          %426 = vsyncadd [#allocation8], %s425
          %s427 = sshll.u32 [#allocation7], 4
          %s428 = int_to_ptr.vmem [resolvable:$true] %s427
          %433 = dma.hbm_to_vmem [thread:$0]  %s6, 1024, %s428, [#allocation8], 64, 64, 4
        $region24: #{tpu_custom_call.1} parent=11 // pred_fallthru
          _
        // Predicated region
        $region25: #{tpu_custom_call.1} parent=11 // pred_check
          %p434 = pneg %p196
        $region26: #{tpu_custom_call.1} parent=11 // pred_check_branch
          %436 = sbr.rel (%p434) target = $region28
        $region27: #{tpu_custom_call.1} parent=11 // pred_region
          _
        $region28: #{tpu_custom_call.1} parent=11 // pred_fallthru
          _
        // Predicated region
        $region29: #{tpu_custom_call.1} parent=11 // pred_check
          %p437 = pneg %p217
        $region30: #{tpu_custom_call.1} parent=11 // pred_check_branch
          %439 = sbr.rel (%p437) target = $region32
        $region31: #{tpu_custom_call.1} parent=11 // pred_region
          _
        $region32: #{tpu_custom_call.1} parent=11 // pred_fallthru
          _
        // Predicated region
        $region33: #{tpu_custom_call.1} parent=11 // pred_check
          %p440 = pneg %p238
        $region34: #{tpu_custom_call.1} parent=11 // pred_check_branch
          %442 = sbr.rel (%p440) target = $region36
        $region35: #{tpu_custom_call.1} parent=11 // pred_region
          _
        $region36: #{tpu_custom_call.1} parent=11 // pred_fallthru
          _
        // Predicated region
        $region37: #{tpu_custom_call.1} parent=11 // pred_check
          %p443 = pneg %p259
        $region38: #{tpu_custom_call.1} parent=11 // pred_check_branch
          %445 = sbr.rel (%p443) target = $region40
        $region39: #{tpu_custom_call.1} parent=11 // pred_region
          %s447 = ssub.s32 2048, 2048
          %448 = vsyncadd [#allocation8], %s447
          %s449 = sshll.u32 [#allocation9], 4
          %s450 = int_to_ptr.vmem [resolvable:$true] %s449
          %455 = dma.hbm_to_vmem [thread:$0]  %s10, 2048, %s450, [#allocation8], 128, 128, 8
        $region40: #{tpu_custom_call.1} parent=11 // pred_fallthru
          _
        // Predicated region
        $region41: #{tpu_custom_call.1} parent=11 // pred_check
          %p456 = pneg %p280
        $region42: #{tpu_custom_call.1} parent=11 // pred_check_branch
          %458 = sbr.rel (%p456) target = $region44
        $region43: #{tpu_custom_call.1} parent=11 // pred_region
          _
        $region44: #{tpu_custom_call.1} parent=11 // pred_fallthru
          _
        // Predicated region
        $region45: #{tpu_custom_call.1} parent=11 // pred_check
          %p459 = pneg %p301
        $region46: #{tpu_custom_call.1} parent=11 // pred_check_branch
          %461 = sbr.rel (%p459) target = $region48
        $region47: #{tpu_custom_call.1} parent=11 // pred_region
          %s463 = ssub.s32 2048, 2048
          %464 = vsyncadd [#allocation11], %s463
          %s465 = sshll.u32 [#allocation10], 4
          %s466 = int_to_ptr.vmem [resolvable:$true] %s465
          %471 = dma.hbm_to_vmem [thread:$0]  %s12, 2048, %s466, [#allocation11], 64, 64, 4
        $region48: #{tpu_custom_call.1} parent=11 // pred_fallthru
          _
        // Predicated region
        $region49: #{tpu_custom_call.1} parent=11 // pred_check
          %p472 = pneg %p322
        $region50: #{tpu_custom_call.1} parent=11 // pred_check_branch
          %474 = sbr.rel (%p472) target = $region52
        $region51: #{tpu_custom_call.1} parent=11 // pred_region
          _
        $region52: #{tpu_custom_call.1} parent=11 // pred_fallthru
          _
        // Predicated region
        $region53: #{tpu_custom_call.1} parent=11 // pred_check
          %p475 = pneg %p343
        $region54: #{tpu_custom_call.1} parent=11 // pred_check_branch
          %477 = sbr.rel (%p475) target = $region56
        $region55: #{tpu_custom_call.1} parent=11 // pred_region
          _
        $region56: #{tpu_custom_call.1} parent=11 // pred_fallthru
          _
        // Predicated region
        $region57: #{tpu_custom_call.1} parent=11 // pred_check
          %p478 = pneg %p364
        $region58: #{tpu_custom_call.1} parent=11 // pred_check_branch
          %480 = sbr.rel (%p478) target = $region60
        $region59: #{tpu_custom_call.1} parent=11 // pred_region
          _
        $region60: #{tpu_custom_call.1} parent=11 // pred_fallthru
          _
      $region12: #{tpu_custom_call.1} parent=5 // pred_fallthru
        _
      %p481 = scmp.lt.s32.totalorder %s34, 4
      // Predicated region
      $region61: #{tpu_custom_call.1} parent=5 // pred_check
        %p482 = pneg %p481
      $region62: #{tpu_custom_call.1} parent=5 // pred_check_branch
        %484 = sbr.rel (%p482) target = $region64
      $region63: #{tpu_custom_call.1} parent=5 // pred_region
        // Predicated region
        $region65: #{tpu_custom_call.1} parent=63 // pred_check
          %p485 = pneg %p54
        $region66: #{tpu_custom_call.1} parent=63 // pred_check_branch
          %487 = sbr.rel (%p485) target = $region68
        $region67: #{tpu_custom_call.1} parent=63 // pred_region
          %p488 = scmp.lt.s32.totalorder %s34, 3
          %s489 = scalar_select %p488, %s34, 3
          %s490 = smul.addr %s489, 16
          %s491 = smul.addr %s490, 8
          %s492 = scalar_lea.vmem %s1, %s491
        $region68: #{tpu_custom_call.1} parent=63 // pred_fallthru
          _
        // Predicated region
        $region69: #{tpu_custom_call.1} parent=63 // pred_check
          %p493 = pneg %p80
        $region70: #{tpu_custom_call.1} parent=63 // pred_check_branch
          %495 = sbr.rel (%p493) target = $region72
        $region71: #{tpu_custom_call.1} parent=63 // pred_region
          %p496 = scmp.lt.s32.totalorder %s34, 3
          %s497 = scalar_select %p496, %s34, 3
          %s498 = scalar_lea.vmem %s2, %s497
        $region72: #{tpu_custom_call.1} parent=63 // pred_fallthru
          _
        // Predicated region
        $region73: #{tpu_custom_call.1} parent=63 // pred_check
          %p499 = pneg %p106
        $region74: #{tpu_custom_call.1} parent=63 // pred_check_branch
          %501 = sbr.rel (%p499) target = $region76
        $region75: #{tpu_custom_call.1} parent=63 // pred_region
          %p502 = scmp.lt.s32.totalorder %s34, 3
          %s503 = scalar_select %p502, %s34, 3
          %s504 = smul.addr %s503, 16
          %s505 = smul.addr %s504, 8
          %s506 = scalar_lea.vmem %s3, %s505
        $region76: #{tpu_custom_call.1} parent=63 // pred_fallthru
          _
      $region64: #{tpu_custom_call.1} parent=5 // pred_fallthru
        _
      %p507 = scmp.le.s32.totalorder 1, %s34
      %p508 = scmp.lt.s32.totalorder %s34, 5
      %p509 = pnand %p507, %p508
      %p510 = pneg %p509
      // Predicated region
      $region77: #{tpu_custom_call.1} parent=5 // pred_check
        _
      $region78: #{tpu_custom_call.1} parent=5 // pred_check_branch
        %512 = sbr.rel (%p509) target = $region80
      $region79: #{tpu_custom_call.1} parent=5 // pred_region
        %s513 = ssub.s32 %s34, 1
        // Predicated region
        $region81: #{tpu_custom_call.1} parent=79 // pred_check
          %p514 = pneg %p133
        $region82: #{tpu_custom_call.1} parent=79 // pred_check_branch
          %516 = sbr.rel (%p514) target = $region84
        $region83: #{tpu_custom_call.1} parent=79 // pred_region
          %517 = dma.done [#allocation5], 3072
        $region84: #{tpu_custom_call.1} parent=79 // pred_fallthru
          _
        // Predicated region
        $region85: #{tpu_custom_call.1} parent=79 // pred_check
          %p518 = pneg %p175
        $region86: #{tpu_custom_call.1} parent=79 // pred_check_branch
          %520 = sbr.rel (%p518) target = $region88
        $region87: #{tpu_custom_call.1} parent=79 // pred_region
          %521 = dma.done [#allocation8], 1024
        $region88: #{tpu_custom_call.1} parent=79 // pred_fallthru
          _
        // Predicated region
        $region89: #{tpu_custom_call.1} parent=79 // pred_check
          %p522 = pneg %p259
        $region90: #{tpu_custom_call.1} parent=79 // pred_check_branch
          %524 = sbr.rel (%p522) target = $region92
        $region91: #{tpu_custom_call.1} parent=79 // pred_region
          %525 = dma.done [#allocation8], 2048
        $region92: #{tpu_custom_call.1} parent=79 // pred_fallthru
          _
        // Predicated region
        $region93: #{tpu_custom_call.1} parent=79 // pred_check
          %p526 = pneg %p301
        $region94: #{tpu_custom_call.1} parent=79 // pred_check_branch
          %528 = sbr.rel (%p526) target = $region96
        $region95: #{tpu_custom_call.1} parent=79 // pred_region
          %529 = dma.done [#allocation11], 2048
        $region96: #{tpu_custom_call.1} parent=79 // pred_fallthru
          _
        %p530 = scmp.lt.s32.totalorder %s39, 3
        %s531 = scalar_select %p530, %s39, 3
        %s532 = smul.addr %s531, 16
        %s533 = smul.addr %s532, 8
        %s534 = scalar_lea.vmem %s1, %s533
        %p535 = pneg %p60
        %p536 = pneg %p57
        %p537 = scmp.lt.s32.totalorder %s39, 3
        %s538 = scalar_select %p537, %s39, 3
        %s539 = scalar_lea.vmem %s2, %s538
        %p540 = pneg %p86
        %p541 = pneg %p83
        %p542 = scmp.lt.s32.totalorder %s39, 3
        %s543 = scalar_select %p542, %s39, 3
        %s544 = smul.addr %s543, 16
        %s545 = smul.addr %s544, 8
        %s546 = scalar_lea.vmem %s3, %s545
        %p547 = pneg %p112
        %p548 = pneg %p109
        %p549 = pneg %p133
        %p550 = pneg %p130
        %p551 = pneg %p154
        %p552 = pneg %p151
        %p553 = pneg %p175
        %p554 = pneg %p172
        %p555 = pneg %p196
        %p556 = pneg %p193
        %p557 = pneg %p217
        %p558 = pneg %p214
        %p559 = pneg %p238
        %p560 = pneg %p235
        %p561 = pneg %p259
        %p562 = pneg %p256
        %p563 = pneg %p280
        %p564 = pneg %p277
        %p565 = pneg %p301
        %p566 = pneg %p298
        %p567 = pneg %p322
        %p568 = pneg %p319
        %p569 = pneg %p343
        %p570 = pneg %p340
        %p571 = pneg %p364
        %p572 = pneg %p361
        %p573 = pneg %p390
        %p574 = pneg %p387
        %s575 = sand.u32 %s377, 1
        %s576 = scalar_lea.sflag [#allocation6], %s575
        %s577 = sand.u32 %s377, 1
        %s578 = smul.addr %s577, 128
        %s579 = scalar_lea.vmem [#allocation12], %s578
        %p580 = scmp.lt.s32.totalorder %s39, 3
        %s581 = scalar_select %p580, %s39, 3
        %s582 = smul.addr %s581, 16
        %s583 = smul.addr %s582, 8
        %s584 = scalar_lea.vmem %s1, %s583
        %p585 = scmp.lt.s32.totalorder %s39, 3
        %s586 = scalar_select %p585, %s39, 3
        %s587 = scalar_lea.vmem %s2, %s586
        %p588 = scmp.lt.s32.totalorder %s39, 3
        %s589 = scalar_select %p588, %s39, 3
        %s590 = smul.addr %s589, 16
        %s591 = smul.addr %s590, 8
        %s592 = scalar_lea.vmem %s3, %s591
        %s594 = sld [smem:[#allocation3 + %s39]]
        %s595 = scvt.s32.f32 %s594
        %v596 = vstv %s595
        %v597 = vrcp.pop %v596
        %s598 = vtos %v597
        %v599 = vld [vmem:[%s592] sm:$0xff]
        %v600 = vld [vmem:[%s592 + $0x8] sm:$0xff]
        %v601 = vld [vmem:[%s592 + $0x10] sm:$0xff]
        %v602 = vld [vmem:[%s592 + $0x18] sm:$0xff]
        %v603 = vld [vmem:[%s592 + $0x20] sm:$0xff]
        %v604 = vld [vmem:[%s592 + $0x28] sm:$0xff]
        %v605 = vld [vmem:[%s592 + $0x30] sm:$0xff]
        %v606 = vld [vmem:[%s592 + $0x38] sm:$0xff]
        %v607 = vld [vmem:[%s592 + $0x40] sm:$0xff]
        %v608 = vld [vmem:[%s592 + $0x48] sm:$0xff]
        %v609 = vld [vmem:[%s592 + $0x50] sm:$0xff]
        %v610 = vld [vmem:[%s592 + $0x58] sm:$0xff]
        %v611 = vld [vmem:[%s592 + $0x60] sm:$0xff]
        %v612 = vld [vmem:[%s592 + $0x68] sm:$0xff]
        %v613 = vld [vmem:[%s592 + $0x70] sm:$0xff]
        %v614 = vld [vmem:[%s592 + $0x78] sm:$0xff]
        %v615 = vlaneseq
        %v616 = vshrl.u32 %v615, 7
        %v617 = vadd.s32 %v616, 8
        %v618 = vadd.s32 %v616, 16
        %v619 = vadd.s32 %v616, 24
        %v620 = vadd.s32 %v616, 32
        %v621 = vadd.s32 %v616, 40
        %v622 = vadd.s32 %v616, 48
        %v623 = vadd.s32 %v616, 56
        %v624 = vadd.s32 %v616, 64
        %v625 = vadd.s32 %v616, 72
        %v626 = vadd.s32 %v616, 80
        %v627 = vadd.s32 %v616, 88
        %v628 = vadd.s32 %v616, 96
        %v629 = vadd.s32 %v616, 104
        %v630 = vadd.s32 %v616, 112
        %v631 = vadd.s32 %v616, 120
        %v632 = vstv %s594
        %vm633 = vcmp.lt.s32.totalorder %v616, %v632
        %vm634 = vcmp.lt.s32.totalorder %v617, %v632
        %vm635 = vcmp.lt.s32.totalorder %v618, %v632
        %vm636 = vcmp.lt.s32.totalorder %v619, %v632
        %vm637 = vcmp.lt.s32.totalorder %v620, %v632
        %vm638 = vcmp.lt.s32.totalorder %v621, %v632
        %vm639 = vcmp.lt.s32.totalorder %v622, %v632
        %vm640 = vcmp.lt.s32.totalorder %v623, %v632
        %vm641 = vcmp.lt.s32.totalorder %v624, %v632
        %vm642 = vcmp.lt.s32.totalorder %v625, %v632
        %vm643 = vcmp.lt.s32.totalorder %v626, %v632
        %vm644 = vcmp.lt.s32.totalorder %v627, %v632
        %vm645 = vcmp.lt.s32.totalorder %v628, %v632
        %vm646 = vcmp.lt.s32.totalorder %v629, %v632
        %vm647 = vcmp.lt.s32.totalorder %v630, %v632
        %vm648 = vcmp.lt.s32.totalorder %v631, %v632
        %v649 = vsel %vm633, 1, 0
        %v650 = vsel %vm634, 1, 0
        %v651 = vsel %vm635, 1, 0
        %v652 = vsel %vm636, 1, 0
        %v653 = vsel %vm637, 1, 0
        %v654 = vsel %vm638, 1, 0
        %v655 = vsel %vm639, 1, 0
        %v656 = vsel %vm640, 1, 0
        %v657 = vsel %vm641, 1, 0
        %v658 = vsel %vm642, 1, 0
        %v659 = vsel %vm643, 1, 0
        %v660 = vsel %vm644, 1, 0
        %v661 = vsel %vm645, 1, 0
        %v662 = vsel %vm646, 1, 0
        %v663 = vsel %vm647, 1, 0
        %v664 = vsel %vm648, 1, 0
        %v665 = vcvt.s32.f32 %v649
        %v666 = vcvt.s32.f32 %v650
        %v667 = vcvt.s32.f32 %v651
        %v668 = vcvt.s32.f32 %v652
        %v669 = vcvt.s32.f32 %v653
        %v670 = vcvt.s32.f32 %v654
        %v671 = vcvt.s32.f32 %v655
        %v672 = vcvt.s32.f32 %v656
        %v673 = vcvt.s32.f32 %v657
        %v674 = vcvt.s32.f32 %v658
        %v675 = vcvt.s32.f32 %v659
        %v676 = vcvt.s32.f32 %v660
        %v677 = vcvt.s32.f32 %v661
        %v678 = vcvt.s32.f32 %v662
        %v679 = vcvt.s32.f32 %v663
        %v680 = vcvt.s32.f32 %v664
        %v681 = vld [vmem:[%s584] sm:$0xff]
        %v682 = vld [vmem:[%s584 + $0x8] sm:$0xff]
        %v683 = vld [vmem:[%s584 + $0x10] sm:$0xff]
        %v684 = vld [vmem:[%s584 + $0x18] sm:$0xff]
        %v685 = vld [vmem:[%s584 + $0x20] sm:$0xff]
        %v686 = vld [vmem:[%s584 + $0x28] sm:$0xff]
        %v687 = vld [vmem:[%s584 + $0x30] sm:$0xff]
        %v688 = vld [vmem:[%s584 + $0x38] sm:$0xff]
        %v689 = vld [vmem:[%s584 + $0x40] sm:$0xff]
        %v690 = vld [vmem:[%s584 + $0x48] sm:$0xff]
        %v691 = vld [vmem:[%s584 + $0x50] sm:$0xff]
        %v692 = vld [vmem:[%s584 + $0x58] sm:$0xff]
        %v693 = vld [vmem:[%s584 + $0x60] sm:$0xff]
        %v694 = vld [vmem:[%s584 + $0x68] sm:$0xff]
        %v695 = vld [vmem:[%s584 + $0x70] sm:$0xff]
        %v696 = vld [vmem:[%s584 + $0x78] sm:$0xff]
        %v697 = vld [vmem:[%s587] sm:$0x1]
        %698 = vset.pattern.permute.xlu0 0
        %699 = vperm.xlu0 %698, %v681
        %v700 = vpop.permute.xlu0 %699
        %701 = vset.pattern.permute.xlu0 0
        %702 = vperm.xlu0 %701, %v682
        %v703 = vpop.permute.xlu0 %702
        %704 = vset.pattern.permute.xlu0 0
        %705 = vperm.xlu0 %704, %v683
        %v706 = vpop.permute.xlu0 %705
        %707 = vset.pattern.permute.xlu0 0
        %708 = vperm.xlu0 %707, %v684
        %v709 = vpop.permute.xlu0 %708
        %710 = vset.pattern.permute.xlu0 0
        %711 = vperm.xlu0 %710, %v685
        %v712 = vpop.permute.xlu0 %711
        %713 = vset.pattern.permute.xlu0 0
        %714 = vperm.xlu0 %713, %v686
        %v715 = vpop.permute.xlu0 %714
        %716 = vset.pattern.permute.xlu0 0
        %717 = vperm.xlu0 %716, %v687
        %v718 = vpop.permute.xlu0 %717
        %719 = vset.pattern.permute.xlu0 0
        %720 = vperm.xlu0 %719, %v688
        %v721 = vpop.permute.xlu0 %720
        %722 = vset.pattern.permute.xlu0 0
        %723 = vperm.xlu0 %722, %v689
        %v724 = vpop.permute.xlu0 %723
        %725 = vset.pattern.permute.xlu0 0
        %726 = vperm.xlu0 %725, %v690
        %v727 = vpop.permute.xlu0 %726
        %728 = vset.pattern.permute.xlu0 0
        %729 = vperm.xlu0 %728, %v691
        %v730 = vpop.permute.xlu0 %729
        %731 = vset.pattern.permute.xlu0 0
        %732 = vperm.xlu0 %731, %v692
        %v733 = vpop.permute.xlu0 %732
        %734 = vset.pattern.permute.xlu0 0
        %735 = vperm.xlu0 %734, %v693
        %v736 = vpop.permute.xlu0 %735
        %737 = vset.pattern.permute.xlu0 0
        %738 = vperm.xlu0 %737, %v694
        %v739 = vpop.permute.xlu0 %738
        %740 = vset.pattern.permute.xlu0 0
        %741 = vperm.xlu0 %740, %v695
        %v742 = vpop.permute.xlu0 %741
        %743 = vset.pattern.permute.xlu0 0
        %744 = vperm.xlu0 %743, %v696
        %v745 = vpop.permute.xlu0 %744
        %v746 = vlaneseq
        %v747 = vshrl.u32 %v746, 7
        %v748 = vsub.s32 0, %v747
        %v749 = vrot.slane %v697, %v748
        %vm750 = vcmp.eq.s32.totalorder %v700, %v749
        %vm751 = vcmp.eq.s32.totalorder %v703, %v749
        %vm752 = vcmp.eq.s32.totalorder %v706, %v749
        %vm753 = vcmp.eq.s32.totalorder %v709, %v749
        %vm754 = vcmp.eq.s32.totalorder %v712, %v749
        %vm755 = vcmp.eq.s32.totalorder %v715, %v749
        %vm756 = vcmp.eq.s32.totalorder %v718, %v749
        %vm757 = vcmp.eq.s32.totalorder %v721, %v749
        %vm758 = vcmp.eq.s32.totalorder %v724, %v749
        %vm759 = vcmp.eq.s32.totalorder %v727, %v749
        %vm760 = vcmp.eq.s32.totalorder %v730, %v749
        %vm761 = vcmp.eq.s32.totalorder %v733, %v749
        %vm762 = vcmp.eq.s32.totalorder %v736, %v749
        %vm763 = vcmp.eq.s32.totalorder %v739, %v749
        %vm764 = vcmp.eq.s32.totalorder %v742, %v749
        %vm765 = vcmp.eq.s32.totalorder %v745, %v749
        %v766 = vpack.c.bf16 %v600, %v599
        %v767 = vpack.c.bf16 %v602, %v601
        %v768 = vpack.c.bf16 %v604, %v603
        %v769 = vpack.c.bf16 %v606, %v605
        %v770 = vpack.c.bf16 %v608, %v607
        %v771 = vpack.c.bf16 %v610, %v609
        %v772 = vpack.c.bf16 %v612, %v611
        %v773 = vpack.c.bf16 %v614, %v613
        %v774 = vld [vmem:[#allocation4] sm:$0xff]
        %v775 = vld [vmem:[#allocation4 + $0x8] sm:$0xf]
        %v776 = vld [vmem:[#allocation4 + $0xc] sm:$0xff]
        %v777 = vld [vmem:[#allocation4 + $0x14] sm:$0xf]
        %v778 = vld [vmem:[#allocation4 + $0x18] sm:$0xff]
        %v779 = vld [vmem:[#allocation4 + $0x20] sm:$0xf]
        %v780 = vld [vmem:[#allocation4 + $0x24] sm:$0xff]
        %v781 = vld [vmem:[#allocation4 + $0x2c] sm:$0xf]
        %v782 = vld [vmem:[#allocation4 + $0x30] sm:$0xff]
        %v783 = vld [vmem:[#allocation4 + $0x38] sm:$0xf]
        %v784 = vld [vmem:[#allocation4 + $0x3c] sm:$0xff]
        %v785 = vld [vmem:[#allocation4 + $0x44] sm:$0xf]
        %v786 = vld [vmem:[#allocation4 + $0x48] sm:$0xff]
        %v787 = vld [vmem:[#allocation4 + $0x50] sm:$0xf]
        %v788 = vld [vmem:[#allocation4 + $0x54] sm:$0xff]
        %v789 = vld [vmem:[#allocation4 + $0x5c] sm:$0xf]
        %v790 = vld [vmem:[#allocation4 + $0x60] sm:$0xff]
        %v791 = vld [vmem:[#allocation4 + $0x68] sm:$0xf]
        %v792 = vld [vmem:[#allocation4 + $0x6c] sm:$0xff]
        %v793 = vld [vmem:[#allocation4 + $0x74] sm:$0xf]
        %v794 = vld [vmem:[#allocation4 + $0x78] sm:$0xff]
        %v795 = vld [vmem:[#allocation4 + $0x80] sm:$0xf]
        %v796 = vld [vmem:[#allocation4 + $0x84] sm:$0xff]
        %v797 = vld [vmem:[#allocation4 + $0x8c] sm:$0xf]
        %v798 = vld [vmem:[#allocation4 + $0x90] sm:$0xff]
        %v799 = vld [vmem:[#allocation4 + $0x98] sm:$0xf]
        %v800 = vld [vmem:[#allocation4 + $0x9c] sm:$0xff]
        %v801 = vld [vmem:[#allocation4 + $0xa4] sm:$0xf]
        %v802 = vld [vmem:[#allocation4 + $0xa8] sm:$0xff]
        %v803 = vld [vmem:[#allocation4 + $0xb0] sm:$0xf]
        %v804 = vld [vmem:[#allocation4 + $0xb4] sm:$0xff]
        %v805 = vld [vmem:[#allocation4 + $0xbc] sm:$0xf]
        %v806 = vld [vmem:[%s5] sm:$0x7]
        %v808 = vlaneseq
        %v809 = vshrl.u32 %v808, 7
        %v810 = vsub.s32 0, %v809
        %v811 = vrot.slane %v806, %v810
        %v812 = vlaneseq
        %v813 = vshrl.u32 %v812, 7
        %v814 = vsub.s32 1, %v813
        %v815 = vrot.slane %v806, %v814
        %v816 = vlaneseq
        %v817 = vshrl.u32 %v816, 7
        %v818 = vsub.s32 2, %v817
        %v819 = vrot.slane %v806, %v818
        %v855 = vunpack.c.l.b16 %v774
        %v856 = vunpack.c.h.b16 %v774
        %v857 = vunpack.c.l.b16 %v775
        %v858 = vunpack.c.l.b16 %v776
        %v859 = vunpack.c.h.b16 %v776
        %v860 = vunpack.c.l.b16 %v777
        %v861 = vunpack.c.l.b16 %v778
        %v862 = vunpack.c.h.b16 %v778
        %v863 = vunpack.c.l.b16 %v779
        %v864 = vunpack.c.l.b16 %v780
        %v865 = vunpack.c.h.b16 %v780
        %v866 = vunpack.c.l.b16 %v781
        %v867 = vunpack.c.l.b16 %v782
        %v868 = vunpack.c.h.b16 %v782
        %v869 = vunpack.c.l.b16 %v783
        %v870 = vunpack.c.l.b16 %v784
        %v871 = vunpack.c.h.b16 %v784
        %v872 = vunpack.c.l.b16 %v785
        %v873 = vunpack.c.l.b16 %v786
        %v874 = vunpack.c.h.b16 %v786
        %v875 = vunpack.c.l.b16 %v787
        %v876 = vunpack.c.l.b16 %v788
        %v877 = vunpack.c.h.b16 %v788
        %v878 = vunpack.c.l.b16 %v789
        %v879 = vunpack.c.l.b16 %v790
        %v880 = vunpack.c.h.b16 %v790
        %v881 = vunpack.c.l.b16 %v791
        %v882 = vunpack.c.l.b16 %v792
        %v883 = vunpack.c.h.b16 %v792
        %v884 = vunpack.c.l.b16 %v793
        %v885 = vunpack.c.l.b16 %v794
        %v886 = vunpack.c.h.b16 %v794
        %v887 = vunpack.c.l.b16 %v795
        %v888 = vunpack.c.l.b16 %v796
        %v889 = vunpack.c.h.b16 %v796
        %v890 = vunpack.c.l.b16 %v797
        %v891 = vunpack.c.l.b16 %v798
        %v892 = vunpack.c.h.b16 %v798
        %v893 = vunpack.c.l.b16 %v799
        %v894 = vunpack.c.l.b16 %v800
        %v895 = vunpack.c.h.b16 %v800
        %v896 = vunpack.c.l.b16 %v801
        %v897 = vunpack.c.l.b16 %v802
        %v898 = vunpack.c.h.b16 %v802
        %v899 = vunpack.c.l.b16 %v803
        %v900 = vunpack.c.l.b16 %v804
        %v901 = vunpack.c.h.b16 %v804
        %v902 = vunpack.c.l.b16 %v805
        %v903 = vpack.c.b16 %v858, %v855
        %v904 = vpack.c.b16 %v859, %v856
        %v905 = vpack.c.b16 %v860, %v857
        %v906 = vpack.c.b16 %v864, %v861
        %v907 = vpack.c.b16 %v865, %v862
        %v908 = vpack.c.b16 %v866, %v863
        %v909 = vpack.c.b16 %v870, %v867
        %v910 = vpack.c.b16 %v871, %v868
        %v911 = vpack.c.b16 %v872, %v869
        %v912 = vpack.c.b16 %v876, %v873
        %v913 = vpack.c.b16 %v877, %v874
        %v914 = vpack.c.b16 %v878, %v875
        %v915 = vpack.c.b16 %v882, %v879
        %v916 = vpack.c.b16 %v883, %v880
        %v917 = vpack.c.b16 %v884, %v881
        %v918 = vpack.c.b16 %v888, %v885
        %v919 = vpack.c.b16 %v889, %v886
        %v920 = vpack.c.b16 %v890, %v887
        %v921 = vpack.c.b16 %v894, %v891
        %v922 = vpack.c.b16 %v895, %v892
        %v923 = vpack.c.b16 %v896, %v893
        %v924 = vpack.c.b16 %v900, %v897
        %v925 = vpack.c.b16 %v901, %v898
        %v926 = vpack.c.b16 %v902, %v899
        %951 = vmatprep.subr.bf16.mxu0 %v904
        %952 = vmatpush1.bf16.msra.mxu0 %v903
        %953 = vmatprep.subr.bf16.mxu0 %v907
        %954 = vmatpush1.bf16.msra.mxu0 %v906
        %955 = vmatprep.subr.bf16.mxu0 %v910
        %956 = vmatpush1.bf16.msra.mxu0 %v909
        %957 = vmatprep.subr.bf16.mxu0 %v913
        %958 = vmatpush1.bf16.msra.mxu0 %v912
        %959 = vmatprep.subr.bf16.mxu0 %v916
        %960 = vmatpush1.bf16.msra.mxu0 %v915
        %961 = vmatprep.subr.bf16.mxu0 %v919
        %962 = vmatpush1.bf16.msra.mxu0 %v918
        %963 = vmatprep.subr.bf16.mxu0 %v922
        %964 = vmatpush1.bf16.msra.mxu0 %v921
        %965 = vmatprep.subr.bf16.mxu0 %v925
        %966 = vmatpush1.bf16.msra.mxu0 %v924
        %967 = vmatprep.subr.bf16.mxu0 0
        %968 = vmatpush1.bf16.msra.mxu0 0
        %969 = vmatprep.subr.bf16.mxu0 0
        %970 = vmatpush1.bf16.msra.mxu0 0
        %971 = vmatprep.subr.bf16.mxu0 0
        %972 = vmatpush1.bf16.msra.mxu0 0
        %973 = vmatprep.subr.bf16.mxu0 0
        %974 = vmatpush1.bf16.msra.mxu0 0
        %975 = vmatprep.subr.bf16.mxu0 0
        %976 = vmatpush1.bf16.msra.mxu0 0
        %977 = vmatprep.subr.bf16.mxu0 0
        %978 = vmatpush1.bf16.msra.mxu0 0
        %979 = vmatprep.subr.bf16.mxu0 0
        %980 = vmatpush1.bf16.msra.mxu0 0
        %981 = vmatprep.subr.bf16.mxu0 0
        %982 = vmatpush1.bf16.msra.mxu0 0
        %983 = vmatprep.mubr.bf16.mxu0 0
        %984 = vmatmul.mubr.bf16.gmra.mrb[0].mxu0 %v766
        %v985 = vpop.f32.mrb[0].mxu0
        %v986 = vadd.f32 %v811, %v985
        %v987 = vpop.f32.mrb[0].mxu0
        %v988 = vadd.f32 %v815, %v987
        %v989 = vpop.f32.mrb[0].mxu0
        %v990 = vadd.f32 %v811, %v989
        %v991 = vpop.f32.mrb[0].mxu0
        %v992 = vadd.f32 %v815, %v991
        %993 = vmatprep.mubr.bf16.mxu0 0
        %994 = vmatmul.mubr.bf16.gmra.mrb[0].mxu0 %v767
        %v995 = vpop.f32.mrb[0].mxu0
        %v996 = vadd.f32 %v811, %v995
        %v997 = vpop.f32.mrb[0].mxu0
        %v998 = vadd.f32 %v815, %v997
        %v999 = vpop.f32.mrb[0].mxu0
        %v1000 = vadd.f32 %v811, %v999
        %v1001 = vpop.f32.mrb[0].mxu0
        %v1002 = vadd.f32 %v815, %v1001
        %1003 = vmatprep.mubr.bf16.mxu0 0
        %1004 = vmatmul.mubr.bf16.gmra.mrb[0].mxu0 %v768
        %v1005 = vpop.f32.mrb[0].mxu0
        %v1006 = vadd.f32 %v811, %v1005
        %v1007 = vpop.f32.mrb[0].mxu0
        %v1008 = vadd.f32 %v815, %v1007
        %v1009 = vpop.f32.mrb[0].mxu0
        %v1010 = vadd.f32 %v811, %v1009
        %v1011 = vpop.f32.mrb[0].mxu0
        %v1012 = vadd.f32 %v815, %v1011
        %1013 = vmatprep.mubr.bf16.mxu0 0
        %1014 = vmatmul.mubr.bf16.gmra.mrb[0].mxu0 %v769
        %v1015 = vpop.f32.mrb[0].mxu0
        %v1016 = vadd.f32 %v811, %v1015
        %v1017 = vpop.f32.mrb[0].mxu0
        %v1018 = vadd.f32 %v815, %v1017
        %v1019 = vpop.f32.mrb[0].mxu0
        %v1020 = vadd.f32 %v811, %v1019
        %v1021 = vpop.f32.mrb[0].mxu0
        %v1022 = vadd.f32 %v815, %v1021
        %1023 = vmatprep.mubr.bf16.mxu0 0
        %1024 = vmatmul.mubr.bf16.gmra.mrb[0].mxu0 %v770
        %v1025 = vpop.f32.mrb[0].mxu0
        %v1026 = vadd.f32 %v811, %v1025
        %v1027 = vpop.f32.mrb[0].mxu0
        %v1028 = vadd.f32 %v815, %v1027
        %v1029 = vpop.f32.mrb[0].mxu0
        %v1030 = vadd.f32 %v811, %v1029
        %v1031 = vpop.f32.mrb[0].mxu0
        %v1032 = vadd.f32 %v815, %v1031
        %1033 = vmatprep.mubr.bf16.mxu0 0
        %1034 = vmatmul.mubr.bf16.gmra.mrb[0].mxu0 %v771
        %v1035 = vpop.f32.mrb[0].mxu0
        %v1036 = vadd.f32 %v811, %v1035
        %v1037 = vpop.f32.mrb[0].mxu0
        %v1038 = vadd.f32 %v815, %v1037
        %v1039 = vpop.f32.mrb[0].mxu0
        %v1040 = vadd.f32 %v811, %v1039
        %v1041 = vpop.f32.mrb[0].mxu0
        %v1042 = vadd.f32 %v815, %v1041
        %1043 = vmatprep.mubr.bf16.mxu0 0
        %1044 = vmatmul.mubr.bf16.gmra.mrb[0].mxu0 %v772
        %v1045 = vpop.f32.mrb[0].mxu0
        %v1046 = vadd.f32 %v811, %v1045
        %v1047 = vpop.f32.mrb[0].mxu0
        %v1048 = vadd.f32 %v815, %v1047
        %v1049 = vpop.f32.mrb[0].mxu0
        %v1050 = vadd.f32 %v811, %v1049
        %v1051 = vpop.f32.mrb[0].mxu0
        %v1052 = vadd.f32 %v815, %v1051
        %1053 = vmatprep.mubr.bf16.mxu0 0
        %1054 = vmatmul.mubr.bf16.gmra.mrb[0].mxu0 %v773
        %v1055 = vpop.f32.mrb[0].mxu0
        %v1056 = vadd.f32 %v811, %v1055
        %v1057 = vpop.f32.mrb[0].mxu0
        %v1058 = vadd.f32 %v815, %v1057
        %v1059 = vpop.f32.mrb[0].mxu0
        %v1060 = vadd.f32 %v811, %v1059
        %v1061 = vpop.f32.mrb[0].mxu0
        %v1062 = vadd.f32 %v815, %v1061
        %1063 = vdwg.mxu0
        %1064 = vmatprep.subr.bf16.mxu0 0
        %1065 = vmatpush1.bf16.msra.mxu0 %v905
        %1066 = vmatprep.subr.bf16.mxu0 0
        %1067 = vmatpush1.bf16.msra.mxu0 %v908
        %1068 = vmatprep.subr.bf16.mxu0 0
        %1069 = vmatpush1.bf16.msra.mxu0 %v911
        %1070 = vmatprep.subr.bf16.mxu0 0
        %1071 = vmatpush1.bf16.msra.mxu0 %v914
        %1072 = vmatprep.subr.bf16.mxu0 0
        %1073 = vmatpush1.bf16.msra.mxu0 %v917
        %1074 = vmatprep.subr.bf16.mxu0 0
        %1075 = vmatpush1.bf16.msra.mxu0 %v920
        %1076 = vmatprep.subr.bf16.mxu0 0
        %1077 = vmatpush1.bf16.msra.mxu0 %v923
        %1078 = vmatprep.subr.bf16.mxu0 0
        %1079 = vmatpush1.bf16.msra.mxu0 %v926
        %1080 = vmatprep.subr.bf16.mxu0 0
        %1081 = vmatpush1.bf16.msra.mxu0 0
        %1082 = vmatprep.subr.bf16.mxu0 0
        %1083 = vmatpush1.bf16.msra.mxu0 0
        %1084 = vmatprep.subr.bf16.mxu0 0
        %1085 = vmatpush1.bf16.msra.mxu0 0
        %1086 = vmatprep.subr.bf16.mxu0 0
        %1087 = vmatpush1.bf16.msra.mxu0 0
        %1088 = vmatprep.subr.bf16.mxu0 0
        %1089 = vmatpush1.bf16.msra.mxu0 0
        %1090 = vmatprep.subr.bf16.mxu0 0
        %1091 = vmatpush1.bf16.msra.mxu0 0
        %1092 = vmatprep.subr.bf16.mxu0 0
        %1093 = vmatpush1.bf16.msra.mxu0 0
        %1094 = vmatprep.subr.bf16.mxu0 0
        %1095 = vmatpush1.bf16.msra.mxu0 0
        %1096 = vmatprep.mubr.bf16.mxu0 0
        %1097 = vmatmul.mubr.bf16.gmra.mrb[0].mxu0 %v766
        %v1098 = vpop.f32.mrb[0].mxu0
        %v1099 = vadd.f32 %v819, %v1098
        %v1100 = vpop.f32.mrb[0].mxu0
        %v1101 = vpop.f32.mrb[0].mxu0
        %v1102 = vadd.f32 %v819, %v1101
        %v1103 = vpop.f32.mrb[0].mxu0
        %1104 = vmatprep.mubr.bf16.mxu0 0
        %1105 = vmatmul.mubr.bf16.gmra.mrb[0].mxu0 %v767
        %v1106 = vpop.f32.mrb[0].mxu0
        %v1107 = vadd.f32 %v819, %v1106
        %v1108 = vpop.f32.mrb[0].mxu0
        %v1109 = vpop.f32.mrb[0].mxu0
        %v1110 = vadd.f32 %v819, %v1109
        %v1111 = vpop.f32.mrb[0].mxu0
        %1112 = vmatprep.mubr.bf16.mxu0 0
        %1113 = vmatmul.mubr.bf16.gmra.mrb[0].mxu0 %v768
        %v1114 = vpop.f32.mrb[0].mxu0
        %v1115 = vadd.f32 %v819, %v1114
        %v1116 = vpop.f32.mrb[0].mxu0
        %v1117 = vpop.f32.mrb[0].mxu0
        %v1118 = vadd.f32 %v819, %v1117
        %v1119 = vpop.f32.mrb[0].mxu0
        %1120 = vmatprep.mubr.bf16.mxu0 0
        %1121 = vmatmul.mubr.bf16.gmra.mrb[0].mxu0 %v769
        %v1122 = vpop.f32.mrb[0].mxu0
        %v1123 = vadd.f32 %v819, %v1122
        %v1124 = vpop.f32.mrb[0].mxu0
        %v1125 = vpop.f32.mrb[0].mxu0
        %v1126 = vadd.f32 %v819, %v1125
        %v1127 = vpop.f32.mrb[0].mxu0
        %1128 = vmatprep.mubr.bf16.mxu0 0
        %1129 = vmatmul.mubr.bf16.gmra.mrb[0].mxu0 %v770
        %v1130 = vpop.f32.mrb[0].mxu0
        %v1131 = vadd.f32 %v819, %v1130
        %v1132 = vpop.f32.mrb[0].mxu0
        %v1133 = vpop.f32.mrb[0].mxu0
        %v1134 = vadd.f32 %v819, %v1133
        %v1135 = vpop.f32.mrb[0].mxu0
        %1136 = vmatprep.mubr.bf16.mxu0 0
        %1137 = vmatmul.mubr.bf16.gmra.mrb[0].mxu0 %v771
        %v1138 = vpop.f32.mrb[0].mxu0
        %v1139 = vadd.f32 %v819, %v1138
        %v1140 = vpop.f32.mrb[0].mxu0
        %v1141 = vpop.f32.mrb[0].mxu0
        %v1142 = vadd.f32 %v819, %v1141
        %v1143 = vpop.f32.mrb[0].mxu0
        %1144 = vmatprep.mubr.bf16.mxu0 0
        %1145 = vmatmul.mubr.bf16.gmra.mrb[0].mxu0 %v772
        %v1146 = vpop.f32.mrb[0].mxu0
        %v1147 = vadd.f32 %v819, %v1146
        %v1148 = vpop.f32.mrb[0].mxu0
        %v1149 = vpop.f32.mrb[0].mxu0
        %v1150 = vadd.f32 %v819, %v1149
        %v1151 = vpop.f32.mrb[0].mxu0
        %1152 = vmatprep.mubr.bf16.mxu0 0
        %1153 = vmatmul.mubr.bf16.gmra.mrb[0].mxu0 %v773
        %v1154 = vpop.f32.mrb[0].mxu0
        %v1155 = vadd.f32 %v819, %v1154
        %v1156 = vpop.f32.mrb[0].mxu0
        %v1157 = vpop.f32.mrb[0].mxu0
        %v1158 = vadd.f32 %v819, %v1157
        %v1159 = vpop.f32.mrb[0].mxu0
        %1160 = vdwg.mxu0
        %v1161 = vld [vmem:[#allocation7] sm:$0xf]
        %v1162 = vld [vmem:[#allocation7 + $0x4] sm:$0xf]
        %v1163 = vld [vmem:[#allocation7 + $0x8] sm:$0xf]
        %v1164 = vld [vmem:[#allocation7 + $0xc] sm:$0xf]
        %v1165 = vld [vmem:[#allocation7 + $0x10] sm:$0xf]
        %v1166 = vld [vmem:[#allocation7 + $0x14] sm:$0xf]
        %v1167 = vld [vmem:[#allocation7 + $0x18] sm:$0xf]
        %v1168 = vld [vmem:[#allocation7 + $0x1c] sm:$0xf]
        %v1169 = vld [vmem:[#allocation7 + $0x20] sm:$0xf]
        %v1170 = vld [vmem:[#allocation7 + $0x24] sm:$0xf]
        %v1171 = vld [vmem:[#allocation7 + $0x28] sm:$0xf]
        %v1172 = vld [vmem:[#allocation7 + $0x2c] sm:$0xf]
        %v1173 = vld [vmem:[#allocation7 + $0x30] sm:$0xf]
        %v1174 = vld [vmem:[#allocation7 + $0x34] sm:$0xf]
        %v1175 = vld [vmem:[#allocation7 + $0x38] sm:$0xf]
        %v1176 = vld [vmem:[#allocation7 + $0x3c] sm:$0xf]
        %v1177 = vpack.c.bf16 %v990, %v986
        %v1178 = vpack.c.bf16 %v1000, %v996
        %v1179 = vpack.c.bf16 %v1010, %v1006
        %v1180 = vpack.c.bf16 %v1020, %v1016
        %v1181 = vpack.c.bf16 %v1030, %v1026
        %v1182 = vpack.c.bf16 %v1040, %v1036
        %v1183 = vpack.c.bf16 %v1050, %v1046
        %v1184 = vpack.c.bf16 %v1060, %v1056
        %v1185 = vpack.c.bf16 %v992, %v988
        %v1186 = vpack.c.bf16 %v1002, %v998
        %v1187 = vpack.c.bf16 %v1012, %v1008
        %v1188 = vpack.c.bf16 %v1022, %v1018
        %v1189 = vpack.c.bf16 %v1032, %v1028
        %v1190 = vpack.c.bf16 %v1042, %v1038
        %v1191 = vpack.c.bf16 %v1052, %v1048
        %v1192 = vpack.c.bf16 %v1062, %v1058
        %v1193 = vpack.c.bf16 %v1102, %v1099
        %v1194 = vpack.c.bf16 %v1110, %v1107
        %v1195 = vpack.c.bf16 %v1118, %v1115
        %v1196 = vpack.c.bf16 %v1126, %v1123
        %v1197 = vpack.c.bf16 %v1134, %v1131
        %v1198 = vpack.c.bf16 %v1142, %v1139
        %v1199 = vpack.c.bf16 %v1150, %v1147
        %v1200 = vpack.c.bf16 %v1158, %v1155
        %vm1201 = vcmask 261120
        %v1203 = vsel %vm1201, %v1177, 0
        %v1206 = vsel %vm1201, %v1178, 0
        %v1209 = vsel %vm1201, %v1179, 0
        %v1212 = vsel %vm1201, %v1180, 0
        %v1215 = vsel %vm1201, %v1181, 0
        %v1218 = vsel %vm1201, %v1182, 0
        %v1221 = vsel %vm1201, %v1183, 0
        %v1224 = vsel %vm1201, %v1184, 0
        %v1227 = vsel %vm1201, %v1185, 0
        %v1230 = vsel %vm1201, %v1186, 0
        %v1233 = vsel %vm1201, %v1187, 0
        %v1236 = vsel %vm1201, %v1188, 0
        %v1239 = vsel %vm1201, %v1189, 0
        %v1242 = vsel %vm1201, %v1190, 0
        %v1245 = vsel %vm1201, %v1191, 0
        %v1248 = vsel %vm1201, %v1192, 0
        %1250 = vmatprep.subr.bf16.mxu0 0
        %1251 = vmatpush1.bf16.xpose.msra.mxu0 %v1227
        %1252 = vmatprep.subr.bf16.mxu0 0
        %1253 = vmatpush1.bf16.xpose.msra.mxu0 %v1230
        %1254 = vmatprep.subr.bf16.mxu0 0
        %1255 = vmatpush1.bf16.xpose.msra.mxu0 %v1233
        %1256 = vmatprep.subr.bf16.mxu0 0
        %1257 = vmatpush1.bf16.xpose.msra.mxu0 %v1236
        %1258 = vmatprep.subr.bf16.mxu0 0
        %1259 = vmatpush1.bf16.xpose.msra.mxu0 %v1239
        %1260 = vmatprep.subr.bf16.mxu0 0
        %1261 = vmatpush1.bf16.xpose.msra.mxu0 %v1242
        %1262 = vmatprep.subr.bf16.mxu0 0
        %1263 = vmatpush1.bf16.xpose.msra.mxu0 %v1245
        %1264 = vmatprep.subr.bf16.mxu0 0
        %1265 = vmatpush1.bf16.xpose.msra.mxu0 %v1248
        %1266 = vmatprep.subr.bf16.mxu0 0
        %1267 = vmatpush1.bf16.xpose.msra.mxu0 0
        %1268 = vmatprep.subr.bf16.mxu0 0
        %1269 = vmatpush1.bf16.xpose.msra.mxu0 0
        %1270 = vmatprep.subr.bf16.mxu0 0
        %1271 = vmatpush1.bf16.xpose.msra.mxu0 0
        %1272 = vmatprep.subr.bf16.mxu0 0
        %1273 = vmatpush1.bf16.xpose.msra.mxu0 0
        %1274 = vmatprep.subr.bf16.mxu0 0
        %1275 = vmatpush1.bf16.xpose.msra.mxu0 0
        %1276 = vmatprep.subr.bf16.mxu0 0
        %1277 = vmatpush1.bf16.xpose.msra.mxu0 0
        %1278 = vmatprep.subr.bf16.mxu0 0
        %1279 = vmatpush1.bf16.xpose.msra.mxu0 0
        %1280 = vmatprep.subr.bf16.mxu0 0
        %1281 = vmatpush1.bf16.xpose.msra.mxu0 0
        %1282 = vmatprep.mubr.bf16.mxu0 0
        %1283 = vmatmul.mubr.bf16.gmra.mrb[0].mxu0 %v1203
        %v1284 = vpop.f32.mrb[0].mxu0
        %v1285 = vadd.f32 0.0, %v1284
        %v1286 = vpop.f32.mrb[0].mxu0
        %v1287 = vpop.f32.mrb[0].mxu0
        %v1288 = vadd.f32 0.0, %v1287
        %v1289 = vpop.f32.mrb[0].mxu0
        %1290 = vmatprep.mubr.bf16.mxu0 0
        %1291 = vmatmul.mubr.bf16.gmra.mrb[0].mxu0 %v1206
        %v1292 = vpop.f32.mrb[0].mxu0
        %v1293 = vadd.f32 0.0, %v1292
        %v1294 = vpop.f32.mrb[0].mxu0
        %v1295 = vpop.f32.mrb[0].mxu0
        %v1296 = vadd.f32 0.0, %v1295
        %v1297 = vpop.f32.mrb[0].mxu0
        %1298 = vmatprep.mubr.bf16.mxu0 0
        %1299 = vmatmul.mubr.bf16.gmra.mrb[0].mxu0 %v1209
        %v1300 = vpop.f32.mrb[0].mxu0
        %v1301 = vadd.f32 0.0, %v1300
        %v1302 = vpop.f32.mrb[0].mxu0
        %v1303 = vpop.f32.mrb[0].mxu0
        %v1304 = vadd.f32 0.0, %v1303
        %v1305 = vpop.f32.mrb[0].mxu0
        %1306 = vmatprep.mubr.bf16.mxu0 0
        %1307 = vmatmul.mubr.bf16.gmra.mrb[0].mxu0 %v1212
        %v1308 = vpop.f32.mrb[0].mxu0
        %v1309 = vadd.f32 0.0, %v1308
        %v1310 = vpop.f32.mrb[0].mxu0
        %v1311 = vpop.f32.mrb[0].mxu0
        %v1312 = vadd.f32 0.0, %v1311
        %v1313 = vpop.f32.mrb[0].mxu0
        %1314 = vmatprep.mubr.bf16.mxu0 0
        %1315 = vmatmul.mubr.bf16.gmra.mrb[0].mxu0 %v1215
        %v1316 = vpop.f32.mrb[0].mxu0
        %v1317 = vadd.f32 0.0, %v1316
        %v1318 = vpop.f32.mrb[0].mxu0
        %v1319 = vpop.f32.mrb[0].mxu0
        %v1320 = vadd.f32 0.0, %v1319
        %v1321 = vpop.f32.mrb[0].mxu0
        %1322 = vmatprep.mubr.bf16.mxu0 0
        %1323 = vmatmul.mubr.bf16.gmra.mrb[0].mxu0 %v1218
        %v1324 = vpop.f32.mrb[0].mxu0
        %v1325 = vadd.f32 0.0, %v1324
        %v1326 = vpop.f32.mrb[0].mxu0
        %v1327 = vpop.f32.mrb[0].mxu0
        %v1328 = vadd.f32 0.0, %v1327
        %v1329 = vpop.f32.mrb[0].mxu0
        %1330 = vmatprep.mubr.bf16.mxu0 0
        %1331 = vmatmul.mubr.bf16.gmra.mrb[0].mxu0 %v1221
        %v1332 = vpop.f32.mrb[0].mxu0
        %v1333 = vadd.f32 0.0, %v1332
        %v1334 = vpop.f32.mrb[0].mxu0
        %v1335 = vpop.f32.mrb[0].mxu0
        %v1336 = vadd.f32 0.0, %v1335
        %v1337 = vpop.f32.mrb[0].mxu0
        %1338 = vmatprep.mubr.bf16.mxu0 0
        %1339 = vmatmul.mubr.bf16.gmra.mrb[0].mxu0 %v1224
        %v1340 = vpop.f32.mrb[0].mxu0
        %v1341 = vadd.f32 0.0, %v1340
        %v1342 = vpop.f32.mrb[0].mxu0
        %v1343 = vpop.f32.mrb[0].mxu0
        %v1344 = vadd.f32 0.0, %v1343
        %v1345 = vpop.f32.mrb[0].mxu0
        %1346 = vdwg.mxu0
        %v1347 = vsel %vm750, %v1285, -1e+30
        %v1348 = vsel %vm751, %v1288, -1e+30
        %v1349 = vsel %vm752, %v1293, -1e+30
        %v1350 = vsel %vm753, %v1296, -1e+30
        %v1351 = vsel %vm754, %v1301, -1e+30
        %v1352 = vsel %vm755, %v1304, -1e+30
        %v1353 = vsel %vm756, %v1309, -1e+30
        %v1354 = vsel %vm757, %v1312, -1e+30
        %v1355 = vsel %vm758, %v1317, -1e+30
        %v1356 = vsel %vm759, %v1320, -1e+30
        %v1357 = vsel %vm760, %v1325, -1e+30
        %v1358 = vsel %vm761, %v1328, -1e+30
        %v1359 = vsel %vm762, %v1333, -1e+30
        %v1360 = vsel %vm763, %v1336, -1e+30
        %v1361 = vsel %vm764, %v1341, -1e+30
        %v1362 = vsel %vm765, %v1344, -1e+30
        %1363 = vmax.xlane.f32.xlu0 %v1347
        %v1364 = vpop.xlane.xlu0 %1363
        %1365 = vmax.xlane.f32.xlu0 %v1348
        %v1366 = vpop.xlane.xlu0 %1365
        %1367 = vmax.xlane.f32.xlu0 %v1349
        %v1368 = vpop.xlane.xlu0 %1367
        %1369 = vmax.xlane.f32.xlu0 %v1350
        %v1370 = vpop.xlane.xlu0 %1369
        %1371 = vmax.xlane.f32.xlu0 %v1351
        %v1372 = vpop.xlane.xlu0 %1371
        %1373 = vmax.xlane.f32.xlu0 %v1352
        %v1374 = vpop.xlane.xlu0 %1373
        %1375 = vmax.xlane.f32.xlu0 %v1353
        %v1376 = vpop.xlane.xlu0 %1375
        %1377 = vmax.xlane.f32.xlu0 %v1354
        %v1378 = vpop.xlane.xlu0 %1377
        %1379 = vmax.xlane.f32.xlu0 %v1355
        %v1380 = vpop.xlane.xlu0 %1379
        %1381 = vmax.xlane.f32.xlu0 %v1356
        %v1382 = vpop.xlane.xlu0 %1381
        %1383 = vmax.xlane.f32.xlu0 %v1357
        %v1384 = vpop.xlane.xlu0 %1383
        %1385 = vmax.xlane.f32.xlu0 %v1358
        %v1386 = vpop.xlane.xlu0 %1385
        %1387 = vmax.xlane.f32.xlu0 %v1359
        %v1388 = vpop.xlane.xlu0 %1387
        %1389 = vmax.xlane.f32.xlu0 %v1360
        %v1390 = vpop.xlane.xlu0 %1389
        %1391 = vmax.xlane.f32.xlu0 %v1361
        %v1392 = vpop.xlane.xlu0 %1391
        %1393 = vmax.xlane.f32.xlu0 %v1362
        %v1394 = vpop.xlane.xlu0 %1393
        %v1395 = vsub.f32 %v1347, %v1364
        %v1396 = vsub.f32 %v1348, %v1366
        %v1397 = vsub.f32 %v1349, %v1368
        %v1398 = vsub.f32 %v1350, %v1370
        %v1399 = vsub.f32 %v1351, %v1372
        %v1400 = vsub.f32 %v1352, %v1374
        %v1401 = vsub.f32 %v1353, %v1376
        %v1402 = vsub.f32 %v1354, %v1378
        %v1403 = vsub.f32 %v1355, %v1380
        %v1404 = vsub.f32 %v1356, %v1382
        %v1405 = vsub.f32 %v1357, %v1384
        %v1406 = vsub.f32 %v1358, %v1386
        %v1407 = vsub.f32 %v1359, %v1388
        %v1408 = vsub.f32 %v1360, %v1390
        %v1409 = vsub.f32 %v1361, %v1392
        %v1410 = vsub.f32 %v1362, %v1394
        %v1411 = vmul.f32 %v1395, 1.442695
        %v1412 = vpow.pop %v1411
        %v1413 = vmul.f32 %v1396, 1.442695
        %v1414 = vpow.pop %v1413
        %v1415 = vmul.f32 %v1397, 1.442695
        %v1416 = vpow.pop %v1415
        %v1417 = vmul.f32 %v1398, 1.442695
        %v1418 = vpow.pop %v1417
        %v1419 = vmul.f32 %v1399, 1.442695
        %v1420 = vpow.pop %v1419
        %v1421 = vmul.f32 %v1400, 1.442695
        %v1422 = vpow.pop %v1421
        %v1423 = vmul.f32 %v1401, 1.442695
        %v1424 = vpow.pop %v1423
        %v1425 = vmul.f32 %v1402, 1.442695
        %v1426 = vpow.pop %v1425
        %v1427 = vmul.f32 %v1403, 1.442695
        %v1428 = vpow.pop %v1427
        %v1429 = vmul.f32 %v1404, 1.442695
        %v1430 = vpow.pop %v1429
        %v1431 = vmul.f32 %v1405, 1.442695
        %v1432 = vpow.pop %v1431
        %v1433 = vmul.f32 %v1406, 1.442695
        %v1434 = vpow.pop %v1433
        %v1435 = vmul.f32 %v1407, 1.442695
        %v1436 = vpow.pop %v1435
        %v1437 = vmul.f32 %v1408, 1.442695
        %v1438 = vpow.pop %v1437
        %v1439 = vmul.f32 %v1409, 1.442695
        %v1440 = vpow.pop %v1439
        %v1441 = vmul.f32 %v1410, 1.442695
        %v1442 = vpow.pop %v1441
        %1443 = vadd.xlane.f32.xlu0 %v1412
        %v1444 = vpop.xlane.xlu0 %1443
        %1445 = vadd.xlane.f32.xlu0 %v1414
        %v1446 = vpop.xlane.xlu0 %1445
        %1447 = vadd.xlane.f32.xlu0 %v1416
        %v1448 = vpop.xlane.xlu0 %1447
        %1449 = vadd.xlane.f32.xlu0 %v1418
        %v1450 = vpop.xlane.xlu0 %1449
        %1451 = vadd.xlane.f32.xlu0 %v1420
        %v1452 = vpop.xlane.xlu0 %1451
        %1453 = vadd.xlane.f32.xlu0 %v1422
        %v1454 = vpop.xlane.xlu0 %1453
        %1455 = vadd.xlane.f32.xlu0 %v1424
        %v1456 = vpop.xlane.xlu0 %1455
        %1457 = vadd.xlane.f32.xlu0 %v1426
        %v1458 = vpop.xlane.xlu0 %1457
        %1459 = vadd.xlane.f32.xlu0 %v1428
        %v1460 = vpop.xlane.xlu0 %1459
        %1461 = vadd.xlane.f32.xlu0 %v1430
        %v1462 = vpop.xlane.xlu0 %1461
        %1463 = vadd.xlane.f32.xlu0 %v1432
        %v1464 = vpop.xlane.xlu0 %1463
        %1465 = vadd.xlane.f32.xlu0 %v1434
        %v1466 = vpop.xlane.xlu0 %1465
        %1467 = vadd.xlane.f32.xlu0 %v1436
        %v1468 = vpop.xlane.xlu0 %1467
        %1469 = vadd.xlane.f32.xlu0 %v1438
        %v1470 = vpop.xlane.xlu0 %1469
        %1471 = vadd.xlane.f32.xlu0 %v1440
        %v1472 = vpop.xlane.xlu0 %1471
        %1473 = vadd.xlane.f32.xlu0 %v1442
        %v1474 = vpop.xlane.xlu0 %1473
        %v1475 = vrcp.pop %v1444
        %v1476 = vrcp.pop %v1446
        %v1477 = vrcp.pop %v1448
        %v1478 = vrcp.pop %v1450
        %v1479 = vrcp.pop %v1452
        %v1480 = vrcp.pop %v1454
        %v1481 = vrcp.pop %v1456
        %v1482 = vrcp.pop %v1458
        %v1483 = vrcp.pop %v1460
        %v1484 = vrcp.pop %v1462
        %v1485 = vrcp.pop %v1464
        %v1486 = vrcp.pop %v1466
        %v1487 = vrcp.pop %v1468
        %v1488 = vrcp.pop %v1470
        %v1489 = vrcp.pop %v1472
        %v1490 = vrcp.pop %v1474
        %v1491 = vmul.f32 %v1412, %v1475
        %v1492 = vmul.f32 %v1414, %v1476
        %v1493 = vmul.f32 %v1416, %v1477
        %v1494 = vmul.f32 %v1418, %v1478
        %v1495 = vmul.f32 %v1420, %v1479
        %v1496 = vmul.f32 %v1422, %v1480
        %v1497 = vmul.f32 %v1424, %v1481
        %v1498 = vmul.f32 %v1426, %v1482
        %v1499 = vmul.f32 %v1428, %v1483
        %v1500 = vmul.f32 %v1430, %v1484
        %v1501 = vmul.f32 %v1432, %v1485
        %v1502 = vmul.f32 %v1434, %v1486
        %v1503 = vmul.f32 %v1436, %v1487
        %v1504 = vmul.f32 %v1438, %v1488
        %v1505 = vmul.f32 %v1440, %v1489
        %v1506 = vmul.f32 %v1442, %v1490
        %v1507 = vpack.c.bf16 %v1492, %v1491
        %v1508 = vpack.c.bf16 %v1494, %v1493
        %v1509 = vpack.c.bf16 %v1496, %v1495
        %v1510 = vpack.c.bf16 %v1498, %v1497
        %v1511 = vpack.c.bf16 %v1500, %v1499
        %v1512 = vpack.c.bf16 %v1502, %v1501
        %v1513 = vpack.c.bf16 %v1504, %v1503
        %v1514 = vpack.c.bf16 %v1506, %v1505
        %1515 = vmatprep.subr.bf16.mxu0 0
        %1516 = vmatpush1.bf16.msra.mxu0 %v1193
        %1517 = vmatprep.subr.bf16.mxu0 0
        %1518 = vmatpush1.bf16.msra.mxu0 %v1194
        %1519 = vmatprep.subr.bf16.mxu0 0
        %1520 = vmatpush1.bf16.msra.mxu0 %v1195
        %1521 = vmatprep.subr.bf16.mxu0 0
        %1522 = vmatpush1.bf16.msra.mxu0 %v1196
        %1523 = vmatprep.subr.bf16.mxu0 0
        %1524 = vmatpush1.bf16.msra.mxu0 %v1197
        %1525 = vmatprep.subr.bf16.mxu0 0
        %1526 = vmatpush1.bf16.msra.mxu0 %v1198
        %1527 = vmatprep.subr.bf16.mxu0 0
        %1528 = vmatpush1.bf16.msra.mxu0 %v1199
        %1529 = vmatprep.subr.bf16.mxu0 0
        %1530 = vmatpush1.bf16.msra.mxu0 %v1200
        %1531 = vmatprep.subr.bf16.mxu0 0
        %1532 = vmatpush1.bf16.msra.mxu0 0
        %1533 = vmatprep.subr.bf16.mxu0 0
        %1534 = vmatpush1.bf16.msra.mxu0 0
        %1535 = vmatprep.subr.bf16.mxu0 0
        %1536 = vmatpush1.bf16.msra.mxu0 0
        %1537 = vmatprep.subr.bf16.mxu0 0
        %1538 = vmatpush1.bf16.msra.mxu0 0
        %1539 = vmatprep.subr.bf16.mxu0 0
        %1540 = vmatpush1.bf16.msra.mxu0 0
        %1541 = vmatprep.subr.bf16.mxu0 0
        %1542 = vmatpush1.bf16.msra.mxu0 0
        %1543 = vmatprep.subr.bf16.mxu0 0
        %1544 = vmatpush1.bf16.msra.mxu0 0
        %1545 = vmatprep.subr.bf16.mxu0 0
        %1546 = vmatpush1.bf16.msra.mxu0 0
        %1547 = vmatprep.mubr.bf16.mxu0 0
        %1548 = vmatmul.mubr.bf16.gmra.mrb[0].mxu0 %v1507
        %v1549 = vpop.f32.mrb[0].mxu0
        %v1550 = vadd.f32 0.0, %v1549
        %v1551 = vpop.f32.mrb[0].mxu0
        %v1552 = vpop.f32.mrb[0].mxu0
        %v1553 = vadd.f32 0.0, %v1552
        %v1554 = vpop.f32.mrb[0].mxu0
        %1555 = vmatprep.mubr.bf16.mxu0 0
        %1556 = vmatmul.mubr.bf16.gmra.mrb[0].mxu0 %v1508
        %v1557 = vpop.f32.mrb[0].mxu0
        %v1558 = vadd.f32 0.0, %v1557
        %v1559 = vpop.f32.mrb[0].mxu0
        %v1560 = vpop.f32.mrb[0].mxu0
        %v1561 = vadd.f32 0.0, %v1560
        %v1562 = vpop.f32.mrb[0].mxu0
        %1563 = vmatprep.mubr.bf16.mxu0 0
        %1564 = vmatmul.mubr.bf16.gmra.mrb[0].mxu0 %v1509
        %v1565 = vpop.f32.mrb[0].mxu0
        %v1566 = vadd.f32 0.0, %v1565
        %v1567 = vpop.f32.mrb[0].mxu0
        %v1568 = vpop.f32.mrb[0].mxu0
        %v1569 = vadd.f32 0.0, %v1568
        %v1570 = vpop.f32.mrb[0].mxu0
        %1571 = vmatprep.mubr.bf16.mxu0 0
        %1572 = vmatmul.mubr.bf16.gmra.mrb[0].mxu0 %v1510
        %v1573 = vpop.f32.mrb[0].mxu0
        %v1574 = vadd.f32 0.0, %v1573
        %v1575 = vpop.f32.mrb[0].mxu0
        %v1576 = vpop.f32.mrb[0].mxu0
        %v1577 = vadd.f32 0.0, %v1576
        %v1578 = vpop.f32.mrb[0].mxu0
        %1579 = vmatprep.mubr.bf16.mxu0 0
        %1580 = vmatmul.mubr.bf16.gmra.mrb[0].mxu0 %v1511
        %v1581 = vpop.f32.mrb[0].mxu0
        %v1582 = vadd.f32 0.0, %v1581
        %v1583 = vpop.f32.mrb[0].mxu0
        %v1584 = vpop.f32.mrb[0].mxu0
        %v1585 = vadd.f32 0.0, %v1584
        %v1586 = vpop.f32.mrb[0].mxu0
        %1587 = vmatprep.mubr.bf16.mxu0 0
        %1588 = vmatmul.mubr.bf16.gmra.mrb[0].mxu0 %v1512
        %v1589 = vpop.f32.mrb[0].mxu0
        %v1590 = vadd.f32 0.0, %v1589
        %v1591 = vpop.f32.mrb[0].mxu0
        %v1592 = vpop.f32.mrb[0].mxu0
        %v1593 = vadd.f32 0.0, %v1592
        %v1594 = vpop.f32.mrb[0].mxu0
        %1595 = vmatprep.mubr.bf16.mxu0 0
        %1596 = vmatmul.mubr.bf16.gmra.mrb[0].mxu0 %v1513
        %v1597 = vpop.f32.mrb[0].mxu0
        %v1598 = vadd.f32 0.0, %v1597
        %v1599 = vpop.f32.mrb[0].mxu0
        %v1600 = vpop.f32.mrb[0].mxu0
        %v1601 = vadd.f32 0.0, %v1600
        %v1602 = vpop.f32.mrb[0].mxu0
        %1603 = vmatprep.mubr.bf16.mxu0 0
        %1604 = vmatmul.mubr.bf16.gmra.mrb[0].mxu0 %v1514
        %v1605 = vpop.f32.mrb[0].mxu0
        %v1606 = vadd.f32 0.0, %v1605
        %v1607 = vpop.f32.mrb[0].mxu0
        %v1608 = vpop.f32.mrb[0].mxu0
        %v1609 = vadd.f32 0.0, %v1608
        %v1610 = vpop.f32.mrb[0].mxu0
        %1611 = vdwg.mxu0
        %v1612 = vpack.c.bf16 %v1553, %v1550
        %v1613 = vpack.c.bf16 %v1561, %v1558
        %v1614 = vpack.c.bf16 %v1569, %v1566
        %v1615 = vpack.c.bf16 %v1577, %v1574
        %v1616 = vpack.c.bf16 %v1585, %v1582
        %v1617 = vpack.c.bf16 %v1593, %v1590
        %v1618 = vpack.c.bf16 %v1601, %v1598
        %v1619 = vpack.c.bf16 %v1609, %v1606
        %1628 = vrot.lane.b32.xlu0 %v1177, 96
        %v1629 = vpop.permute.xlu0 %1628
        %1630 = vrot.lane.b32.xlu0 %v1178, 96
        %v1631 = vpop.permute.xlu0 %1630
        %1632 = vrot.lane.b32.xlu0 %v1179, 96
        %v1633 = vpop.permute.xlu0 %1632
        %1634 = vrot.lane.b32.xlu0 %v1180, 96
        %v1635 = vpop.permute.xlu0 %1634
        %1636 = vrot.lane.b32.xlu0 %v1181, 96
        %v1637 = vpop.permute.xlu0 %1636
        %1638 = vrot.lane.b32.xlu0 %v1182, 96
        %v1639 = vpop.permute.xlu0 %1638
        %1640 = vrot.lane.b32.xlu0 %v1183, 96
        %v1641 = vpop.permute.xlu0 %1640
        %1642 = vrot.lane.b32.xlu0 %v1184, 96
        %v1643 = vpop.permute.xlu0 %1642
        %1652 = vrot.lane.b32.xlu0 %v1185, 96
        %v1653 = vpop.permute.xlu0 %1652
        %1654 = vrot.lane.b32.xlu0 %v1186, 96
        %v1655 = vpop.permute.xlu0 %1654
        %1656 = vrot.lane.b32.xlu0 %v1187, 96
        %v1657 = vpop.permute.xlu0 %1656
        %1658 = vrot.lane.b32.xlu0 %v1188, 96
        %v1659 = vpop.permute.xlu0 %1658
        %1660 = vrot.lane.b32.xlu0 %v1189, 96
        %v1661 = vpop.permute.xlu0 %1660
        %1662 = vrot.lane.b32.xlu0 %v1190, 96
        %v1663 = vpop.permute.xlu0 %1662
        %1664 = vrot.lane.b32.xlu0 %v1191, 96
        %v1665 = vpop.permute.xlu0 %1664
        %1666 = vrot.lane.b32.xlu0 %v1192, 96
        %v1667 = vpop.permute.xlu0 %1666
        %v1669 = vsel %vm1201, %v1629, 0
        %v1672 = vsel %vm1201, %v1631, 0
        %v1675 = vsel %vm1201, %v1633, 0
        %v1678 = vsel %vm1201, %v1635, 0
        %v1681 = vsel %vm1201, %v1637, 0
        %v1684 = vsel %vm1201, %v1639, 0
        %v1687 = vsel %vm1201, %v1641, 0
        %v1690 = vsel %vm1201, %v1643, 0
        %v1693 = vsel %vm1201, %v1653, 0
        %v1696 = vsel %vm1201, %v1655, 0
        %v1699 = vsel %vm1201, %v1657, 0
        %v1702 = vsel %vm1201, %v1659, 0
        %v1705 = vsel %vm1201, %v1661, 0
        %v1708 = vsel %vm1201, %v1663, 0
        %v1711 = vsel %vm1201, %v1665, 0
        %v1714 = vsel %vm1201, %v1667, 0
        %1716 = vmatprep.subr.bf16.mxu0 0
        %1717 = vmatpush1.bf16.xpose.msra.mxu0 %v1693
        %1718 = vmatprep.subr.bf16.mxu0 0
        %1719 = vmatpush1.bf16.xpose.msra.mxu0 %v1696
        %1720 = vmatprep.subr.bf16.mxu0 0
        %1721 = vmatpush1.bf16.xpose.msra.mxu0 %v1699
        %1722 = vmatprep.subr.bf16.mxu0 0
        %1723 = vmatpush1.bf16.xpose.msra.mxu0 %v1702
        %1724 = vmatprep.subr.bf16.mxu0 0
        %1725 = vmatpush1.bf16.xpose.msra.mxu0 %v1705
        %1726 = vmatprep.subr.bf16.mxu0 0
        %1727 = vmatpush1.bf16.xpose.msra.mxu0 %v1708
        %1728 = vmatprep.subr.bf16.mxu0 0
        %1729 = vmatpush1.bf16.xpose.msra.mxu0 %v1711
        %1730 = vmatprep.subr.bf16.mxu0 0
        %1731 = vmatpush1.bf16.xpose.msra.mxu0 %v1714
        %1732 = vmatprep.subr.bf16.mxu0 0
        %1733 = vmatpush1.bf16.xpose.msra.mxu0 0
        %1734 = vmatprep.subr.bf16.mxu0 0
        %1735 = vmatpush1.bf16.xpose.msra.mxu0 0
        %1736 = vmatprep.subr.bf16.mxu0 0
        %1737 = vmatpush1.bf16.xpose.msra.mxu0 0
        %1738 = vmatprep.subr.bf16.mxu0 0
        %1739 = vmatpush1.bf16.xpose.msra.mxu0 0
        %1740 = vmatprep.subr.bf16.mxu0 0
        %1741 = vmatpush1.bf16.xpose.msra.mxu0 0
        %1742 = vmatprep.subr.bf16.mxu0 0
        %1743 = vmatpush1.bf16.xpose.msra.mxu0 0
        %1744 = vmatprep.subr.bf16.mxu0 0
        %1745 = vmatpush1.bf16.xpose.msra.mxu0 0
        %1746 = vmatprep.subr.bf16.mxu0 0
        %1747 = vmatpush1.bf16.xpose.msra.mxu0 0
        %1748 = vmatprep.mubr.bf16.mxu0 0
        %1749 = vmatmul.mubr.bf16.gmra.mrb[0].mxu0 %v1669
        %v1750 = vpop.f32.mrb[0].mxu0
        %v1751 = vadd.f32 0.0, %v1750
        %v1752 = vpop.f32.mrb[0].mxu0
        %v1753 = vpop.f32.mrb[0].mxu0
        %v1754 = vadd.f32 0.0, %v1753
        %v1755 = vpop.f32.mrb[0].mxu0
        %1756 = vmatprep.mubr.bf16.mxu0 0
        %1757 = vmatmul.mubr.bf16.gmra.mrb[0].mxu0 %v1672
        %v1758 = vpop.f32.mrb[0].mxu0
        %v1759 = vadd.f32 0.0, %v1758
        %v1760 = vpop.f32.mrb[0].mxu0
        %v1761 = vpop.f32.mrb[0].mxu0
        %v1762 = vadd.f32 0.0, %v1761
        %v1763 = vpop.f32.mrb[0].mxu0
        %1764 = vmatprep.mubr.bf16.mxu0 0
        %1765 = vmatmul.mubr.bf16.gmra.mrb[0].mxu0 %v1675
        %v1766 = vpop.f32.mrb[0].mxu0
        %v1767 = vadd.f32 0.0, %v1766
        %v1768 = vpop.f32.mrb[0].mxu0
        %v1769 = vpop.f32.mrb[0].mxu0
        %v1770 = vadd.f32 0.0, %v1769
        %v1771 = vpop.f32.mrb[0].mxu0
        %1772 = vmatprep.mubr.bf16.mxu0 0
        %1773 = vmatmul.mubr.bf16.gmra.mrb[0].mxu0 %v1678
        %v1774 = vpop.f32.mrb[0].mxu0
        %v1775 = vadd.f32 0.0, %v1774
        %v1776 = vpop.f32.mrb[0].mxu0
        %v1777 = vpop.f32.mrb[0].mxu0
        %v1778 = vadd.f32 0.0, %v1777
        %v1779 = vpop.f32.mrb[0].mxu0
        %1780 = vmatprep.mubr.bf16.mxu0 0
        %1781 = vmatmul.mubr.bf16.gmra.mrb[0].mxu0 %v1681
        %v1782 = vpop.f32.mrb[0].mxu0
        %v1783 = vadd.f32 0.0, %v1782
        %v1784 = vpop.f32.mrb[0].mxu0
        %v1785 = vpop.f32.mrb[0].mxu0
        %v1786 = vadd.f32 0.0, %v1785
        %v1787 = vpop.f32.mrb[0].mxu0
        %1788 = vmatprep.mubr.bf16.mxu0 0
        %1789 = vmatmul.mubr.bf16.gmra.mrb[0].mxu0 %v1684
        %v1790 = vpop.f32.mrb[0].mxu0
        %v1791 = vadd.f32 0.0, %v1790
        %v1792 = vpop.f32.mrb[0].mxu0
        %v1793 = vpop.f32.mrb[0].mxu0
        %v1794 = vadd.f32 0.0, %v1793
        %v1795 = vpop.f32.mrb[0].mxu0
        %1796 = vmatprep.mubr.bf16.mxu0 0
        %1797 = vmatmul.mubr.bf16.gmra.mrb[0].mxu0 %v1687
        %v1798 = vpop.f32.mrb[0].mxu0
        %v1799 = vadd.f32 0.0, %v1798
        %v1800 = vpop.f32.mrb[0].mxu0
        %v1801 = vpop.f32.mrb[0].mxu0
        %v1802 = vadd.f32 0.0, %v1801
        %v1803 = vpop.f32.mrb[0].mxu0
        %1804 = vmatprep.mubr.bf16.mxu0 0
        %1805 = vmatmul.mubr.bf16.gmra.mrb[0].mxu0 %v1690
        %v1806 = vpop.f32.mrb[0].mxu0
        %v1807 = vadd.f32 0.0, %v1806
        %v1808 = vpop.f32.mrb[0].mxu0
        %v1809 = vpop.f32.mrb[0].mxu0
        %v1810 = vadd.f32 0.0, %v1809
        %v1811 = vpop.f32.mrb[0].mxu0
        %1812 = vdwg.mxu0
        %v1813 = vsel %vm750, %v1751, -1e+30
        %v1814 = vsel %vm751, %v1754, -1e+30
        %v1815 = vsel %vm752, %v1759, -1e+30
        %v1816 = vsel %vm753, %v1762, -1e+30
        %v1817 = vsel %vm754, %v1767, -1e+30
        %v1818 = vsel %vm755, %v1770, -1e+30
        %v1819 = vsel %vm756, %v1775, -1e+30
        %v1820 = vsel %vm757, %v1778, -1e+30
        %v1821 = vsel %vm758, %v1783, -1e+30
        %v1822 = vsel %vm759, %v1786, -1e+30
        %v1823 = vsel %vm760, %v1791, -1e+30
        %v1824 = vsel %vm761, %v1794, -1e+30
        %v1825 = vsel %vm762, %v1799, -1e+30
        %v1826 = vsel %vm763, %v1802, -1e+30
        %v1827 = vsel %vm764, %v1807, -1e+30
        %v1828 = vsel %vm765, %v1810, -1e+30
        %1829 = vmax.xlane.f32.xlu0 %v1813
        %v1830 = vpop.xlane.xlu0 %1829
        %1831 = vmax.xlane.f32.xlu0 %v1814
        %v1832 = vpop.xlane.xlu0 %1831
        %1833 = vmax.xlane.f32.xlu0 %v1815
        %v1834 = vpop.xlane.xlu0 %1833
        %1835 = vmax.xlane.f32.xlu0 %v1816
        %v1836 = vpop.xlane.xlu0 %1835
        %1837 = vmax.xlane.f32.xlu0 %v1817
        %v1838 = vpop.xlane.xlu0 %1837
        %1839 = vmax.xlane.f32.xlu0 %v1818
        %v1840 = vpop.xlane.xlu0 %1839
        %1841 = vmax.xlane.f32.xlu0 %v1819
        %v1842 = vpop.xlane.xlu0 %1841
        %1843 = vmax.xlane.f32.xlu0 %v1820
        %v1844 = vpop.xlane.xlu0 %1843
        %1845 = vmax.xlane.f32.xlu0 %v1821
        %v1846 = vpop.xlane.xlu0 %1845
        %1847 = vmax.xlane.f32.xlu0 %v1822
        %v1848 = vpop.xlane.xlu0 %1847
        %1849 = vmax.xlane.f32.xlu0 %v1823
        %v1850 = vpop.xlane.xlu0 %1849
        %1851 = vmax.xlane.f32.xlu0 %v1824
        %v1852 = vpop.xlane.xlu0 %1851
        %1853 = vmax.xlane.f32.xlu0 %v1825
        %v1854 = vpop.xlane.xlu0 %1853
        %1855 = vmax.xlane.f32.xlu0 %v1826
        %v1856 = vpop.xlane.xlu0 %1855
        %1857 = vmax.xlane.f32.xlu0 %v1827
        %v1858 = vpop.xlane.xlu0 %1857
        %1859 = vmax.xlane.f32.xlu0 %v1828
        %v1860 = vpop.xlane.xlu0 %1859
        %v1861 = vsub.f32 %v1813, %v1830
        %v1862 = vsub.f32 %v1814, %v1832
        %v1863 = vsub.f32 %v1815, %v1834
        %v1864 = vsub.f32 %v1816, %v1836
        %v1865 = vsub.f32 %v1817, %v1838
        %v1866 = vsub.f32 %v1818, %v1840
        %v1867 = vsub.f32 %v1819, %v1842
        %v1868 = vsub.f32 %v1820, %v1844
        %v1869 = vsub.f32 %v1821, %v1846
        %v1870 = vsub.f32 %v1822, %v1848
        %v1871 = vsub.f32 %v1823, %v1850
        %v1872 = vsub.f32 %v1824, %v1852
        %v1873 = vsub.f32 %v1825, %v1854
        %v1874 = vsub.f32 %v1826, %v1856
        %v1875 = vsub.f32 %v1827, %v1858
        %v1876 = vsub.f32 %v1828, %v1860
        %v1877 = vmul.f32 %v1861, 1.442695
        %v1878 = vpow.pop %v1877
        %v1879 = vmul.f32 %v1862, 1.442695
        %v1880 = vpow.pop %v1879
        %v1881 = vmul.f32 %v1863, 1.442695
        %v1882 = vpow.pop %v1881
        %v1883 = vmul.f32 %v1864, 1.442695
        %v1884 = vpow.pop %v1883
        %v1885 = vmul.f32 %v1865, 1.442695
        %v1886 = vpow.pop %v1885
        %v1887 = vmul.f32 %v1866, 1.442695
        %v1888 = vpow.pop %v1887
        %v1889 = vmul.f32 %v1867, 1.442695
        %v1890 = vpow.pop %v1889
        %v1891 = vmul.f32 %v1868, 1.442695
        %v1892 = vpow.pop %v1891
        %v1893 = vmul.f32 %v1869, 1.442695
        %v1894 = vpow.pop %v1893
        %v1895 = vmul.f32 %v1870, 1.442695
        %v1896 = vpow.pop %v1895
        %v1897 = vmul.f32 %v1871, 1.442695
        %v1898 = vpow.pop %v1897
        %v1899 = vmul.f32 %v1872, 1.442695
        %v1900 = vpow.pop %v1899
        %v1901 = vmul.f32 %v1873, 1.442695
        %v1902 = vpow.pop %v1901
        %v1903 = vmul.f32 %v1874, 1.442695
        %v1904 = vpow.pop %v1903
        %v1905 = vmul.f32 %v1875, 1.442695
        %v1906 = vpow.pop %v1905
        %v1907 = vmul.f32 %v1876, 1.442695
        %v1908 = vpow.pop %v1907
        %1909 = vadd.xlane.f32.xlu0 %v1878
        %v1910 = vpop.xlane.xlu0 %1909
        %1911 = vadd.xlane.f32.xlu0 %v1880
        %v1912 = vpop.xlane.xlu0 %1911
        %1913 = vadd.xlane.f32.xlu0 %v1882
        %v1914 = vpop.xlane.xlu0 %1913
        %1915 = vadd.xlane.f32.xlu0 %v1884
        %v1916 = vpop.xlane.xlu0 %1915
        %1917 = vadd.xlane.f32.xlu0 %v1886
        %v1918 = vpop.xlane.xlu0 %1917
        %1919 = vadd.xlane.f32.xlu0 %v1888
        %v1920 = vpop.xlane.xlu0 %1919
        %1921 = vadd.xlane.f32.xlu0 %v1890
        %v1922 = vpop.xlane.xlu0 %1921
        %1923 = vadd.xlane.f32.xlu0 %v1892
        %v1924 = vpop.xlane.xlu0 %1923
        %1925 = vadd.xlane.f32.xlu0 %v1894
        %v1926 = vpop.xlane.xlu0 %1925
        %1927 = vadd.xlane.f32.xlu0 %v1896
        %v1928 = vpop.xlane.xlu0 %1927
        %1929 = vadd.xlane.f32.xlu0 %v1898
        %v1930 = vpop.xlane.xlu0 %1929
        %1931 = vadd.xlane.f32.xlu0 %v1900
        %v1932 = vpop.xlane.xlu0 %1931
        %1933 = vadd.xlane.f32.xlu0 %v1902
        %v1934 = vpop.xlane.xlu0 %1933
        %1935 = vadd.xlane.f32.xlu0 %v1904
        %v1936 = vpop.xlane.xlu0 %1935
        %1937 = vadd.xlane.f32.xlu0 %v1906
        %v1938 = vpop.xlane.xlu0 %1937
        %1939 = vadd.xlane.f32.xlu0 %v1908
        %v1940 = vpop.xlane.xlu0 %1939
        %v1941 = vrcp.pop %v1910
        %v1942 = vrcp.pop %v1912
        %v1943 = vrcp.pop %v1914
        %v1944 = vrcp.pop %v1916
        %v1945 = vrcp.pop %v1918
        %v1946 = vrcp.pop %v1920
        %v1947 = vrcp.pop %v1922
        %v1948 = vrcp.pop %v1924
        %v1949 = vrcp.pop %v1926
        %v1950 = vrcp.pop %v1928
        %v1951 = vrcp.pop %v1930
        %v1952 = vrcp.pop %v1932
        %v1953 = vrcp.pop %v1934
        %v1954 = vrcp.pop %v1936
        %v1955 = vrcp.pop %v1938
        %v1956 = vrcp.pop %v1940
        %v1957 = vmul.f32 %v1878, %v1941
        %v1958 = vmul.f32 %v1880, %v1942
        %v1959 = vmul.f32 %v1882, %v1943
        %v1960 = vmul.f32 %v1884, %v1944
        %v1961 = vmul.f32 %v1886, %v1945
        %v1962 = vmul.f32 %v1888, %v1946
        %v1963 = vmul.f32 %v1890, %v1947
        %v1964 = vmul.f32 %v1892, %v1948
        %v1965 = vmul.f32 %v1894, %v1949
        %v1966 = vmul.f32 %v1896, %v1950
        %v1967 = vmul.f32 %v1898, %v1951
        %v1968 = vmul.f32 %v1900, %v1952
        %v1969 = vmul.f32 %v1902, %v1953
        %v1970 = vmul.f32 %v1904, %v1954
        %v1971 = vmul.f32 %v1906, %v1955
        %v1972 = vmul.f32 %v1908, %v1956
        %v1973 = vpack.c.bf16 %v1958, %v1957
        %v1974 = vpack.c.bf16 %v1960, %v1959
        %v1975 = vpack.c.bf16 %v1962, %v1961
        %v1976 = vpack.c.bf16 %v1964, %v1963
        %v1977 = vpack.c.bf16 %v1966, %v1965
        %v1978 = vpack.c.bf16 %v1968, %v1967
        %v1979 = vpack.c.bf16 %v1970, %v1969
        %v1980 = vpack.c.bf16 %v1972, %v1971
        %1989 = vrot.lane.b32.xlu0 %v1193, 96
        %v1990 = vpop.permute.xlu0 %1989
        %1991 = vrot.lane.b32.xlu0 %v1194, 96
        %v1992 = vpop.permute.xlu0 %1991
        %1993 = vrot.lane.b32.xlu0 %v1195, 96
        %v1994 = vpop.permute.xlu0 %1993
        %1995 = vrot.lane.b32.xlu0 %v1196, 96
        %v1996 = vpop.permute.xlu0 %1995
        %1997 = vrot.lane.b32.xlu0 %v1197, 96
        %v1998 = vpop.permute.xlu0 %1997
        %1999 = vrot.lane.b32.xlu0 %v1198, 96
        %v2000 = vpop.permute.xlu0 %1999
        %2001 = vrot.lane.b32.xlu0 %v1199, 96
        %v2002 = vpop.permute.xlu0 %2001
        %2003 = vrot.lane.b32.xlu0 %v1200, 96
        %v2004 = vpop.permute.xlu0 %2003
        %2013 = vmatprep.subr.bf16.mxu0 0
        %2014 = vmatpush1.bf16.msra.mxu0 %v1990
        %2015 = vmatprep.subr.bf16.mxu0 0
        %2016 = vmatpush1.bf16.msra.mxu0 %v1992
        %2017 = vmatprep.subr.bf16.mxu0 0
        %2018 = vmatpush1.bf16.msra.mxu0 %v1994
        %2019 = vmatprep.subr.bf16.mxu0 0
        %2020 = vmatpush1.bf16.msra.mxu0 %v1996
        %2021 = vmatprep.subr.bf16.mxu0 0
        %2022 = vmatpush1.bf16.msra.mxu0 %v1998
        %2023 = vmatprep.subr.bf16.mxu0 0
        %2024 = vmatpush1.bf16.msra.mxu0 %v2000
        %2025 = vmatprep.subr.bf16.mxu0 0
        %2026 = vmatpush1.bf16.msra.mxu0 %v2002
        %2027 = vmatprep.subr.bf16.mxu0 0
        %2028 = vmatpush1.bf16.msra.mxu0 %v2004
        %2029 = vmatprep.subr.bf16.mxu0 0
        %2030 = vmatpush1.bf16.msra.mxu0 0
        %2031 = vmatprep.subr.bf16.mxu0 0
        %2032 = vmatpush1.bf16.msra.mxu0 0
        %2033 = vmatprep.subr.bf16.mxu0 0
        %2034 = vmatpush1.bf16.msra.mxu0 0
        %2035 = vmatprep.subr.bf16.mxu0 0
        %2036 = vmatpush1.bf16.msra.mxu0 0
        %2037 = vmatprep.subr.bf16.mxu0 0
        %2038 = vmatpush1.bf16.msra.mxu0 0
        %2039 = vmatprep.subr.bf16.mxu0 0
        %2040 = vmatpush1.bf16.msra.mxu0 0
        %2041 = vmatprep.subr.bf16.mxu0 0
        %2042 = vmatpush1.bf16.msra.mxu0 0
        %2043 = vmatprep.subr.bf16.mxu0 0
        %2044 = vmatpush1.bf16.msra.mxu0 0
        %2045 = vmatprep.mubr.bf16.mxu0 0
        %2046 = vmatmul.mubr.bf16.gmra.mrb[0].mxu0 %v1973
        %v2047 = vpop.f32.mrb[0].mxu0
        %v2048 = vadd.f32 0.0, %v2047
        %v2049 = vpop.f32.mrb[0].mxu0
        %v2050 = vpop.f32.mrb[0].mxu0
        %v2051 = vadd.f32 0.0, %v2050
        %v2052 = vpop.f32.mrb[0].mxu0
        %2053 = vmatprep.mubr.bf16.mxu0 0
        %2054 = vmatmul.mubr.bf16.gmra.mrb[0].mxu0 %v1974
        %v2055 = vpop.f32.mrb[0].mxu0
        %v2056 = vadd.f32 0.0, %v2055
        %v2057 = vpop.f32.mrb[0].mxu0
        %v2058 = vpop.f32.mrb[0].mxu0
        %v2059 = vadd.f32 0.0, %v2058
        %v2060 = vpop.f32.mrb[0].mxu0
        %2061 = vmatprep.mubr.bf16.mxu0 0
        %2062 = vmatmul.mubr.bf16.gmra.mrb[0].mxu0 %v1975
        %v2063 = vpop.f32.mrb[0].mxu0
        %v2064 = vadd.f32 0.0, %v2063
        %v2065 = vpop.f32.mrb[0].mxu0
        %v2066 = vpop.f32.mrb[0].mxu0
        %v2067 = vadd.f32 0.0, %v2066
        %v2068 = vpop.f32.mrb[0].mxu0
        %2069 = vmatprep.mubr.bf16.mxu0 0
        %2070 = vmatmul.mubr.bf16.gmra.mrb[0].mxu0 %v1976
        %v2071 = vpop.f32.mrb[0].mxu0
        %v2072 = vadd.f32 0.0, %v2071
        %v2073 = vpop.f32.mrb[0].mxu0
        %v2074 = vpop.f32.mrb[0].mxu0
        %v2075 = vadd.f32 0.0, %v2074
        %v2076 = vpop.f32.mrb[0].mxu0
        %2077 = vmatprep.mubr.bf16.mxu0 0
        %2078 = vmatmul.mubr.bf16.gmra.mrb[0].mxu0 %v1977
        %v2079 = vpop.f32.mrb[0].mxu0
        %v2080 = vadd.f32 0.0, %v2079
        %v2081 = vpop.f32.mrb[0].mxu0
        %v2082 = vpop.f32.mrb[0].mxu0
        %v2083 = vadd.f32 0.0, %v2082
        %v2084 = vpop.f32.mrb[0].mxu0
        %2085 = vmatprep.mubr.bf16.mxu0 0
        %2086 = vmatmul.mubr.bf16.gmra.mrb[0].mxu0 %v1978
        %v2087 = vpop.f32.mrb[0].mxu0
        %v2088 = vadd.f32 0.0, %v2087
        %v2089 = vpop.f32.mrb[0].mxu0
        %v2090 = vpop.f32.mrb[0].mxu0
        %v2091 = vadd.f32 0.0, %v2090
        %v2092 = vpop.f32.mrb[0].mxu0
        %2093 = vmatprep.mubr.bf16.mxu0 0
        %2094 = vmatmul.mubr.bf16.gmra.mrb[0].mxu0 %v1979
        %v2095 = vpop.f32.mrb[0].mxu0
        %v2096 = vadd.f32 0.0, %v2095
        %v2097 = vpop.f32.mrb[0].mxu0
        %v2098 = vpop.f32.mrb[0].mxu0
        %v2099 = vadd.f32 0.0, %v2098
        %v2100 = vpop.f32.mrb[0].mxu0
        %2101 = vmatprep.mubr.bf16.mxu0 0
        %2102 = vmatmul.mubr.bf16.gmra.mrb[0].mxu0 %v1980
        %v2103 = vpop.f32.mrb[0].mxu0
        %v2104 = vadd.f32 0.0, %v2103
        %v2105 = vpop.f32.mrb[0].mxu0
        %v2106 = vpop.f32.mrb[0].mxu0
        %v2107 = vadd.f32 0.0, %v2106
        %v2108 = vpop.f32.mrb[0].mxu0
        %2109 = vdwg.mxu0
        %v2110 = vpack.c.bf16 %v2051, %v2048
        %v2111 = vpack.c.bf16 %v2059, %v2056
        %v2112 = vpack.c.bf16 %v2067, %v2064
        %v2113 = vpack.c.bf16 %v2075, %v2072
        %v2114 = vpack.c.bf16 %v2083, %v2080
        %v2115 = vpack.c.bf16 %v2091, %v2088
        %v2116 = vpack.c.bf16 %v2099, %v2096
        %v2117 = vpack.c.bf16 %v2107, %v2104
        %v2122 = vunpack.c.l.b16 %v1165
        %v2123 = vunpack.c.l.b16 %v1166
        %v2124 = vunpack.c.l.b16 %v1167
        %v2125 = vunpack.c.l.b16 %v1168
        %v2126 = vpack.c.b16 %v2123, %v2122
        %v2127 = vpack.c.b16 %v2125, %v2124
        %v2131 = vsel %vm1201, %v2110, 0
        %v2134 = vsel %vm1201, %v2111, 0
        %v2137 = vsel %vm1201, %v2112, 0
        %v2140 = vsel %vm1201, %v2113, 0
        %v2143 = vsel %vm1201, %v2114, 0
        %v2146 = vsel %vm1201, %v2115, 0
        %v2149 = vsel %vm1201, %v2116, 0
        %v2152 = vsel %vm1201, %v2117, 0
        %2154 = vmatprep.subr.bf16.mxu0 0
        %2155 = vmatpush1.bf16.msra.mxu0 %v2126
        %2156 = vmatprep.subr.bf16.mxu0 0
        %2157 = vmatpush1.bf16.msra.mxu0 %v2127
        %2158 = vmatprep.subr.bf16.mxu0 0
        %2159 = vmatpush1.bf16.msra.mxu0 0
        %2160 = vmatprep.subr.bf16.mxu0 0
        %2161 = vmatpush1.bf16.msra.mxu0 0
        %2162 = vmatprep.subr.bf16.mxu0 0
        %2163 = vmatpush1.bf16.msra.mxu0 0
        %2164 = vmatprep.subr.bf16.mxu0 0
        %2165 = vmatpush1.bf16.msra.mxu0 0
        %2166 = vmatprep.subr.bf16.mxu0 0
        %2167 = vmatpush1.bf16.msra.mxu0 0
        %2168 = vmatprep.subr.bf16.mxu0 0
        %2169 = vmatpush1.bf16.msra.mxu0 0
        %2170 = vmatprep.subr.bf16.mxu0 0
        %2171 = vmatpush1.bf16.msra.mxu0 0
        %2172 = vmatprep.subr.bf16.mxu0 0
        %2173 = vmatpush1.bf16.msra.mxu0 0
        %2174 = vmatprep.subr.bf16.mxu0 0
        %2175 = vmatpush1.bf16.msra.mxu0 0
        %2176 = vmatprep.subr.bf16.mxu0 0
        %2177 = vmatpush1.bf16.msra.mxu0 0
        %2178 = vmatprep.subr.bf16.mxu0 0
        %2179 = vmatpush1.bf16.msra.mxu0 0
        %2180 = vmatprep.subr.bf16.mxu0 0
        %2181 = vmatpush1.bf16.msra.mxu0 0
        %2182 = vmatprep.subr.bf16.mxu0 0
        %2183 = vmatpush1.bf16.msra.mxu0 0
        %2184 = vmatprep.subr.bf16.mxu0 0
        %2185 = vmatpush1.bf16.msra.mxu0 0
        %2186 = vmatprep.mubr.bf16.mxu0 0
        %2187 = vmatmul.mubr.bf16.gmra.mrb[0].mxu0 %v2131
        %v2188 = vpop.f32.mrb[0].mxu0
        %v2189 = vadd.f32 0.0, %v2188
        %v2190 = vpop.f32.mrb[0].mxu0
        %v2191 = vpop.f32.mrb[0].mxu0
        %v2192 = vadd.f32 0.0, %v2191
        %v2193 = vpop.f32.mrb[0].mxu0
        %2194 = vmatprep.mubr.bf16.mxu0 0
        %2195 = vmatmul.mubr.bf16.gmra.mrb[0].mxu0 %v2134
        %v2196 = vpop.f32.mrb[0].mxu0
        %v2197 = vadd.f32 0.0, %v2196
        %v2198 = vpop.f32.mrb[0].mxu0
        %v2199 = vpop.f32.mrb[0].mxu0
        %v2200 = vadd.f32 0.0, %v2199
        %v2201 = vpop.f32.mrb[0].mxu0
        %2202 = vmatprep.mubr.bf16.mxu0 0
        %2203 = vmatmul.mubr.bf16.gmra.mrb[0].mxu0 %v2137
        %v2204 = vpop.f32.mrb[0].mxu0
        %v2205 = vadd.f32 0.0, %v2204
        %v2206 = vpop.f32.mrb[0].mxu0
        %v2207 = vpop.f32.mrb[0].mxu0
        %v2208 = vadd.f32 0.0, %v2207
        %v2209 = vpop.f32.mrb[0].mxu0
        %2210 = vmatprep.mubr.bf16.mxu0 0
        %2211 = vmatmul.mubr.bf16.gmra.mrb[0].mxu0 %v2140
        %v2212 = vpop.f32.mrb[0].mxu0
        %v2213 = vadd.f32 0.0, %v2212
        %v2214 = vpop.f32.mrb[0].mxu0
        %v2215 = vpop.f32.mrb[0].mxu0
        %v2216 = vadd.f32 0.0, %v2215
        %v2217 = vpop.f32.mrb[0].mxu0
        %2218 = vmatprep.mubr.bf16.mxu0 0
        %2219 = vmatmul.mubr.bf16.gmra.mrb[0].mxu0 %v2143
        %v2220 = vpop.f32.mrb[0].mxu0
        %v2221 = vadd.f32 0.0, %v2220
        %v2222 = vpop.f32.mrb[0].mxu0
        %v2223 = vpop.f32.mrb[0].mxu0
        %v2224 = vadd.f32 0.0, %v2223
        %v2225 = vpop.f32.mrb[0].mxu0
        %2226 = vmatprep.mubr.bf16.mxu0 0
        %2227 = vmatmul.mubr.bf16.gmra.mrb[0].mxu0 %v2146
        %v2228 = vpop.f32.mrb[0].mxu0
        %v2229 = vadd.f32 0.0, %v2228
        %v2230 = vpop.f32.mrb[0].mxu0
        %v2231 = vpop.f32.mrb[0].mxu0
        %v2232 = vadd.f32 0.0, %v2231
        %v2233 = vpop.f32.mrb[0].mxu0
        %2234 = vmatprep.mubr.bf16.mxu0 0
        %2235 = vmatmul.mubr.bf16.gmra.mrb[0].mxu0 %v2149
        %v2236 = vpop.f32.mrb[0].mxu0
        %v2237 = vadd.f32 0.0, %v2236
        %v2238 = vpop.f32.mrb[0].mxu0
        %v2239 = vpop.f32.mrb[0].mxu0
        %v2240 = vadd.f32 0.0, %v2239
        %v2241 = vpop.f32.mrb[0].mxu0
        %2242 = vmatprep.mubr.bf16.mxu0 0
        %2243 = vmatmul.mubr.bf16.gmra.mrb[0].mxu0 %v2152
        %v2244 = vpop.f32.mrb[0].mxu0
        %v2245 = vadd.f32 0.0, %v2244
        %v2246 = vpop.f32.mrb[0].mxu0
        %v2247 = vpop.f32.mrb[0].mxu0
        %v2248 = vadd.f32 0.0, %v2247
        %v2249 = vpop.f32.mrb[0].mxu0
        %2250 = vdwg.mxu0
        %v2255 = vunpack.c.l.b16 %v1161
        %v2256 = vunpack.c.l.b16 %v1162
        %v2257 = vunpack.c.l.b16 %v1163
        %v2258 = vunpack.c.l.b16 %v1164
        %v2259 = vpack.c.b16 %v2256, %v2255
        %v2260 = vpack.c.b16 %v2258, %v2257
        %v2264 = vsel %vm1201, %v1612, 0
        %v2267 = vsel %vm1201, %v1613, 0
        %v2270 = vsel %vm1201, %v1614, 0
        %v2273 = vsel %vm1201, %v1615, 0
        %v2276 = vsel %vm1201, %v1616, 0
        %v2279 = vsel %vm1201, %v1617, 0
        %v2282 = vsel %vm1201, %v1618, 0
        %v2285 = vsel %vm1201, %v1619, 0
        %2287 = vmatprep.subr.bf16.mxu0 0
        %2288 = vmatpush1.bf16.msra.mxu0 %v2259
        %2289 = vmatprep.subr.bf16.mxu0 0
        %2290 = vmatpush1.bf16.msra.mxu0 %v2260
        %2291 = vmatprep.subr.bf16.mxu0 0
        %2292 = vmatpush1.bf16.msra.mxu0 0
        %2293 = vmatprep.subr.bf16.mxu0 0
        %2294 = vmatpush1.bf16.msra.mxu0 0
        %2295 = vmatprep.subr.bf16.mxu0 0
        %2296 = vmatpush1.bf16.msra.mxu0 0
        %2297 = vmatprep.subr.bf16.mxu0 0
        %2298 = vmatpush1.bf16.msra.mxu0 0
        %2299 = vmatprep.subr.bf16.mxu0 0
        %2300 = vmatpush1.bf16.msra.mxu0 0
        %2301 = vmatprep.subr.bf16.mxu0 0
        %2302 = vmatpush1.bf16.msra.mxu0 0
        %2303 = vmatprep.subr.bf16.mxu0 0
        %2304 = vmatpush1.bf16.msra.mxu0 0
        %2305 = vmatprep.subr.bf16.mxu0 0
        %2306 = vmatpush1.bf16.msra.mxu0 0
        %2307 = vmatprep.subr.bf16.mxu0 0
        %2308 = vmatpush1.bf16.msra.mxu0 0
        %2309 = vmatprep.subr.bf16.mxu0 0
        %2310 = vmatpush1.bf16.msra.mxu0 0
        %2311 = vmatprep.subr.bf16.mxu0 0
        %2312 = vmatpush1.bf16.msra.mxu0 0
        %2313 = vmatprep.subr.bf16.mxu0 0
        %2314 = vmatpush1.bf16.msra.mxu0 0
        %2315 = vmatprep.subr.bf16.mxu0 0
        %2316 = vmatpush1.bf16.msra.mxu0 0
        %2317 = vmatprep.subr.bf16.mxu0 0
        %2318 = vmatpush1.bf16.msra.mxu0 0
        %2319 = vmatprep.mubr.bf16.mxu0 0
        %2320 = vmatmul.mubr.bf16.gmra.mrb[0].mxu0 %v2264
        %v2321 = vpop.f32.mrb[0].mxu0
        %v2322 = vadd.f32 %v2189, %v2321
        %v2323 = vpop.f32.mrb[0].mxu0
        %v2324 = vpop.f32.mrb[0].mxu0
        %v2325 = vadd.f32 %v2192, %v2324
        %v2326 = vpop.f32.mrb[0].mxu0
        %2327 = vmatprep.mubr.bf16.mxu0 0
        %2328 = vmatmul.mubr.bf16.gmra.mrb[0].mxu0 %v2267
        %v2329 = vpop.f32.mrb[0].mxu0
        %v2330 = vadd.f32 %v2197, %v2329
        %v2331 = vpop.f32.mrb[0].mxu0
        %v2332 = vpop.f32.mrb[0].mxu0
        %v2333 = vadd.f32 %v2200, %v2332
        %v2334 = vpop.f32.mrb[0].mxu0
        %2335 = vmatprep.mubr.bf16.mxu0 0
        %2336 = vmatmul.mubr.bf16.gmra.mrb[0].mxu0 %v2270
        %v2337 = vpop.f32.mrb[0].mxu0
        %v2338 = vadd.f32 %v2205, %v2337
        %v2339 = vpop.f32.mrb[0].mxu0
        %v2340 = vpop.f32.mrb[0].mxu0
        %v2341 = vadd.f32 %v2208, %v2340
        %v2342 = vpop.f32.mrb[0].mxu0
        %2343 = vmatprep.mubr.bf16.mxu0 0
        %2344 = vmatmul.mubr.bf16.gmra.mrb[0].mxu0 %v2273
        %v2345 = vpop.f32.mrb[0].mxu0
        %v2346 = vadd.f32 %v2213, %v2345
        %v2347 = vpop.f32.mrb[0].mxu0
        %v2348 = vpop.f32.mrb[0].mxu0
        %v2349 = vadd.f32 %v2216, %v2348
        %v2350 = vpop.f32.mrb[0].mxu0
        %2351 = vmatprep.mubr.bf16.mxu0 0
        %2352 = vmatmul.mubr.bf16.gmra.mrb[0].mxu0 %v2276
        %v2353 = vpop.f32.mrb[0].mxu0
        %v2354 = vadd.f32 %v2221, %v2353
        %v2355 = vpop.f32.mrb[0].mxu0
        %v2356 = vpop.f32.mrb[0].mxu0
        %v2357 = vadd.f32 %v2224, %v2356
        %v2358 = vpop.f32.mrb[0].mxu0
        %2359 = vmatprep.mubr.bf16.mxu0 0
        %2360 = vmatmul.mubr.bf16.gmra.mrb[0].mxu0 %v2279
        %v2361 = vpop.f32.mrb[0].mxu0
        %v2362 = vadd.f32 %v2229, %v2361
        %v2363 = vpop.f32.mrb[0].mxu0
        %v2364 = vpop.f32.mrb[0].mxu0
        %v2365 = vadd.f32 %v2232, %v2364
        %v2366 = vpop.f32.mrb[0].mxu0
        %2367 = vmatprep.mubr.bf16.mxu0 0
        %2368 = vmatmul.mubr.bf16.gmra.mrb[0].mxu0 %v2282
        %v2369 = vpop.f32.mrb[0].mxu0
        %v2370 = vadd.f32 %v2237, %v2369
        %v2371 = vpop.f32.mrb[0].mxu0
        %v2372 = vpop.f32.mrb[0].mxu0
        %v2373 = vadd.f32 %v2240, %v2372
        %v2374 = vpop.f32.mrb[0].mxu0
        %2375 = vmatprep.mubr.bf16.mxu0 0
        %2376 = vmatmul.mubr.bf16.gmra.mrb[0].mxu0 %v2285
        %v2377 = vpop.f32.mrb[0].mxu0
        %v2378 = vadd.f32 %v2245, %v2377
        %v2379 = vpop.f32.mrb[0].mxu0
        %v2380 = vpop.f32.mrb[0].mxu0
        %v2381 = vadd.f32 %v2248, %v2380
        %v2382 = vpop.f32.mrb[0].mxu0
        %2383 = vdwg.mxu0
        %2384 = vrot.lane.b32.xlu0 %v1177, 64
        %v2385 = vpop.permute.xlu0 %2384
        %2386 = vrot.lane.b32.xlu0 %v1178, 64
        %v2387 = vpop.permute.xlu0 %2386
        %2388 = vrot.lane.b32.xlu0 %v1179, 64
        %v2389 = vpop.permute.xlu0 %2388
        %2390 = vrot.lane.b32.xlu0 %v1180, 64
        %v2391 = vpop.permute.xlu0 %2390
        %2392 = vrot.lane.b32.xlu0 %v1181, 64
        %v2393 = vpop.permute.xlu0 %2392
        %2394 = vrot.lane.b32.xlu0 %v1182, 64
        %v2395 = vpop.permute.xlu0 %2394
        %2396 = vrot.lane.b32.xlu0 %v1183, 64
        %v2397 = vpop.permute.xlu0 %2396
        %2398 = vrot.lane.b32.xlu0 %v1184, 64
        %v2399 = vpop.permute.xlu0 %2398
        %2400 = vrot.lane.b32.xlu0 %v1185, 64
        %v2401 = vpop.permute.xlu0 %2400
        %2402 = vrot.lane.b32.xlu0 %v1186, 64
        %v2403 = vpop.permute.xlu0 %2402
        %2404 = vrot.lane.b32.xlu0 %v1187, 64
        %v2405 = vpop.permute.xlu0 %2404
        %2406 = vrot.lane.b32.xlu0 %v1188, 64
        %v2407 = vpop.permute.xlu0 %2406
        %2408 = vrot.lane.b32.xlu0 %v1189, 64
        %v2409 = vpop.permute.xlu0 %2408
        %2410 = vrot.lane.b32.xlu0 %v1190, 64
        %v2411 = vpop.permute.xlu0 %2410
        %2412 = vrot.lane.b32.xlu0 %v1191, 64
        %v2413 = vpop.permute.xlu0 %2412
        %2414 = vrot.lane.b32.xlu0 %v1192, 64
        %v2415 = vpop.permute.xlu0 %2414
        %v2417 = vsel %vm1201, %v2385, 0
        %v2420 = vsel %vm1201, %v2387, 0
        %v2423 = vsel %vm1201, %v2389, 0
        %v2426 = vsel %vm1201, %v2391, 0
        %v2429 = vsel %vm1201, %v2393, 0
        %v2432 = vsel %vm1201, %v2395, 0
        %v2435 = vsel %vm1201, %v2397, 0
        %v2438 = vsel %vm1201, %v2399, 0
        %v2441 = vsel %vm1201, %v2401, 0
        %v2444 = vsel %vm1201, %v2403, 0
        %v2447 = vsel %vm1201, %v2405, 0
        %v2450 = vsel %vm1201, %v2407, 0
        %v2453 = vsel %vm1201, %v2409, 0
        %v2456 = vsel %vm1201, %v2411, 0
        %v2459 = vsel %vm1201, %v2413, 0
        %v2462 = vsel %vm1201, %v2415, 0
        %2464 = vmatprep.subr.bf16.mxu0 0
        %2465 = vmatpush1.bf16.xpose.msra.mxu0 %v2441
        %2466 = vmatprep.subr.bf16.mxu0 0
        %2467 = vmatpush1.bf16.xpose.msra.mxu0 %v2444
        %2468 = vmatprep.subr.bf16.mxu0 0
        %2469 = vmatpush1.bf16.xpose.msra.mxu0 %v2447
        %2470 = vmatprep.subr.bf16.mxu0 0
        %2471 = vmatpush1.bf16.xpose.msra.mxu0 %v2450
        %2472 = vmatprep.subr.bf16.mxu0 0
        %2473 = vmatpush1.bf16.xpose.msra.mxu0 %v2453
        %2474 = vmatprep.subr.bf16.mxu0 0
        %2475 = vmatpush1.bf16.xpose.msra.mxu0 %v2456
        %2476 = vmatprep.subr.bf16.mxu0 0
        %2477 = vmatpush1.bf16.xpose.msra.mxu0 %v2459
        %2478 = vmatprep.subr.bf16.mxu0 0
        %2479 = vmatpush1.bf16.xpose.msra.mxu0 %v2462
        %2480 = vmatprep.subr.bf16.mxu0 0
        %2481 = vmatpush1.bf16.xpose.msra.mxu0 0
        %2482 = vmatprep.subr.bf16.mxu0 0
        %2483 = vmatpush1.bf16.xpose.msra.mxu0 0
        %2484 = vmatprep.subr.bf16.mxu0 0
        %2485 = vmatpush1.bf16.xpose.msra.mxu0 0
        %2486 = vmatprep.subr.bf16.mxu0 0
        %2487 = vmatpush1.bf16.xpose.msra.mxu0 0
        %2488 = vmatprep.subr.bf16.mxu0 0
        %2489 = vmatpush1.bf16.xpose.msra.mxu0 0
        %2490 = vmatprep.subr.bf16.mxu0 0
        %2491 = vmatpush1.bf16.xpose.msra.mxu0 0
        %2492 = vmatprep.subr.bf16.mxu0 0
        %2493 = vmatpush1.bf16.xpose.msra.mxu0 0
        %2494 = vmatprep.subr.bf16.mxu0 0
        %2495 = vmatpush1.bf16.xpose.msra.mxu0 0
        %2496 = vmatprep.mubr.bf16.mxu0 0
        %2497 = vmatmul.mubr.bf16.gmra.mrb[0].mxu0 %v2417
        %v2498 = vpop.f32.mrb[0].mxu0
        %v2499 = vadd.f32 0.0, %v2498
        %v2500 = vpop.f32.mrb[0].mxu0
        %v2501 = vpop.f32.mrb[0].mxu0
        %v2502 = vadd.f32 0.0, %v2501
        %v2503 = vpop.f32.mrb[0].mxu0
        %2504 = vmatprep.mubr.bf16.mxu0 0
        %2505 = vmatmul.mubr.bf16.gmra.mrb[0].mxu0 %v2420
        %v2506 = vpop.f32.mrb[0].mxu0
        %v2507 = vadd.f32 0.0, %v2506
        %v2508 = vpop.f32.mrb[0].mxu0
        %v2509 = vpop.f32.mrb[0].mxu0
        %v2510 = vadd.f32 0.0, %v2509
        %v2511 = vpop.f32.mrb[0].mxu0
        %2512 = vmatprep.mubr.bf16.mxu0 0
        %2513 = vmatmul.mubr.bf16.gmra.mrb[0].mxu0 %v2423
        %v2514 = vpop.f32.mrb[0].mxu0
        %v2515 = vadd.f32 0.0, %v2514
        %v2516 = vpop.f32.mrb[0].mxu0
        %v2517 = vpop.f32.mrb[0].mxu0
        %v2518 = vadd.f32 0.0, %v2517
        %v2519 = vpop.f32.mrb[0].mxu0
        %2520 = vmatprep.mubr.bf16.mxu0 0
        %2521 = vmatmul.mubr.bf16.gmra.mrb[0].mxu0 %v2426
        %v2522 = vpop.f32.mrb[0].mxu0
        %v2523 = vadd.f32 0.0, %v2522
        %v2524 = vpop.f32.mrb[0].mxu0
        %v2525 = vpop.f32.mrb[0].mxu0
        %v2526 = vadd.f32 0.0, %v2525
        %v2527 = vpop.f32.mrb[0].mxu0
        %2528 = vmatprep.mubr.bf16.mxu0 0
        %2529 = vmatmul.mubr.bf16.gmra.mrb[0].mxu0 %v2429
        %v2530 = vpop.f32.mrb[0].mxu0
        %v2531 = vadd.f32 0.0, %v2530
        %v2532 = vpop.f32.mrb[0].mxu0
        %v2533 = vpop.f32.mrb[0].mxu0
        %v2534 = vadd.f32 0.0, %v2533
        %v2535 = vpop.f32.mrb[0].mxu0
        %2536 = vmatprep.mubr.bf16.mxu0 0
        %2537 = vmatmul.mubr.bf16.gmra.mrb[0].mxu0 %v2432
        %v2538 = vpop.f32.mrb[0].mxu0
        %v2539 = vadd.f32 0.0, %v2538
        %v2540 = vpop.f32.mrb[0].mxu0
        %v2541 = vpop.f32.mrb[0].mxu0
        %v2542 = vadd.f32 0.0, %v2541
        %v2543 = vpop.f32.mrb[0].mxu0
        %2544 = vmatprep.mubr.bf16.mxu0 0
        %2545 = vmatmul.mubr.bf16.gmra.mrb[0].mxu0 %v2435
        %v2546 = vpop.f32.mrb[0].mxu0
        %v2547 = vadd.f32 0.0, %v2546
        %v2548 = vpop.f32.mrb[0].mxu0
        %v2549 = vpop.f32.mrb[0].mxu0
        %v2550 = vadd.f32 0.0, %v2549
        %v2551 = vpop.f32.mrb[0].mxu0
        %2552 = vmatprep.mubr.bf16.mxu0 0
        %2553 = vmatmul.mubr.bf16.gmra.mrb[0].mxu0 %v2438
        %v2554 = vpop.f32.mrb[0].mxu0
        %v2555 = vadd.f32 0.0, %v2554
        %v2556 = vpop.f32.mrb[0].mxu0
        %v2557 = vpop.f32.mrb[0].mxu0
        %v2558 = vadd.f32 0.0, %v2557
        %v2559 = vpop.f32.mrb[0].mxu0
        %2560 = vdwg.mxu0
        %v2561 = vsel %vm750, %v2499, -1e+30
        %v2562 = vsel %vm751, %v2502, -1e+30
        %v2563 = vsel %vm752, %v2507, -1e+30
        %v2564 = vsel %vm753, %v2510, -1e+30
        %v2565 = vsel %vm754, %v2515, -1e+30
        %v2566 = vsel %vm755, %v2518, -1e+30
        %v2567 = vsel %vm756, %v2523, -1e+30
        %v2568 = vsel %vm757, %v2526, -1e+30
        %v2569 = vsel %vm758, %v2531, -1e+30
        %v2570 = vsel %vm759, %v2534, -1e+30
        %v2571 = vsel %vm760, %v2539, -1e+30
        %v2572 = vsel %vm761, %v2542, -1e+30
        %v2573 = vsel %vm762, %v2547, -1e+30
        %v2574 = vsel %vm763, %v2550, -1e+30
        %v2575 = vsel %vm764, %v2555, -1e+30
        %v2576 = vsel %vm765, %v2558, -1e+30
        %2577 = vmax.xlane.f32.xlu0 %v2561
        %v2578 = vpop.xlane.xlu0 %2577
        %2579 = vmax.xlane.f32.xlu0 %v2562
        %v2580 = vpop.xlane.xlu0 %2579
        %2581 = vmax.xlane.f32.xlu0 %v2563
        %v2582 = vpop.xlane.xlu0 %2581
        %2583 = vmax.xlane.f32.xlu0 %v2564
        %v2584 = vpop.xlane.xlu0 %2583
        %2585 = vmax.xlane.f32.xlu0 %v2565
        %v2586 = vpop.xlane.xlu0 %2585
        %2587 = vmax.xlane.f32.xlu0 %v2566
        %v2588 = vpop.xlane.xlu0 %2587
        %2589 = vmax.xlane.f32.xlu0 %v2567
        %v2590 = vpop.xlane.xlu0 %2589
        %2591 = vmax.xlane.f32.xlu0 %v2568
        %v2592 = vpop.xlane.xlu0 %2591
        %2593 = vmax.xlane.f32.xlu0 %v2569
        %v2594 = vpop.xlane.xlu0 %2593
        %2595 = vmax.xlane.f32.xlu0 %v2570
        %v2596 = vpop.xlane.xlu0 %2595
        %2597 = vmax.xlane.f32.xlu0 %v2571
        %v2598 = vpop.xlane.xlu0 %2597
        %2599 = vmax.xlane.f32.xlu0 %v2572
        %v2600 = vpop.xlane.xlu0 %2599
        %2601 = vmax.xlane.f32.xlu0 %v2573
        %v2602 = vpop.xlane.xlu0 %2601
        %2603 = vmax.xlane.f32.xlu0 %v2574
        %v2604 = vpop.xlane.xlu0 %2603
        %2605 = vmax.xlane.f32.xlu0 %v2575
        %v2606 = vpop.xlane.xlu0 %2605
        %2607 = vmax.xlane.f32.xlu0 %v2576
        %v2608 = vpop.xlane.xlu0 %2607
        %v2609 = vsub.f32 %v2561, %v2578
        %v2610 = vsub.f32 %v2562, %v2580
        %v2611 = vsub.f32 %v2563, %v2582
        %v2612 = vsub.f32 %v2564, %v2584
        %v2613 = vsub.f32 %v2565, %v2586
        %v2614 = vsub.f32 %v2566, %v2588
        %v2615 = vsub.f32 %v2567, %v2590
        %v2616 = vsub.f32 %v2568, %v2592
        %v2617 = vsub.f32 %v2569, %v2594
        %v2618 = vsub.f32 %v2570, %v2596
        %v2619 = vsub.f32 %v2571, %v2598
        %v2620 = vsub.f32 %v2572, %v2600
        %v2621 = vsub.f32 %v2573, %v2602
        %v2622 = vsub.f32 %v2574, %v2604
        %v2623 = vsub.f32 %v2575, %v2606
        %v2624 = vsub.f32 %v2576, %v2608
        %v2625 = vmul.f32 %v2609, 1.442695
        %v2626 = vpow.pop %v2625
        %v2627 = vmul.f32 %v2610, 1.442695
        %v2628 = vpow.pop %v2627
        %v2629 = vmul.f32 %v2611, 1.442695
        %v2630 = vpow.pop %v2629
        %v2631 = vmul.f32 %v2612, 1.442695
        %v2632 = vpow.pop %v2631
        %v2633 = vmul.f32 %v2613, 1.442695
        %v2634 = vpow.pop %v2633
        %v2635 = vmul.f32 %v2614, 1.442695
        %v2636 = vpow.pop %v2635
        %v2637 = vmul.f32 %v2615, 1.442695
        %v2638 = vpow.pop %v2637
        %v2639 = vmul.f32 %v2616, 1.442695
        %v2640 = vpow.pop %v2639
        %v2641 = vmul.f32 %v2617, 1.442695
        %v2642 = vpow.pop %v2641
        %v2643 = vmul.f32 %v2618, 1.442695
        %v2644 = vpow.pop %v2643
        %v2645 = vmul.f32 %v2619, 1.442695
        %v2646 = vpow.pop %v2645
        %v2647 = vmul.f32 %v2620, 1.442695
        %v2648 = vpow.pop %v2647
        %v2649 = vmul.f32 %v2621, 1.442695
        %v2650 = vpow.pop %v2649
        %v2651 = vmul.f32 %v2622, 1.442695
        %v2652 = vpow.pop %v2651
        %v2653 = vmul.f32 %v2623, 1.442695
        %v2654 = vpow.pop %v2653
        %v2655 = vmul.f32 %v2624, 1.442695
        %v2656 = vpow.pop %v2655
        %2657 = vadd.xlane.f32.xlu0 %v2626
        %v2658 = vpop.xlane.xlu0 %2657
        %2659 = vadd.xlane.f32.xlu0 %v2628
        %v2660 = vpop.xlane.xlu0 %2659
        %2661 = vadd.xlane.f32.xlu0 %v2630
        %v2662 = vpop.xlane.xlu0 %2661
        %2663 = vadd.xlane.f32.xlu0 %v2632
        %v2664 = vpop.xlane.xlu0 %2663
        %2665 = vadd.xlane.f32.xlu0 %v2634
        %v2666 = vpop.xlane.xlu0 %2665
        %2667 = vadd.xlane.f32.xlu0 %v2636
        %v2668 = vpop.xlane.xlu0 %2667
        %2669 = vadd.xlane.f32.xlu0 %v2638
        %v2670 = vpop.xlane.xlu0 %2669
        %2671 = vadd.xlane.f32.xlu0 %v2640
        %v2672 = vpop.xlane.xlu0 %2671
        %2673 = vadd.xlane.f32.xlu0 %v2642
        %v2674 = vpop.xlane.xlu0 %2673
        %2675 = vadd.xlane.f32.xlu0 %v2644
        %v2676 = vpop.xlane.xlu0 %2675
        %2677 = vadd.xlane.f32.xlu0 %v2646
        %v2678 = vpop.xlane.xlu0 %2677
        %2679 = vadd.xlane.f32.xlu0 %v2648
        %v2680 = vpop.xlane.xlu0 %2679
        %2681 = vadd.xlane.f32.xlu0 %v2650
        %v2682 = vpop.xlane.xlu0 %2681
        %2683 = vadd.xlane.f32.xlu0 %v2652
        %v2684 = vpop.xlane.xlu0 %2683
        %2685 = vadd.xlane.f32.xlu0 %v2654
        %v2686 = vpop.xlane.xlu0 %2685
        %2687 = vadd.xlane.f32.xlu0 %v2656
        %v2688 = vpop.xlane.xlu0 %2687
        %v2689 = vrcp.pop %v2658
        %v2690 = vrcp.pop %v2660
        %v2691 = vrcp.pop %v2662
        %v2692 = vrcp.pop %v2664
        %v2693 = vrcp.pop %v2666
        %v2694 = vrcp.pop %v2668
        %v2695 = vrcp.pop %v2670
        %v2696 = vrcp.pop %v2672
        %v2697 = vrcp.pop %v2674
        %v2698 = vrcp.pop %v2676
        %v2699 = vrcp.pop %v2678
        %v2700 = vrcp.pop %v2680
        %v2701 = vrcp.pop %v2682
        %v2702 = vrcp.pop %v2684
        %v2703 = vrcp.pop %v2686
        %v2704 = vrcp.pop %v2688
        %v2705 = vmul.f32 %v2626, %v2689
        %v2706 = vmul.f32 %v2628, %v2690
        %v2707 = vmul.f32 %v2630, %v2691
        %v2708 = vmul.f32 %v2632, %v2692
        %v2709 = vmul.f32 %v2634, %v2693
        %v2710 = vmul.f32 %v2636, %v2694
        %v2711 = vmul.f32 %v2638, %v2695
        %v2712 = vmul.f32 %v2640, %v2696
        %v2713 = vmul.f32 %v2642, %v2697
        %v2714 = vmul.f32 %v2644, %v2698
        %v2715 = vmul.f32 %v2646, %v2699
        %v2716 = vmul.f32 %v2648, %v2700
        %v2717 = vmul.f32 %v2650, %v2701
        %v2718 = vmul.f32 %v2652, %v2702
        %v2719 = vmul.f32 %v2654, %v2703
        %v2720 = vmul.f32 %v2656, %v2704
        %v2721 = vpack.c.bf16 %v2706, %v2705
        %v2722 = vpack.c.bf16 %v2708, %v2707
        %v2723 = vpack.c.bf16 %v2710, %v2709
        %v2724 = vpack.c.bf16 %v2712, %v2711
        %v2725 = vpack.c.bf16 %v2714, %v2713
        %v2726 = vpack.c.bf16 %v2716, %v2715
        %v2727 = vpack.c.bf16 %v2718, %v2717
        %v2728 = vpack.c.bf16 %v2720, %v2719
        %2729 = vrot.lane.b32.xlu0 %v1193, 64
        %v2730 = vpop.permute.xlu0 %2729
        %2731 = vrot.lane.b32.xlu0 %v1194, 64
        %v2732 = vpop.permute.xlu0 %2731
        %2733 = vrot.lane.b32.xlu0 %v1195, 64
        %v2734 = vpop.permute.xlu0 %2733
        %2735 = vrot.lane.b32.xlu0 %v1196, 64
        %v2736 = vpop.permute.xlu0 %2735
        %2737 = vrot.lane.b32.xlu0 %v1197, 64
        %v2738 = vpop.permute.xlu0 %2737
        %2739 = vrot.lane.b32.xlu0 %v1198, 64
        %v2740 = vpop.permute.xlu0 %2739
        %2741 = vrot.lane.b32.xlu0 %v1199, 64
        %v2742 = vpop.permute.xlu0 %2741
        %2743 = vrot.lane.b32.xlu0 %v1200, 64
        %v2744 = vpop.permute.xlu0 %2743
        %2753 = vmatprep.subr.bf16.mxu0 0
        %2754 = vmatpush1.bf16.msra.mxu0 %v2730
        %2755 = vmatprep.subr.bf16.mxu0 0
        %2756 = vmatpush1.bf16.msra.mxu0 %v2732
        %2757 = vmatprep.subr.bf16.mxu0 0
        %2758 = vmatpush1.bf16.msra.mxu0 %v2734
        %2759 = vmatprep.subr.bf16.mxu0 0
        %2760 = vmatpush1.bf16.msra.mxu0 %v2736
        %2761 = vmatprep.subr.bf16.mxu0 0
        %2762 = vmatpush1.bf16.msra.mxu0 %v2738
        %2763 = vmatprep.subr.bf16.mxu0 0
        %2764 = vmatpush1.bf16.msra.mxu0 %v2740
        %2765 = vmatprep.subr.bf16.mxu0 0
        %2766 = vmatpush1.bf16.msra.mxu0 %v2742
        %2767 = vmatprep.subr.bf16.mxu0 0
        %2768 = vmatpush1.bf16.msra.mxu0 %v2744
        %2769 = vmatprep.subr.bf16.mxu0 0
        %2770 = vmatpush1.bf16.msra.mxu0 0
        %2771 = vmatprep.subr.bf16.mxu0 0
        %2772 = vmatpush1.bf16.msra.mxu0 0
        %2773 = vmatprep.subr.bf16.mxu0 0
        %2774 = vmatpush1.bf16.msra.mxu0 0
        %2775 = vmatprep.subr.bf16.mxu0 0
        %2776 = vmatpush1.bf16.msra.mxu0 0
        %2777 = vmatprep.subr.bf16.mxu0 0
        %2778 = vmatpush1.bf16.msra.mxu0 0
        %2779 = vmatprep.subr.bf16.mxu0 0
        %2780 = vmatpush1.bf16.msra.mxu0 0
        %2781 = vmatprep.subr.bf16.mxu0 0
        %2782 = vmatpush1.bf16.msra.mxu0 0
        %2783 = vmatprep.subr.bf16.mxu0 0
        %2784 = vmatpush1.bf16.msra.mxu0 0
        %2785 = vmatprep.mubr.bf16.mxu0 0
        %2786 = vmatmul.mubr.bf16.gmra.mrb[0].mxu0 %v2721
        %v2787 = vpop.f32.mrb[0].mxu0
        %v2788 = vadd.f32 0.0, %v2787
        %v2789 = vpop.f32.mrb[0].mxu0
        %v2790 = vpop.f32.mrb[0].mxu0
        %v2791 = vadd.f32 0.0, %v2790
        %v2792 = vpop.f32.mrb[0].mxu0
        %2793 = vmatprep.mubr.bf16.mxu0 0
        %2794 = vmatmul.mubr.bf16.gmra.mrb[0].mxu0 %v2722
        %v2795 = vpop.f32.mrb[0].mxu0
        %v2796 = vadd.f32 0.0, %v2795
        %v2797 = vpop.f32.mrb[0].mxu0
        %v2798 = vpop.f32.mrb[0].mxu0
        %v2799 = vadd.f32 0.0, %v2798
        %v2800 = vpop.f32.mrb[0].mxu0
        %2801 = vmatprep.mubr.bf16.mxu0 0
        %2802 = vmatmul.mubr.bf16.gmra.mrb[0].mxu0 %v2723
        %v2803 = vpop.f32.mrb[0].mxu0
        %v2804 = vadd.f32 0.0, %v2803
        %v2805 = vpop.f32.mrb[0].mxu0
        %v2806 = vpop.f32.mrb[0].mxu0
        %v2807 = vadd.f32 0.0, %v2806
        %v2808 = vpop.f32.mrb[0].mxu0
        %2809 = vmatprep.mubr.bf16.mxu0 0
        %2810 = vmatmul.mubr.bf16.gmra.mrb[0].mxu0 %v2724
        %v2811 = vpop.f32.mrb[0].mxu0
        %v2812 = vadd.f32 0.0, %v2811
        %v2813 = vpop.f32.mrb[0].mxu0
        %v2814 = vpop.f32.mrb[0].mxu0
        %v2815 = vadd.f32 0.0, %v2814
        %v2816 = vpop.f32.mrb[0].mxu0
        %2817 = vmatprep.mubr.bf16.mxu0 0
        %2818 = vmatmul.mubr.bf16.gmra.mrb[0].mxu0 %v2725
        %v2819 = vpop.f32.mrb[0].mxu0
        %v2820 = vadd.f32 0.0, %v2819
        %v2821 = vpop.f32.mrb[0].mxu0
        %v2822 = vpop.f32.mrb[0].mxu0
        %v2823 = vadd.f32 0.0, %v2822
        %v2824 = vpop.f32.mrb[0].mxu0
        %2825 = vmatprep.mubr.bf16.mxu0 0
        %2826 = vmatmul.mubr.bf16.gmra.mrb[0].mxu0 %v2726
        %v2827 = vpop.f32.mrb[0].mxu0
        %v2828 = vadd.f32 0.0, %v2827
        %v2829 = vpop.f32.mrb[0].mxu0
        %v2830 = vpop.f32.mrb[0].mxu0
        %v2831 = vadd.f32 0.0, %v2830
        %v2832 = vpop.f32.mrb[0].mxu0
        %2833 = vmatprep.mubr.bf16.mxu0 0
        %2834 = vmatmul.mubr.bf16.gmra.mrb[0].mxu0 %v2727
        %v2835 = vpop.f32.mrb[0].mxu0
        %v2836 = vadd.f32 0.0, %v2835
        %v2837 = vpop.f32.mrb[0].mxu0
        %v2838 = vpop.f32.mrb[0].mxu0
        %v2839 = vadd.f32 0.0, %v2838
        %v2840 = vpop.f32.mrb[0].mxu0
        %2841 = vmatprep.mubr.bf16.mxu0 0
        %2842 = vmatmul.mubr.bf16.gmra.mrb[0].mxu0 %v2728
        %v2843 = vpop.f32.mrb[0].mxu0
        %v2844 = vadd.f32 0.0, %v2843
        %v2845 = vpop.f32.mrb[0].mxu0
        %v2846 = vpop.f32.mrb[0].mxu0
        %v2847 = vadd.f32 0.0, %v2846
        %v2848 = vpop.f32.mrb[0].mxu0
        %2849 = vdwg.mxu0
        %v2850 = vpack.c.bf16 %v2791, %v2788
        %v2851 = vpack.c.bf16 %v2799, %v2796
        %v2852 = vpack.c.bf16 %v2807, %v2804
        %v2853 = vpack.c.bf16 %v2815, %v2812
        %v2854 = vpack.c.bf16 %v2823, %v2820
        %v2855 = vpack.c.bf16 %v2831, %v2828
        %v2856 = vpack.c.bf16 %v2839, %v2836
        %v2857 = vpack.c.bf16 %v2847, %v2844
        %v2862 = vunpack.c.l.b16 %v1169
        %v2863 = vunpack.c.l.b16 %v1170
        %v2864 = vunpack.c.l.b16 %v1171
        %v2865 = vunpack.c.l.b16 %v1172
        %v2866 = vpack.c.b16 %v2863, %v2862
        %v2867 = vpack.c.b16 %v2865, %v2864
        %v2871 = vsel %vm1201, %v2850, 0
        %v2874 = vsel %vm1201, %v2851, 0
        %v2877 = vsel %vm1201, %v2852, 0
        %v2880 = vsel %vm1201, %v2853, 0
        %v2883 = vsel %vm1201, %v2854, 0
        %v2886 = vsel %vm1201, %v2855, 0
        %v2889 = vsel %vm1201, %v2856, 0
        %v2892 = vsel %vm1201, %v2857, 0
        %2894 = vmatprep.subr.bf16.mxu0 0
        %2895 = vmatpush1.bf16.msra.mxu0 %v2866
        %2896 = vmatprep.subr.bf16.mxu0 0
        %2897 = vmatpush1.bf16.msra.mxu0 %v2867
        %2898 = vmatprep.subr.bf16.mxu0 0
        %2899 = vmatpush1.bf16.msra.mxu0 0
        %2900 = vmatprep.subr.bf16.mxu0 0
        %2901 = vmatpush1.bf16.msra.mxu0 0
        %2902 = vmatprep.subr.bf16.mxu0 0
        %2903 = vmatpush1.bf16.msra.mxu0 0
        %2904 = vmatprep.subr.bf16.mxu0 0
        %2905 = vmatpush1.bf16.msra.mxu0 0
        %2906 = vmatprep.subr.bf16.mxu0 0
        %2907 = vmatpush1.bf16.msra.mxu0 0
        %2908 = vmatprep.subr.bf16.mxu0 0
        %2909 = vmatpush1.bf16.msra.mxu0 0
        %2910 = vmatprep.subr.bf16.mxu0 0
        %2911 = vmatpush1.bf16.msra.mxu0 0
        %2912 = vmatprep.subr.bf16.mxu0 0
        %2913 = vmatpush1.bf16.msra.mxu0 0
        %2914 = vmatprep.subr.bf16.mxu0 0
        %2915 = vmatpush1.bf16.msra.mxu0 0
        %2916 = vmatprep.subr.bf16.mxu0 0
        %2917 = vmatpush1.bf16.msra.mxu0 0
        %2918 = vmatprep.subr.bf16.mxu0 0
        %2919 = vmatpush1.bf16.msra.mxu0 0
        %2920 = vmatprep.subr.bf16.mxu0 0
        %2921 = vmatpush1.bf16.msra.mxu0 0
        %2922 = vmatprep.subr.bf16.mxu0 0
        %2923 = vmatpush1.bf16.msra.mxu0 0
        %2924 = vmatprep.subr.bf16.mxu0 0
        %2925 = vmatpush1.bf16.msra.mxu0 0
        %2926 = vmatprep.mubr.bf16.mxu0 0
        %2927 = vmatmul.mubr.bf16.gmra.mrb[0].mxu0 %v2871
        %v2928 = vpop.f32.mrb[0].mxu0
        %v2929 = vadd.f32 0.0, %v2928
        %v2930 = vpop.f32.mrb[0].mxu0
        %v2931 = vpop.f32.mrb[0].mxu0
        %v2932 = vadd.f32 0.0, %v2931
        %v2933 = vpop.f32.mrb[0].mxu0
        %2934 = vmatprep.mubr.bf16.mxu0 0
        %2935 = vmatmul.mubr.bf16.gmra.mrb[0].mxu0 %v2874
        %v2936 = vpop.f32.mrb[0].mxu0
        %v2937 = vadd.f32 0.0, %v2936
        %v2938 = vpop.f32.mrb[0].mxu0
        %v2939 = vpop.f32.mrb[0].mxu0
        %v2940 = vadd.f32 0.0, %v2939
        %v2941 = vpop.f32.mrb[0].mxu0
        %2942 = vmatprep.mubr.bf16.mxu0 0
        %2943 = vmatmul.mubr.bf16.gmra.mrb[0].mxu0 %v2877
        %v2944 = vpop.f32.mrb[0].mxu0
        %v2945 = vadd.f32 0.0, %v2944
        %v2946 = vpop.f32.mrb[0].mxu0
        %v2947 = vpop.f32.mrb[0].mxu0
        %v2948 = vadd.f32 0.0, %v2947
        %v2949 = vpop.f32.mrb[0].mxu0
        %2950 = vmatprep.mubr.bf16.mxu0 0
        %2951 = vmatmul.mubr.bf16.gmra.mrb[0].mxu0 %v2880
        %v2952 = vpop.f32.mrb[0].mxu0
        %v2953 = vadd.f32 0.0, %v2952
        %v2954 = vpop.f32.mrb[0].mxu0
        %v2955 = vpop.f32.mrb[0].mxu0
        %v2956 = vadd.f32 0.0, %v2955
        %v2957 = vpop.f32.mrb[0].mxu0
        %2958 = vmatprep.mubr.bf16.mxu0 0
        %2959 = vmatmul.mubr.bf16.gmra.mrb[0].mxu0 %v2883
        %v2960 = vpop.f32.mrb[0].mxu0
        %v2961 = vadd.f32 0.0, %v2960
        %v2962 = vpop.f32.mrb[0].mxu0
        %v2963 = vpop.f32.mrb[0].mxu0
        %v2964 = vadd.f32 0.0, %v2963
        %v2965 = vpop.f32.mrb[0].mxu0
        %2966 = vmatprep.mubr.bf16.mxu0 0
        %2967 = vmatmul.mubr.bf16.gmra.mrb[0].mxu0 %v2886
        %v2968 = vpop.f32.mrb[0].mxu0
        %v2969 = vadd.f32 0.0, %v2968
        %v2970 = vpop.f32.mrb[0].mxu0
        %v2971 = vpop.f32.mrb[0].mxu0
        %v2972 = vadd.f32 0.0, %v2971
        %v2973 = vpop.f32.mrb[0].mxu0
        %2974 = vmatprep.mubr.bf16.mxu0 0
        %2975 = vmatmul.mubr.bf16.gmra.mrb[0].mxu0 %v2889
        %v2976 = vpop.f32.mrb[0].mxu0
        %v2977 = vadd.f32 0.0, %v2976
        %v2978 = vpop.f32.mrb[0].mxu0
        %v2979 = vpop.f32.mrb[0].mxu0
        %v2980 = vadd.f32 0.0, %v2979
        %v2981 = vpop.f32.mrb[0].mxu0
        %2982 = vmatprep.mubr.bf16.mxu0 0
        %2983 = vmatmul.mubr.bf16.gmra.mrb[0].mxu0 %v2892
        %v2984 = vpop.f32.mrb[0].mxu0
        %v2985 = vadd.f32 0.0, %v2984
        %v2986 = vpop.f32.mrb[0].mxu0
        %v2987 = vpop.f32.mrb[0].mxu0
        %v2988 = vadd.f32 0.0, %v2987
        %v2989 = vpop.f32.mrb[0].mxu0
        %2990 = vdwg.mxu0
        %v2991 = vadd.f32 %v2322, %v2929
        %v2992 = vadd.f32 %v2325, %v2932
        %v2993 = vadd.f32 %v2330, %v2937
        %v2994 = vadd.f32 %v2333, %v2940
        %v2995 = vadd.f32 %v2338, %v2945
        %v2996 = vadd.f32 %v2341, %v2948
        %v2997 = vadd.f32 %v2346, %v2953
        %v2998 = vadd.f32 %v2349, %v2956
        %v2999 = vadd.f32 %v2354, %v2961
        %v3000 = vadd.f32 %v2357, %v2964
        %v3001 = vadd.f32 %v2362, %v2969
        %v3002 = vadd.f32 %v2365, %v2972
        %v3003 = vadd.f32 %v2370, %v2977
        %v3004 = vadd.f32 %v2373, %v2980
        %v3005 = vadd.f32 %v2378, %v2985
        %v3006 = vadd.f32 %v2381, %v2988
        %3007 = vrot.lane.b32.xlu0 %v1177, 32
        %v3008 = vpop.permute.xlu0 %3007
        %3009 = vrot.lane.b32.xlu0 %v1178, 32
        %v3010 = vpop.permute.xlu0 %3009
        %3011 = vrot.lane.b32.xlu0 %v1179, 32
        %v3012 = vpop.permute.xlu0 %3011
        %3013 = vrot.lane.b32.xlu0 %v1180, 32
        %v3014 = vpop.permute.xlu0 %3013
        %3015 = vrot.lane.b32.xlu0 %v1181, 32
        %v3016 = vpop.permute.xlu0 %3015
        %3017 = vrot.lane.b32.xlu0 %v1182, 32
        %v3018 = vpop.permute.xlu0 %3017
        %3019 = vrot.lane.b32.xlu0 %v1183, 32
        %v3020 = vpop.permute.xlu0 %3019
        %3021 = vrot.lane.b32.xlu0 %v1184, 32
        %v3022 = vpop.permute.xlu0 %3021
        %3023 = vrot.lane.b32.xlu0 %v1185, 32
        %v3024 = vpop.permute.xlu0 %3023
        %3025 = vrot.lane.b32.xlu0 %v1186, 32
        %v3026 = vpop.permute.xlu0 %3025
        %3027 = vrot.lane.b32.xlu0 %v1187, 32
        %v3028 = vpop.permute.xlu0 %3027
        %3029 = vrot.lane.b32.xlu0 %v1188, 32
        %v3030 = vpop.permute.xlu0 %3029
        %3031 = vrot.lane.b32.xlu0 %v1189, 32
        %v3032 = vpop.permute.xlu0 %3031
        %3033 = vrot.lane.b32.xlu0 %v1190, 32
        %v3034 = vpop.permute.xlu0 %3033
        %3035 = vrot.lane.b32.xlu0 %v1191, 32
        %v3036 = vpop.permute.xlu0 %3035
        %3037 = vrot.lane.b32.xlu0 %v1192, 32
        %v3038 = vpop.permute.xlu0 %3037
        %v3040 = vsel %vm1201, %v3008, 0
        %v3043 = vsel %vm1201, %v3010, 0
        %v3046 = vsel %vm1201, %v3012, 0
        %v3049 = vsel %vm1201, %v3014, 0
        %v3052 = vsel %vm1201, %v3016, 0
        %v3055 = vsel %vm1201, %v3018, 0
        %v3058 = vsel %vm1201, %v3020, 0
        %v3061 = vsel %vm1201, %v3022, 0
        %v3064 = vsel %vm1201, %v3024, 0
        %v3067 = vsel %vm1201, %v3026, 0
        %v3070 = vsel %vm1201, %v3028, 0
        %v3073 = vsel %vm1201, %v3030, 0
        %v3076 = vsel %vm1201, %v3032, 0
        %v3079 = vsel %vm1201, %v3034, 0
        %v3082 = vsel %vm1201, %v3036, 0
        %v3085 = vsel %vm1201, %v3038, 0
        %3087 = vmatprep.subr.bf16.mxu0 0
        %3088 = vmatpush1.bf16.xpose.msra.mxu0 %v3064
        %3089 = vmatprep.subr.bf16.mxu0 0
        %3090 = vmatpush1.bf16.xpose.msra.mxu0 %v3067
        %3091 = vmatprep.subr.bf16.mxu0 0
        %3092 = vmatpush1.bf16.xpose.msra.mxu0 %v3070
        %3093 = vmatprep.subr.bf16.mxu0 0
        %3094 = vmatpush1.bf16.xpose.msra.mxu0 %v3073
        %3095 = vmatprep.subr.bf16.mxu0 0
        %3096 = vmatpush1.bf16.xpose.msra.mxu0 %v3076
        %3097 = vmatprep.subr.bf16.mxu0 0
        %3098 = vmatpush1.bf16.xpose.msra.mxu0 %v3079
        %3099 = vmatprep.subr.bf16.mxu0 0
        %3100 = vmatpush1.bf16.xpose.msra.mxu0 %v3082
        %3101 = vmatprep.subr.bf16.mxu0 0
        %3102 = vmatpush1.bf16.xpose.msra.mxu0 %v3085
        %3103 = vmatprep.subr.bf16.mxu0 0
        %3104 = vmatpush1.bf16.xpose.msra.mxu0 0
        %3105 = vmatprep.subr.bf16.mxu0 0
        %3106 = vmatpush1.bf16.xpose.msra.mxu0 0
        %3107 = vmatprep.subr.bf16.mxu0 0
        %3108 = vmatpush1.bf16.xpose.msra.mxu0 0
        %3109 = vmatprep.subr.bf16.mxu0 0
        %3110 = vmatpush1.bf16.xpose.msra.mxu0 0
        %3111 = vmatprep.subr.bf16.mxu0 0
        %3112 = vmatpush1.bf16.xpose.msra.mxu0 0
        %3113 = vmatprep.subr.bf16.mxu0 0
        %3114 = vmatpush1.bf16.xpose.msra.mxu0 0
        %3115 = vmatprep.subr.bf16.mxu0 0
        %3116 = vmatpush1.bf16.xpose.msra.mxu0 0
        %3117 = vmatprep.subr.bf16.mxu0 0
        %3118 = vmatpush1.bf16.xpose.msra.mxu0 0
        %3119 = vmatprep.mubr.bf16.mxu0 0
        %3120 = vmatmul.mubr.bf16.gmra.mrb[0].mxu0 %v3040
        %v3121 = vpop.f32.mrb[0].mxu0
        %v3122 = vadd.f32 0.0, %v3121
        %v3123 = vpop.f32.mrb[0].mxu0
        %v3124 = vpop.f32.mrb[0].mxu0
        %v3125 = vadd.f32 0.0, %v3124
        %v3126 = vpop.f32.mrb[0].mxu0
        %3127 = vmatprep.mubr.bf16.mxu0 0
        %3128 = vmatmul.mubr.bf16.gmra.mrb[0].mxu0 %v3043
        %v3129 = vpop.f32.mrb[0].mxu0
        %v3130 = vadd.f32 0.0, %v3129
        %v3131 = vpop.f32.mrb[0].mxu0
        %v3132 = vpop.f32.mrb[0].mxu0
        %v3133 = vadd.f32 0.0, %v3132
        %v3134 = vpop.f32.mrb[0].mxu0
        %3135 = vmatprep.mubr.bf16.mxu0 0
        %3136 = vmatmul.mubr.bf16.gmra.mrb[0].mxu0 %v3046
        %v3137 = vpop.f32.mrb[0].mxu0
        %v3138 = vadd.f32 0.0, %v3137
        %v3139 = vpop.f32.mrb[0].mxu0
        %v3140 = vpop.f32.mrb[0].mxu0
        %v3141 = vadd.f32 0.0, %v3140
        %v3142 = vpop.f32.mrb[0].mxu0
        %3143 = vmatprep.mubr.bf16.mxu0 0
        %3144 = vmatmul.mubr.bf16.gmra.mrb[0].mxu0 %v3049
        %v3145 = vpop.f32.mrb[0].mxu0
        %v3146 = vadd.f32 0.0, %v3145
        %v3147 = vpop.f32.mrb[0].mxu0
        %v3148 = vpop.f32.mrb[0].mxu0
        %v3149 = vadd.f32 0.0, %v3148
        %v3150 = vpop.f32.mrb[0].mxu0
        %3151 = vmatprep.mubr.bf16.mxu0 0
        %3152 = vmatmul.mubr.bf16.gmra.mrb[0].mxu0 %v3052
        %v3153 = vpop.f32.mrb[0].mxu0
        %v3154 = vadd.f32 0.0, %v3153
        %v3155 = vpop.f32.mrb[0].mxu0
        %v3156 = vpop.f32.mrb[0].mxu0
        %v3157 = vadd.f32 0.0, %v3156
        %v3158 = vpop.f32.mrb[0].mxu0
        %3159 = vmatprep.mubr.bf16.mxu0 0
        %3160 = vmatmul.mubr.bf16.gmra.mrb[0].mxu0 %v3055
        %v3161 = vpop.f32.mrb[0].mxu0
        %v3162 = vadd.f32 0.0, %v3161
        %v3163 = vpop.f32.mrb[0].mxu0
        %v3164 = vpop.f32.mrb[0].mxu0
        %v3165 = vadd.f32 0.0, %v3164
        %v3166 = vpop.f32.mrb[0].mxu0
        %3167 = vmatprep.mubr.bf16.mxu0 0
        %3168 = vmatmul.mubr.bf16.gmra.mrb[0].mxu0 %v3058
        %v3169 = vpop.f32.mrb[0].mxu0
        %v3170 = vadd.f32 0.0, %v3169
        %v3171 = vpop.f32.mrb[0].mxu0
        %v3172 = vpop.f32.mrb[0].mxu0
        %v3173 = vadd.f32 0.0, %v3172
        %v3174 = vpop.f32.mrb[0].mxu0
        %3175 = vmatprep.mubr.bf16.mxu0 0
        %3176 = vmatmul.mubr.bf16.gmra.mrb[0].mxu0 %v3061
        %v3177 = vpop.f32.mrb[0].mxu0
        %v3178 = vadd.f32 0.0, %v3177
        %v3179 = vpop.f32.mrb[0].mxu0
        %v3180 = vpop.f32.mrb[0].mxu0
        %v3181 = vadd.f32 0.0, %v3180
        %v3182 = vpop.f32.mrb[0].mxu0
        %3183 = vdwg.mxu0
        %v3184 = vsel %vm750, %v3122, -1e+30
        %v3185 = vsel %vm751, %v3125, -1e+30
        %v3186 = vsel %vm752, %v3130, -1e+30
        %v3187 = vsel %vm753, %v3133, -1e+30
        %v3188 = vsel %vm754, %v3138, -1e+30
        %v3189 = vsel %vm755, %v3141, -1e+30
        %v3190 = vsel %vm756, %v3146, -1e+30
        %v3191 = vsel %vm757, %v3149, -1e+30
        %v3192 = vsel %vm758, %v3154, -1e+30
        %v3193 = vsel %vm759, %v3157, -1e+30
        %v3194 = vsel %vm760, %v3162, -1e+30
        %v3195 = vsel %vm761, %v3165, -1e+30
        %v3196 = vsel %vm762, %v3170, -1e+30
        %v3197 = vsel %vm763, %v3173, -1e+30
        %v3198 = vsel %vm764, %v3178, -1e+30
        %v3199 = vsel %vm765, %v3181, -1e+30
        %3200 = vmax.xlane.f32.xlu0 %v3184
        %v3201 = vpop.xlane.xlu0 %3200
        %3202 = vmax.xlane.f32.xlu0 %v3185
        %v3203 = vpop.xlane.xlu0 %3202
        %3204 = vmax.xlane.f32.xlu0 %v3186
        %v3205 = vpop.xlane.xlu0 %3204
        %3206 = vmax.xlane.f32.xlu0 %v3187
        %v3207 = vpop.xlane.xlu0 %3206
        %3208 = vmax.xlane.f32.xlu0 %v3188
        %v3209 = vpop.xlane.xlu0 %3208
        %3210 = vmax.xlane.f32.xlu0 %v3189
        %v3211 = vpop.xlane.xlu0 %3210
        %3212 = vmax.xlane.f32.xlu0 %v3190
        %v3213 = vpop.xlane.xlu0 %3212
        %3214 = vmax.xlane.f32.xlu0 %v3191
        %v3215 = vpop.xlane.xlu0 %3214
        %3216 = vmax.xlane.f32.xlu0 %v3192
        %v3217 = vpop.xlane.xlu0 %3216
        %3218 = vmax.xlane.f32.xlu0 %v3193
        %v3219 = vpop.xlane.xlu0 %3218
        %3220 = vmax.xlane.f32.xlu0 %v3194
        %v3221 = vpop.xlane.xlu0 %3220
        %3222 = vmax.xlane.f32.xlu0 %v3195
        %v3223 = vpop.xlane.xlu0 %3222
        %3224 = vmax.xlane.f32.xlu0 %v3196
        %v3225 = vpop.xlane.xlu0 %3224
        %3226 = vmax.xlane.f32.xlu0 %v3197
        %v3227 = vpop.xlane.xlu0 %3226
        %3228 = vmax.xlane.f32.xlu0 %v3198
        %v3229 = vpop.xlane.xlu0 %3228
        %3230 = vmax.xlane.f32.xlu0 %v3199
        %v3231 = vpop.xlane.xlu0 %3230
        %v3232 = vsub.f32 %v3184, %v3201
        %v3233 = vsub.f32 %v3185, %v3203
        %v3234 = vsub.f32 %v3186, %v3205
        %v3235 = vsub.f32 %v3187, %v3207
        %v3236 = vsub.f32 %v3188, %v3209
        %v3237 = vsub.f32 %v3189, %v3211
        %v3238 = vsub.f32 %v3190, %v3213
        %v3239 = vsub.f32 %v3191, %v3215
        %v3240 = vsub.f32 %v3192, %v3217
        %v3241 = vsub.f32 %v3193, %v3219
        %v3242 = vsub.f32 %v3194, %v3221
        %v3243 = vsub.f32 %v3195, %v3223
        %v3244 = vsub.f32 %v3196, %v3225
        %v3245 = vsub.f32 %v3197, %v3227
        %v3246 = vsub.f32 %v3198, %v3229
        %v3247 = vsub.f32 %v3199, %v3231
        %v3248 = vmul.f32 %v3232, 1.442695
        %v3249 = vpow.pop %v3248
        %v3250 = vmul.f32 %v3233, 1.442695
        %v3251 = vpow.pop %v3250
        %v3252 = vmul.f32 %v3234, 1.442695
        %v3253 = vpow.pop %v3252
        %v3254 = vmul.f32 %v3235, 1.442695
        %v3255 = vpow.pop %v3254
        %v3256 = vmul.f32 %v3236, 1.442695
        %v3257 = vpow.pop %v3256
        %v3258 = vmul.f32 %v3237, 1.442695
        %v3259 = vpow.pop %v3258
        %v3260 = vmul.f32 %v3238, 1.442695
        %v3261 = vpow.pop %v3260
        %v3262 = vmul.f32 %v3239, 1.442695
        %v3263 = vpow.pop %v3262
        %v3264 = vmul.f32 %v3240, 1.442695
        %v3265 = vpow.pop %v3264
        %v3266 = vmul.f32 %v3241, 1.442695
        %v3267 = vpow.pop %v3266
        %v3268 = vmul.f32 %v3242, 1.442695
        %v3269 = vpow.pop %v3268
        %v3270 = vmul.f32 %v3243, 1.442695
        %v3271 = vpow.pop %v3270
        %v3272 = vmul.f32 %v3244, 1.442695
        %v3273 = vpow.pop %v3272
        %v3274 = vmul.f32 %v3245, 1.442695
        %v3275 = vpow.pop %v3274
        %v3276 = vmul.f32 %v3246, 1.442695
        %v3277 = vpow.pop %v3276
        %v3278 = vmul.f32 %v3247, 1.442695
        %v3279 = vpow.pop %v3278
        %3280 = vadd.xlane.f32.xlu0 %v3249
        %v3281 = vpop.xlane.xlu0 %3280
        %3282 = vadd.xlane.f32.xlu0 %v3251
        %v3283 = vpop.xlane.xlu0 %3282
        %3284 = vadd.xlane.f32.xlu0 %v3253
        %v3285 = vpop.xlane.xlu0 %3284
        %3286 = vadd.xlane.f32.xlu0 %v3255
        %v3287 = vpop.xlane.xlu0 %3286
        %3288 = vadd.xlane.f32.xlu0 %v3257
        %v3289 = vpop.xlane.xlu0 %3288
        %3290 = vadd.xlane.f32.xlu0 %v3259
        %v3291 = vpop.xlane.xlu0 %3290
        %3292 = vadd.xlane.f32.xlu0 %v3261
        %v3293 = vpop.xlane.xlu0 %3292
        %3294 = vadd.xlane.f32.xlu0 %v3263
        %v3295 = vpop.xlane.xlu0 %3294
        %3296 = vadd.xlane.f32.xlu0 %v3265
        %v3297 = vpop.xlane.xlu0 %3296
        %3298 = vadd.xlane.f32.xlu0 %v3267
        %v3299 = vpop.xlane.xlu0 %3298
        %3300 = vadd.xlane.f32.xlu0 %v3269
        %v3301 = vpop.xlane.xlu0 %3300
        %3302 = vadd.xlane.f32.xlu0 %v3271
        %v3303 = vpop.xlane.xlu0 %3302
        %3304 = vadd.xlane.f32.xlu0 %v3273
        %v3305 = vpop.xlane.xlu0 %3304
        %3306 = vadd.xlane.f32.xlu0 %v3275
        %v3307 = vpop.xlane.xlu0 %3306
        %3308 = vadd.xlane.f32.xlu0 %v3277
        %v3309 = vpop.xlane.xlu0 %3308
        %3310 = vadd.xlane.f32.xlu0 %v3279
        %v3311 = vpop.xlane.xlu0 %3310
        %v3312 = vrcp.pop %v3281
        %v3313 = vrcp.pop %v3283
        %v3314 = vrcp.pop %v3285
        %v3315 = vrcp.pop %v3287
        %v3316 = vrcp.pop %v3289
        %v3317 = vrcp.pop %v3291
        %v3318 = vrcp.pop %v3293
        %v3319 = vrcp.pop %v3295
        %v3320 = vrcp.pop %v3297
        %v3321 = vrcp.pop %v3299
        %v3322 = vrcp.pop %v3301
        %v3323 = vrcp.pop %v3303
        %v3324 = vrcp.pop %v3305
        %v3325 = vrcp.pop %v3307
        %v3326 = vrcp.pop %v3309
        %v3327 = vrcp.pop %v3311
        %v3328 = vmul.f32 %v3249, %v3312
        %v3329 = vmul.f32 %v3251, %v3313
        %v3330 = vmul.f32 %v3253, %v3314
        %v3331 = vmul.f32 %v3255, %v3315
        %v3332 = vmul.f32 %v3257, %v3316
        %v3333 = vmul.f32 %v3259, %v3317
        %v3334 = vmul.f32 %v3261, %v3318
        %v3335 = vmul.f32 %v3263, %v3319
        %v3336 = vmul.f32 %v3265, %v3320
        %v3337 = vmul.f32 %v3267, %v3321
        %v3338 = vmul.f32 %v3269, %v3322
        %v3339 = vmul.f32 %v3271, %v3323
        %v3340 = vmul.f32 %v3273, %v3324
        %v3341 = vmul.f32 %v3275, %v3325
        %v3342 = vmul.f32 %v3277, %v3326
        %v3343 = vmul.f32 %v3279, %v3327
        %v3344 = vpack.c.bf16 %v3329, %v3328
        %v3345 = vpack.c.bf16 %v3331, %v3330
        %v3346 = vpack.c.bf16 %v3333, %v3332
        %v3347 = vpack.c.bf16 %v3335, %v3334
        %v3348 = vpack.c.bf16 %v3337, %v3336
        %v3349 = vpack.c.bf16 %v3339, %v3338
        %v3350 = vpack.c.bf16 %v3341, %v3340
        %v3351 = vpack.c.bf16 %v3343, %v3342
        %3352 = vrot.lane.b32.xlu0 %v1193, 32
        %v3353 = vpop.permute.xlu0 %3352
        %3354 = vrot.lane.b32.xlu0 %v1194, 32
        %v3355 = vpop.permute.xlu0 %3354
        %3356 = vrot.lane.b32.xlu0 %v1195, 32
        %v3357 = vpop.permute.xlu0 %3356
        %3358 = vrot.lane.b32.xlu0 %v1196, 32
        %v3359 = vpop.permute.xlu0 %3358
        %3360 = vrot.lane.b32.xlu0 %v1197, 32
        %v3361 = vpop.permute.xlu0 %3360
        %3362 = vrot.lane.b32.xlu0 %v1198, 32
        %v3363 = vpop.permute.xlu0 %3362
        %3364 = vrot.lane.b32.xlu0 %v1199, 32
        %v3365 = vpop.permute.xlu0 %3364
        %3366 = vrot.lane.b32.xlu0 %v1200, 32
        %v3367 = vpop.permute.xlu0 %3366
        %3376 = vmatprep.subr.bf16.mxu0 0
        %3377 = vmatpush1.bf16.msra.mxu0 %v3353
        %3378 = vmatprep.subr.bf16.mxu0 0
        %3379 = vmatpush1.bf16.msra.mxu0 %v3355
        %3380 = vmatprep.subr.bf16.mxu0 0
        %3381 = vmatpush1.bf16.msra.mxu0 %v3357
        %3382 = vmatprep.subr.bf16.mxu0 0
        %3383 = vmatpush1.bf16.msra.mxu0 %v3359
        %3384 = vmatprep.subr.bf16.mxu0 0
        %3385 = vmatpush1.bf16.msra.mxu0 %v3361
        %3386 = vmatprep.subr.bf16.mxu0 0
        %3387 = vmatpush1.bf16.msra.mxu0 %v3363
        %3388 = vmatprep.subr.bf16.mxu0 0
        %3389 = vmatpush1.bf16.msra.mxu0 %v3365
        %3390 = vmatprep.subr.bf16.mxu0 0
        %3391 = vmatpush1.bf16.msra.mxu0 %v3367
        %3392 = vmatprep.subr.bf16.mxu0 0
        %3393 = vmatpush1.bf16.msra.mxu0 0
        %3394 = vmatprep.subr.bf16.mxu0 0
        %3395 = vmatpush1.bf16.msra.mxu0 0
        %3396 = vmatprep.subr.bf16.mxu0 0
        %3397 = vmatpush1.bf16.msra.mxu0 0
        %3398 = vmatprep.subr.bf16.mxu0 0
        %3399 = vmatpush1.bf16.msra.mxu0 0
        %3400 = vmatprep.subr.bf16.mxu0 0
        %3401 = vmatpush1.bf16.msra.mxu0 0
        %3402 = vmatprep.subr.bf16.mxu0 0
        %3403 = vmatpush1.bf16.msra.mxu0 0
        %3404 = vmatprep.subr.bf16.mxu0 0
        %3405 = vmatpush1.bf16.msra.mxu0 0
        %3406 = vmatprep.subr.bf16.mxu0 0
        %3407 = vmatpush1.bf16.msra.mxu0 0
        %3408 = vmatprep.mubr.bf16.mxu0 0
        %3409 = vmatmul.mubr.bf16.gmra.mrb[0].mxu0 %v3344
        %v3410 = vpop.f32.mrb[0].mxu0
        %v3411 = vadd.f32 0.0, %v3410
        %v3412 = vpop.f32.mrb[0].mxu0
        %v3413 = vpop.f32.mrb[0].mxu0
        %v3414 = vadd.f32 0.0, %v3413
        %v3415 = vpop.f32.mrb[0].mxu0
        %3416 = vmatprep.mubr.bf16.mxu0 0
        %3417 = vmatmul.mubr.bf16.gmra.mrb[0].mxu0 %v3345
        %v3418 = vpop.f32.mrb[0].mxu0
        %v3419 = vadd.f32 0.0, %v3418
        %v3420 = vpop.f32.mrb[0].mxu0
        %v3421 = vpop.f32.mrb[0].mxu0
        %v3422 = vadd.f32 0.0, %v3421
        %v3423 = vpop.f32.mrb[0].mxu0
        %3424 = vmatprep.mubr.bf16.mxu0 0
        %3425 = vmatmul.mubr.bf16.gmra.mrb[0].mxu0 %v3346
        %v3426 = vpop.f32.mrb[0].mxu0
        %v3427 = vadd.f32 0.0, %v3426
        %v3428 = vpop.f32.mrb[0].mxu0
        %v3429 = vpop.f32.mrb[0].mxu0
        %v3430 = vadd.f32 0.0, %v3429
        %v3431 = vpop.f32.mrb[0].mxu0
        %3432 = vmatprep.mubr.bf16.mxu0 0
        %3433 = vmatmul.mubr.bf16.gmra.mrb[0].mxu0 %v3347
        %v3434 = vpop.f32.mrb[0].mxu0
        %v3435 = vadd.f32 0.0, %v3434
        %v3436 = vpop.f32.mrb[0].mxu0
        %v3437 = vpop.f32.mrb[0].mxu0
        %v3438 = vadd.f32 0.0, %v3437
        %v3439 = vpop.f32.mrb[0].mxu0
        %3440 = vmatprep.mubr.bf16.mxu0 0
        %3441 = vmatmul.mubr.bf16.gmra.mrb[0].mxu0 %v3348
        %v3442 = vpop.f32.mrb[0].mxu0
        %v3443 = vadd.f32 0.0, %v3442
        %v3444 = vpop.f32.mrb[0].mxu0
        %v3445 = vpop.f32.mrb[0].mxu0
        %v3446 = vadd.f32 0.0, %v3445
        %v3447 = vpop.f32.mrb[0].mxu0
        %3448 = vmatprep.mubr.bf16.mxu0 0
        %3449 = vmatmul.mubr.bf16.gmra.mrb[0].mxu0 %v3349
        %v3450 = vpop.f32.mrb[0].mxu0
        %v3451 = vadd.f32 0.0, %v3450
        %v3452 = vpop.f32.mrb[0].mxu0
        %v3453 = vpop.f32.mrb[0].mxu0
        %v3454 = vadd.f32 0.0, %v3453
        %v3455 = vpop.f32.mrb[0].mxu0
        %3456 = vmatprep.mubr.bf16.mxu0 0
        %3457 = vmatmul.mubr.bf16.gmra.mrb[0].mxu0 %v3350
        %v3458 = vpop.f32.mrb[0].mxu0
        %v3459 = vadd.f32 0.0, %v3458
        %v3460 = vpop.f32.mrb[0].mxu0
        %v3461 = vpop.f32.mrb[0].mxu0
        %v3462 = vadd.f32 0.0, %v3461
        %v3463 = vpop.f32.mrb[0].mxu0
        %3464 = vmatprep.mubr.bf16.mxu0 0
        %3465 = vmatmul.mubr.bf16.gmra.mrb[0].mxu0 %v3351
        %v3466 = vpop.f32.mrb[0].mxu0
        %v3467 = vadd.f32 0.0, %v3466
        %v3468 = vpop.f32.mrb[0].mxu0
        %v3469 = vpop.f32.mrb[0].mxu0
        %v3470 = vadd.f32 0.0, %v3469
        %v3471 = vpop.f32.mrb[0].mxu0
        %3472 = vdwg.mxu0
        %v3473 = vpack.c.bf16 %v3414, %v3411
        %v3474 = vpack.c.bf16 %v3422, %v3419
        %v3475 = vpack.c.bf16 %v3430, %v3427
        %v3476 = vpack.c.bf16 %v3438, %v3435
        %v3477 = vpack.c.bf16 %v3446, %v3443
        %v3478 = vpack.c.bf16 %v3454, %v3451
        %v3479 = vpack.c.bf16 %v3462, %v3459
        %v3480 = vpack.c.bf16 %v3470, %v3467
        %v3485 = vunpack.c.l.b16 %v1173
        %v3486 = vunpack.c.l.b16 %v1174
        %v3487 = vunpack.c.l.b16 %v1175
        %v3488 = vunpack.c.l.b16 %v1176
        %v3489 = vpack.c.b16 %v3486, %v3485
        %v3490 = vpack.c.b16 %v3488, %v3487
        %v3494 = vsel %vm1201, %v3473, 0
        %v3497 = vsel %vm1201, %v3474, 0
        %v3500 = vsel %vm1201, %v3475, 0
        %v3503 = vsel %vm1201, %v3476, 0
        %v3506 = vsel %vm1201, %v3477, 0
        %v3509 = vsel %vm1201, %v3478, 0
        %v3512 = vsel %vm1201, %v3479, 0
        %v3515 = vsel %vm1201, %v3480, 0
        %3517 = vmatprep.subr.bf16.mxu0 0
        %3518 = vmatpush1.bf16.msra.mxu0 %v3489
        %3519 = vmatprep.subr.bf16.mxu0 0
        %3520 = vmatpush1.bf16.msra.mxu0 %v3490
        %3521 = vmatprep.subr.bf16.mxu0 0
        %3522 = vmatpush1.bf16.msra.mxu0 0
        %3523 = vmatprep.subr.bf16.mxu0 0
        %3524 = vmatpush1.bf16.msra.mxu0 0
        %3525 = vmatprep.subr.bf16.mxu0 0
        %3526 = vmatpush1.bf16.msra.mxu0 0
        %3527 = vmatprep.subr.bf16.mxu0 0
        %3528 = vmatpush1.bf16.msra.mxu0 0
        %3529 = vmatprep.subr.bf16.mxu0 0
        %3530 = vmatpush1.bf16.msra.mxu0 0
        %3531 = vmatprep.subr.bf16.mxu0 0
        %3532 = vmatpush1.bf16.msra.mxu0 0
        %3533 = vmatprep.subr.bf16.mxu0 0
        %3534 = vmatpush1.bf16.msra.mxu0 0
        %3535 = vmatprep.subr.bf16.mxu0 0
        %3536 = vmatpush1.bf16.msra.mxu0 0
        %3537 = vmatprep.subr.bf16.mxu0 0
        %3538 = vmatpush1.bf16.msra.mxu0 0
        %3539 = vmatprep.subr.bf16.mxu0 0
        %3540 = vmatpush1.bf16.msra.mxu0 0
        %3541 = vmatprep.subr.bf16.mxu0 0
        %3542 = vmatpush1.bf16.msra.mxu0 0
        %3543 = vmatprep.subr.bf16.mxu0 0
        %3544 = vmatpush1.bf16.msra.mxu0 0
        %3545 = vmatprep.subr.bf16.mxu0 0
        %3546 = vmatpush1.bf16.msra.mxu0 0
        %3547 = vmatprep.subr.bf16.mxu0 0
        %3548 = vmatpush1.bf16.msra.mxu0 0
        %3549 = vmatprep.mubr.bf16.mxu0 0
        %3550 = vmatmul.mubr.bf16.gmra.mrb[0].mxu0 %v3494
        %v3551 = vpop.f32.mrb[0].mxu0
        %v3552 = vadd.f32 0.0, %v3551
        %v3553 = vpop.f32.mrb[0].mxu0
        %v3554 = vpop.f32.mrb[0].mxu0
        %v3555 = vadd.f32 0.0, %v3554
        %v3556 = vpop.f32.mrb[0].mxu0
        %3557 = vmatprep.mubr.bf16.mxu0 0
        %3558 = vmatmul.mubr.bf16.gmra.mrb[0].mxu0 %v3497
        %v3559 = vpop.f32.mrb[0].mxu0
        %v3560 = vadd.f32 0.0, %v3559
        %v3561 = vpop.f32.mrb[0].mxu0
        %v3562 = vpop.f32.mrb[0].mxu0
        %v3563 = vadd.f32 0.0, %v3562
        %v3564 = vpop.f32.mrb[0].mxu0
        %3565 = vmatprep.mubr.bf16.mxu0 0
        %3566 = vmatmul.mubr.bf16.gmra.mrb[0].mxu0 %v3500
        %v3567 = vpop.f32.mrb[0].mxu0
        %v3568 = vadd.f32 0.0, %v3567
        %v3569 = vpop.f32.mrb[0].mxu0
        %v3570 = vpop.f32.mrb[0].mxu0
        %v3571 = vadd.f32 0.0, %v3570
        %v3572 = vpop.f32.mrb[0].mxu0
        %3573 = vmatprep.mubr.bf16.mxu0 0
        %3574 = vmatmul.mubr.bf16.gmra.mrb[0].mxu0 %v3503
        %v3575 = vpop.f32.mrb[0].mxu0
        %v3576 = vadd.f32 0.0, %v3575
        %v3577 = vpop.f32.mrb[0].mxu0
        %v3578 = vpop.f32.mrb[0].mxu0
        %v3579 = vadd.f32 0.0, %v3578
        %v3580 = vpop.f32.mrb[0].mxu0
        %3581 = vmatprep.mubr.bf16.mxu0 0
        %3582 = vmatmul.mubr.bf16.gmra.mrb[0].mxu0 %v3506
        %v3583 = vpop.f32.mrb[0].mxu0
        %v3584 = vadd.f32 0.0, %v3583
        %v3585 = vpop.f32.mrb[0].mxu0
        %v3586 = vpop.f32.mrb[0].mxu0
        %v3587 = vadd.f32 0.0, %v3586
        %v3588 = vpop.f32.mrb[0].mxu0
        %3589 = vmatprep.mubr.bf16.mxu0 0
        %3590 = vmatmul.mubr.bf16.gmra.mrb[0].mxu0 %v3509
        %v3591 = vpop.f32.mrb[0].mxu0
        %v3592 = vadd.f32 0.0, %v3591
        %v3593 = vpop.f32.mrb[0].mxu0
        %v3594 = vpop.f32.mrb[0].mxu0
        %v3595 = vadd.f32 0.0, %v3594
        %v3596 = vpop.f32.mrb[0].mxu0
        %3597 = vmatprep.mubr.bf16.mxu0 0
        %3598 = vmatmul.mubr.bf16.gmra.mrb[0].mxu0 %v3512
        %v3599 = vpop.f32.mrb[0].mxu0
        %v3600 = vadd.f32 0.0, %v3599
        %v3601 = vpop.f32.mrb[0].mxu0
        %v3602 = vpop.f32.mrb[0].mxu0
        %v3603 = vadd.f32 0.0, %v3602
        %v3604 = vpop.f32.mrb[0].mxu0
        %3605 = vmatprep.mubr.bf16.mxu0 0
        %3606 = vmatmul.mubr.bf16.gmra.mrb[0].mxu0 %v3515
        %v3607 = vpop.f32.mrb[0].mxu0
        %v3608 = vadd.f32 0.0, %v3607
        %v3609 = vpop.f32.mrb[0].mxu0
        %v3610 = vpop.f32.mrb[0].mxu0
        %v3611 = vadd.f32 0.0, %v3610
        %v3612 = vpop.f32.mrb[0].mxu0
        %3613 = vdwg.mxu0
        %v3614 = vadd.f32 %v2991, %v3552
        %v3615 = vadd.f32 %v2992, %v3555
        %v3616 = vadd.f32 %v2993, %v3560
        %v3617 = vadd.f32 %v2994, %v3563
        %v3618 = vadd.f32 %v2995, %v3568
        %v3619 = vadd.f32 %v2996, %v3571
        %v3620 = vadd.f32 %v2997, %v3576
        %v3621 = vadd.f32 %v2998, %v3579
        %v3622 = vadd.f32 %v2999, %v3584
        %v3623 = vadd.f32 %v3000, %v3587
        %v3624 = vadd.f32 %v3001, %v3592
        %v3625 = vadd.f32 %v3002, %v3595
        %v3626 = vadd.f32 %v3003, %v3600
        %v3627 = vadd.f32 %v3004, %v3603
        %v3628 = vadd.f32 %v3005, %v3608
        %v3629 = vadd.f32 %v3006, %v3611
        %v3630 = vld [vmem:[%s7] sm:$0x1]
        %v3632 = vlaneseq
        %v3633 = vshrl.u32 %v3632, 7
        %v3634 = vsub.s32 0, %v3633
        %v3635 = vrot.slane %v3630, %v3634
        %v3637 = vadd.f32 %v3614, %v3635
        %v3638 = vadd.f32 %v3615, %v3635
        %v3639 = vadd.f32 %v3616, %v3635
        %v3640 = vadd.f32 %v3617, %v3635
        %v3641 = vadd.f32 %v3618, %v3635
        %v3642 = vadd.f32 %v3619, %v3635
        %v3643 = vadd.f32 %v3620, %v3635
        %v3644 = vadd.f32 %v3621, %v3635
        %v3645 = vadd.f32 %v3622, %v3635
        %v3646 = vadd.f32 %v3623, %v3635
        %v3647 = vadd.f32 %v3624, %v3635
        %v3648 = vadd.f32 %v3625, %v3635
        %v3649 = vadd.f32 %v3626, %v3635
        %v3650 = vadd.f32 %v3627, %v3635
        %v3651 = vadd.f32 %v3628, %v3635
        %v3652 = vadd.f32 %v3629, %v3635
        %v3653 = vadd.f32 %v3637, %v599
        %v3654 = vadd.f32 %v3638, %v600
        %v3655 = vadd.f32 %v3639, %v601
        %v3656 = vadd.f32 %v3640, %v602
        %v3657 = vadd.f32 %v3641, %v603
        %v3658 = vadd.f32 %v3642, %v604
        %v3659 = vadd.f32 %v3643, %v605
        %v3660 = vadd.f32 %v3644, %v606
        %v3661 = vadd.f32 %v3645, %v607
        %v3662 = vadd.f32 %v3646, %v608
        %v3663 = vadd.f32 %v3647, %v609
        %v3664 = vadd.f32 %v3648, %v610
        %v3665 = vadd.f32 %v3649, %v611
        %v3666 = vadd.f32 %v3650, %v612
        %v3667 = vadd.f32 %v3651, %v613
        %v3668 = vadd.f32 %v3652, %v614
        %v3669 = vmul.f32 %v3653, %v665
        %v3670 = vmul.f32 %v3654, %v666
        %v3671 = vmul.f32 %v3655, %v667
        %v3672 = vmul.f32 %v3656, %v668
        %v3673 = vmul.f32 %v3657, %v669
        %v3674 = vmul.f32 %v3658, %v670
        %v3675 = vmul.f32 %v3659, %v671
        %v3676 = vmul.f32 %v3660, %v672
        %v3677 = vmul.f32 %v3661, %v673
        %v3678 = vmul.f32 %v3662, %v674
        %v3679 = vmul.f32 %v3663, %v675
        %v3680 = vmul.f32 %v3664, %v676
        %v3681 = vmul.f32 %v3665, %v677
        %v3682 = vmul.f32 %v3666, %v678
        %v3683 = vmul.f32 %v3667, %v679
        %v3684 = vmul.f32 %v3668, %v680
        %v3685 = vmul.f32 %v3669, %v3669
        %v3686 = vmul.f32 %v3670, %v3670
        %v3687 = vmul.f32 %v3671, %v3671
        %v3688 = vmul.f32 %v3672, %v3672
        %v3689 = vmul.f32 %v3673, %v3673
        %v3690 = vmul.f32 %v3674, %v3674
        %v3691 = vmul.f32 %v3675, %v3675
        %v3692 = vmul.f32 %v3676, %v3676
        %v3693 = vmul.f32 %v3677, %v3677
        %v3694 = vmul.f32 %v3678, %v3678
        %v3695 = vmul.f32 %v3679, %v3679
        %v3696 = vmul.f32 %v3680, %v3680
        %v3697 = vmul.f32 %v3681, %v3681
        %v3698 = vmul.f32 %v3682, %v3682
        %v3699 = vmul.f32 %v3683, %v3683
        %v3700 = vmul.f32 %v3684, %v3684
        %v3701 = vadd.f32 %v3669, %v3670
        %v3702 = vadd.f32 %v3701, %v3671
        %v3703 = vadd.f32 %v3702, %v3672
        %v3704 = vadd.f32 %v3703, %v3673
        %v3705 = vadd.f32 %v3704, %v3674
        %v3706 = vadd.f32 %v3705, %v3675
        %v3707 = vadd.f32 %v3706, %v3676
        %v3708 = vadd.f32 %v3707, %v3677
        %v3709 = vadd.f32 %v3708, %v3678
        %v3710 = vadd.f32 %v3709, %v3679
        %v3711 = vadd.f32 %v3710, %v3680
        %v3712 = vadd.f32 %v3711, %v3681
        %v3713 = vadd.f32 %v3712, %v3682
        %v3714 = vadd.f32 %v3713, %v3683
        %v3715 = vadd.f32 %v3714, %v3684
        %v3716 = vrot.slane %v3715, 4
        %v3717 = vadd.f32 %v3715, %v3716
        %v3718 = vrot.slane %v3717, 2
        %v3719 = vadd.f32 %v3717, %v3718
        %v3720 = vrot.slane %v3719, 1
        %v3721 = vadd.f32 %v3719, %v3720
        %v3722 = vadd.f32 %v3685, %v3686
        %v3723 = vadd.f32 %v3722, %v3687
        %v3724 = vadd.f32 %v3723, %v3688
        %v3725 = vadd.f32 %v3724, %v3689
        %v3726 = vadd.f32 %v3725, %v3690
        %v3727 = vadd.f32 %v3726, %v3691
        %v3728 = vadd.f32 %v3727, %v3692
        %v3729 = vadd.f32 %v3728, %v3693
        %v3730 = vadd.f32 %v3729, %v3694
        %v3731 = vadd.f32 %v3730, %v3695
        %v3732 = vadd.f32 %v3731, %v3696
        %v3733 = vadd.f32 %v3732, %v3697
        %v3734 = vadd.f32 %v3733, %v3698
        %v3735 = vadd.f32 %v3734, %v3699
        %v3736 = vadd.f32 %v3735, %v3700
        %v3737 = vrot.slane %v3736, 4
        %v3738 = vadd.f32 %v3736, %v3737
        %v3739 = vrot.slane %v3738, 2
        %v3740 = vadd.f32 %v3738, %v3739
        %v3741 = vrot.slane %v3740, 1
        %v3742 = vadd.f32 %v3740, %v3741
        %v3743 = vstv %s598
        %v3744 = vmul.f32 %v3721, %v3743
        %v3745 = vmul.f32 %v3742, %v3743
        %v3746 = vmul.f32 %v3744, %v3744
        %v3747 = vsub.f32 %v3745, %v3746
        %v3748 = vsub.f32 %v3669, %v3744
        %v3749 = vsub.f32 %v3670, %v3744
        %v3750 = vsub.f32 %v3671, %v3744
        %v3751 = vsub.f32 %v3672, %v3744
        %v3752 = vsub.f32 %v3673, %v3744
        %v3753 = vsub.f32 %v3674, %v3744
        %v3754 = vsub.f32 %v3675, %v3744
        %v3755 = vsub.f32 %v3676, %v3744
        %v3756 = vsub.f32 %v3677, %v3744
        %v3757 = vsub.f32 %v3678, %v3744
        %v3758 = vsub.f32 %v3679, %v3744
        %v3759 = vsub.f32 %v3680, %v3744
        %v3760 = vsub.f32 %v3681, %v3744
        %v3761 = vsub.f32 %v3682, %v3744
        %v3762 = vsub.f32 %v3683, %v3744
        %v3763 = vsub.f32 %v3684, %v3744
        %v3764 = vadd.f32 %v3747, 1e-05
        %v3765 = vrsqrt.pop %v3764
        %v3766 = vmul.f32 %v3748, %v3765
        %v3767 = vmul.f32 %v3749, %v3765
        %v3768 = vmul.f32 %v3750, %v3765
        %v3769 = vmul.f32 %v3751, %v3765
        %v3770 = vmul.f32 %v3752, %v3765
        %v3771 = vmul.f32 %v3753, %v3765
        %v3772 = vmul.f32 %v3754, %v3765
        %v3773 = vmul.f32 %v3755, %v3765
        %v3774 = vmul.f32 %v3756, %v3765
        %v3775 = vmul.f32 %v3757, %v3765
        %v3776 = vmul.f32 %v3758, %v3765
        %v3777 = vmul.f32 %v3759, %v3765
        %v3778 = vmul.f32 %v3760, %v3765
        %v3779 = vmul.f32 %v3761, %v3765
        %v3780 = vmul.f32 %v3762, %v3765
        %v3781 = vmul.f32 %v3763, %v3765
        %v3782 = vld [vmem:[%s8] sm:$0x1]
        %v3784 = vlaneseq
        %v3785 = vshrl.u32 %v3784, 7
        %v3786 = vsub.s32 0, %v3785
        %v3787 = vrot.slane %v3782, %v3786
        %v3789 = vmul.f32 %v3766, %v3787
        %v3790 = vmul.f32 %v3767, %v3787
        %v3791 = vmul.f32 %v3768, %v3787
        %v3792 = vmul.f32 %v3769, %v3787
        %v3793 = vmul.f32 %v3770, %v3787
        %v3794 = vmul.f32 %v3771, %v3787
        %v3795 = vmul.f32 %v3772, %v3787
        %v3796 = vmul.f32 %v3773, %v3787
        %v3797 = vmul.f32 %v3774, %v3787
        %v3798 = vmul.f32 %v3775, %v3787
        %v3799 = vmul.f32 %v3776, %v3787
        %v3800 = vmul.f32 %v3777, %v3787
        %v3801 = vmul.f32 %v3778, %v3787
        %v3802 = vmul.f32 %v3779, %v3787
        %v3803 = vmul.f32 %v3780, %v3787
        %v3804 = vmul.f32 %v3781, %v3787
        %v3805 = vld [vmem:[%s9] sm:$0x1]
        %v3807 = vlaneseq
        %v3808 = vshrl.u32 %v3807, 7
        %v3809 = vsub.s32 0, %v3808
        %v3810 = vrot.slane %v3805, %v3809
        %v3812 = vadd.f32 %v3789, %v3810
        %v3813 = vadd.f32 %v3790, %v3810
        %v3814 = vadd.f32 %v3791, %v3810
        %v3815 = vadd.f32 %v3792, %v3810
        %v3816 = vadd.f32 %v3793, %v3810
        %v3817 = vadd.f32 %v3794, %v3810
        %v3818 = vadd.f32 %v3795, %v3810
        %v3819 = vadd.f32 %v3796, %v3810
        %v3820 = vadd.f32 %v3797, %v3810
        %v3821 = vadd.f32 %v3798, %v3810
        %v3822 = vadd.f32 %v3799, %v3810
        %v3823 = vadd.f32 %v3800, %v3810
        %v3824 = vadd.f32 %v3801, %v3810
        %v3825 = vadd.f32 %v3802, %v3810
        %v3826 = vadd.f32 %v3803, %v3810
        %v3827 = vadd.f32 %v3804, %v3810
        %v3828 = vpack.c.bf16 %v3813, %v3812
        %v3829 = vpack.c.bf16 %v3815, %v3814
        %v3830 = vpack.c.bf16 %v3817, %v3816
        %v3831 = vpack.c.bf16 %v3819, %v3818
        %v3832 = vpack.c.bf16 %v3821, %v3820
        %v3833 = vpack.c.bf16 %v3823, %v3822
        %v3834 = vpack.c.bf16 %v3825, %v3824
        %v3835 = vpack.c.bf16 %v3827, %v3826
        %v3836 = vld [vmem:[#allocation9] sm:$0xff]
        %v3837 = vld [vmem:[#allocation9 + $0x8] sm:$0xff]
        %v3838 = vld [vmem:[#allocation9 + $0x10] sm:$0xff]
        %v3839 = vld [vmem:[#allocation9 + $0x18] sm:$0xff]
        %v3840 = vld [vmem:[#allocation9 + $0x20] sm:$0xff]
        %v3841 = vld [vmem:[#allocation9 + $0x28] sm:$0xff]
        %v3842 = vld [vmem:[#allocation9 + $0x30] sm:$0xff]
        %v3843 = vld [vmem:[#allocation9 + $0x38] sm:$0xff]
        %v3844 = vld [vmem:[#allocation9 + $0x40] sm:$0xff]
        %v3845 = vld [vmem:[#allocation9 + $0x48] sm:$0xff]
        %v3846 = vld [vmem:[#allocation9 + $0x50] sm:$0xff]
        %v3847 = vld [vmem:[#allocation9 + $0x58] sm:$0xff]
        %v3848 = vld [vmem:[#allocation9 + $0x60] sm:$0xff]
        %v3849 = vld [vmem:[#allocation9 + $0x68] sm:$0xff]
        %v3850 = vld [vmem:[#allocation9 + $0x70] sm:$0xff]
        %v3851 = vld [vmem:[#allocation9 + $0x78] sm:$0xff]
        %v3852 = vld [vmem:[%s11] sm:$0x3]
        %v3854 = vlaneseq
        %v3855 = vshrl.u32 %v3854, 7
        %v3856 = vsub.s32 0, %v3855
        %v3857 = vrot.slane %v3852, %v3856
        %v3858 = vlaneseq
        %v3859 = vshrl.u32 %v3858, 7
        %v3860 = vsub.s32 1, %v3859
        %v3861 = vrot.slane %v3852, %v3860
        %v3880 = vunpack.c.l.b16 %v3836
        %v3881 = vunpack.c.h.b16 %v3836
        %v3882 = vunpack.c.l.b16 %v3837
        %v3883 = vunpack.c.h.b16 %v3837
        %v3884 = vunpack.c.l.b16 %v3838
        %v3885 = vunpack.c.h.b16 %v3838
        %v3886 = vunpack.c.l.b16 %v3839
        %v3887 = vunpack.c.h.b16 %v3839
        %v3888 = vunpack.c.l.b16 %v3840
        %v3889 = vunpack.c.h.b16 %v3840
        %v3890 = vunpack.c.l.b16 %v3841
        %v3891 = vunpack.c.h.b16 %v3841
        %v3892 = vunpack.c.l.b16 %v3842
        %v3893 = vunpack.c.h.b16 %v3842
        %v3894 = vunpack.c.l.b16 %v3843
        %v3895 = vunpack.c.h.b16 %v3843
        %v3896 = vunpack.c.l.b16 %v3844
        %v3897 = vunpack.c.h.b16 %v3844
        %v3898 = vunpack.c.l.b16 %v3845
        %v3899 = vunpack.c.h.b16 %v3845
        %v3900 = vunpack.c.l.b16 %v3846
        %v3901 = vunpack.c.h.b16 %v3846
        %v3902 = vunpack.c.l.b16 %v3847
        %v3903 = vunpack.c.h.b16 %v3847
        %v3904 = vunpack.c.l.b16 %v3848
        %v3905 = vunpack.c.h.b16 %v3848
        %v3906 = vunpack.c.l.b16 %v3849
        %v3907 = vunpack.c.h.b16 %v3849
        %v3908 = vunpack.c.l.b16 %v3850
        %v3909 = vunpack.c.h.b16 %v3850
        %v3910 = vunpack.c.l.b16 %v3851
        %v3911 = vunpack.c.h.b16 %v3851
        %v3912 = vpack.c.b16 %v3882, %v3880
        %v3913 = vpack.c.b16 %v3883, %v3881
        %v3914 = vpack.c.b16 %v3886, %v3884
        %v3915 = vpack.c.b16 %v3887, %v3885
        %v3916 = vpack.c.b16 %v3890, %v3888
        %v3917 = vpack.c.b16 %v3891, %v3889
        %v3918 = vpack.c.b16 %v3894, %v3892
        %v3919 = vpack.c.b16 %v3895, %v3893
        %v3920 = vpack.c.b16 %v3898, %v3896
        %v3921 = vpack.c.b16 %v3899, %v3897
        %v3922 = vpack.c.b16 %v3902, %v3900
        %v3923 = vpack.c.b16 %v3903, %v3901
        %v3924 = vpack.c.b16 %v3906, %v3904
        %v3925 = vpack.c.b16 %v3907, %v3905
        %v3926 = vpack.c.b16 %v3910, %v3908
        %v3927 = vpack.c.b16 %v3911, %v3909
        %3944 = vmatprep.subr.bf16.mxu0 %v3913
        %3945 = vmatpush1.bf16.msra.mxu0 %v3912
        %3946 = vmatprep.subr.bf16.mxu0 %v3915
        %3947 = vmatpush1.bf16.msra.mxu0 %v3914
        %3948 = vmatprep.subr.bf16.mxu0 %v3917
        %3949 = vmatpush1.bf16.msra.mxu0 %v3916
        %3950 = vmatprep.subr.bf16.mxu0 %v3919
        %3951 = vmatpush1.bf16.msra.mxu0 %v3918
        %3952 = vmatprep.subr.bf16.mxu0 %v3921
        %3953 = vmatpush1.bf16.msra.mxu0 %v3920
        %3954 = vmatprep.subr.bf16.mxu0 %v3923
        %3955 = vmatpush1.bf16.msra.mxu0 %v3922
        %3956 = vmatprep.subr.bf16.mxu0 %v3925
        %3957 = vmatpush1.bf16.msra.mxu0 %v3924
        %3958 = vmatprep.subr.bf16.mxu0 %v3927
        %3959 = vmatpush1.bf16.msra.mxu0 %v3926
        %3960 = vmatprep.subr.bf16.mxu0 0
        %3961 = vmatpush1.bf16.msra.mxu0 0
        %3962 = vmatprep.subr.bf16.mxu0 0
        %3963 = vmatpush1.bf16.msra.mxu0 0
        %3964 = vmatprep.subr.bf16.mxu0 0
        %3965 = vmatpush1.bf16.msra.mxu0 0
        %3966 = vmatprep.subr.bf16.mxu0 0
        %3967 = vmatpush1.bf16.msra.mxu0 0
        %3968 = vmatprep.subr.bf16.mxu0 0
        %3969 = vmatpush1.bf16.msra.mxu0 0
        %3970 = vmatprep.subr.bf16.mxu0 0
        %3971 = vmatpush1.bf16.msra.mxu0 0
        %3972 = vmatprep.subr.bf16.mxu0 0
        %3973 = vmatpush1.bf16.msra.mxu0 0
        %3974 = vmatprep.subr.bf16.mxu0 0
        %3975 = vmatpush1.bf16.msra.mxu0 0
        %3976 = vmatprep.mubr.bf16.mxu0 0
        %3977 = vmatmul.mubr.bf16.gmra.mrb[0].mxu0 %v3828
        %v3978 = vpop.f32.mrb[0].mxu0
        %v3979 = vadd.f32 %v3857, %v3978
        %v3980 = vpop.f32.mrb[0].mxu0
        %v3981 = vadd.f32 %v3861, %v3980
        %v3982 = vpop.f32.mrb[0].mxu0
        %v3983 = vadd.f32 %v3857, %v3982
        %v3984 = vpop.f32.mrb[0].mxu0
        %v3985 = vadd.f32 %v3861, %v3984
        %3986 = vmatprep.mubr.bf16.mxu0 0
        %3987 = vmatmul.mubr.bf16.gmra.mrb[0].mxu0 %v3829
        %v3988 = vpop.f32.mrb[0].mxu0
        %v3989 = vadd.f32 %v3857, %v3988
        %v3990 = vpop.f32.mrb[0].mxu0
        %v3991 = vadd.f32 %v3861, %v3990
        %v3992 = vpop.f32.mrb[0].mxu0
        %v3993 = vadd.f32 %v3857, %v3992
        %v3994 = vpop.f32.mrb[0].mxu0
        %v3995 = vadd.f32 %v3861, %v3994
        %3996 = vmatprep.mubr.bf16.mxu0 0
        %3997 = vmatmul.mubr.bf16.gmra.mrb[0].mxu0 %v3830
        %v3998 = vpop.f32.mrb[0].mxu0
        %v3999 = vadd.f32 %v3857, %v3998
        %v4000 = vpop.f32.mrb[0].mxu0
        %v4001 = vadd.f32 %v3861, %v4000
        %v4002 = vpop.f32.mrb[0].mxu0
        %v4003 = vadd.f32 %v3857, %v4002
        %v4004 = vpop.f32.mrb[0].mxu0
        %v4005 = vadd.f32 %v3861, %v4004
        %4006 = vmatprep.mubr.bf16.mxu0 0
        %4007 = vmatmul.mubr.bf16.gmra.mrb[0].mxu0 %v3831
        %v4008 = vpop.f32.mrb[0].mxu0
        %v4009 = vadd.f32 %v3857, %v4008
        %v4010 = vpop.f32.mrb[0].mxu0
        %v4011 = vadd.f32 %v3861, %v4010
        %v4012 = vpop.f32.mrb[0].mxu0
        %v4013 = vadd.f32 %v3857, %v4012
        %v4014 = vpop.f32.mrb[0].mxu0
        %v4015 = vadd.f32 %v3861, %v4014
        %4016 = vmatprep.mubr.bf16.mxu0 0
        %4017 = vmatmul.mubr.bf16.gmra.mrb[0].mxu0 %v3832
        %v4018 = vpop.f32.mrb[0].mxu0
        %v4019 = vadd.f32 %v3857, %v4018
        %v4020 = vpop.f32.mrb[0].mxu0
        %v4021 = vadd.f32 %v3861, %v4020
        %v4022 = vpop.f32.mrb[0].mxu0
        %v4023 = vadd.f32 %v3857, %v4022
        %v4024 = vpop.f32.mrb[0].mxu0
        %v4025 = vadd.f32 %v3861, %v4024
        %4026 = vmatprep.mubr.bf16.mxu0 0
        %4027 = vmatmul.mubr.bf16.gmra.mrb[0].mxu0 %v3833
        %v4028 = vpop.f32.mrb[0].mxu0
        %v4029 = vadd.f32 %v3857, %v4028
        %v4030 = vpop.f32.mrb[0].mxu0
        %v4031 = vadd.f32 %v3861, %v4030
        %v4032 = vpop.f32.mrb[0].mxu0
        %v4033 = vadd.f32 %v3857, %v4032
        %v4034 = vpop.f32.mrb[0].mxu0
        %v4035 = vadd.f32 %v3861, %v4034
        %4036 = vmatprep.mubr.bf16.mxu0 0
        %4037 = vmatmul.mubr.bf16.gmra.mrb[0].mxu0 %v3834
        %v4038 = vpop.f32.mrb[0].mxu0
        %v4039 = vadd.f32 %v3857, %v4038
        %v4040 = vpop.f32.mrb[0].mxu0
        %v4041 = vadd.f32 %v3861, %v4040
        %v4042 = vpop.f32.mrb[0].mxu0
        %v4043 = vadd.f32 %v3857, %v4042
        %v4044 = vpop.f32.mrb[0].mxu0
        %v4045 = vadd.f32 %v3861, %v4044
        %4046 = vmatprep.mubr.bf16.mxu0 0
        %4047 = vmatmul.mubr.bf16.gmra.mrb[0].mxu0 %v3835
        %v4048 = vpop.f32.mrb[0].mxu0
        %v4049 = vadd.f32 %v3857, %v4048
        %v4050 = vpop.f32.mrb[0].mxu0
        %v4051 = vadd.f32 %v3861, %v4050
        %v4052 = vpop.f32.mrb[0].mxu0
        %v4053 = vadd.f32 %v3857, %v4052
        %v4054 = vpop.f32.mrb[0].mxu0
        %v4055 = vadd.f32 %v3861, %v4054
        %4056 = vdwg.mxu0
        %v4057 = vmax.f32 %v3979, 0.0
        %v4058 = vmax.f32 %v3981, 0.0
        %v4059 = vmax.f32 %v3983, 0.0
        %v4060 = vmax.f32 %v3985, 0.0
        %v4061 = vmax.f32 %v3989, 0.0
        %v4062 = vmax.f32 %v3991, 0.0
        %v4063 = vmax.f32 %v3993, 0.0
        %v4064 = vmax.f32 %v3995, 0.0
        %v4065 = vmax.f32 %v3999, 0.0
        %v4066 = vmax.f32 %v4001, 0.0
        %v4067 = vmax.f32 %v4003, 0.0
        %v4068 = vmax.f32 %v4005, 0.0
        %v4069 = vmax.f32 %v4009, 0.0
        %v4070 = vmax.f32 %v4011, 0.0
        %v4071 = vmax.f32 %v4013, 0.0
        %v4072 = vmax.f32 %v4015, 0.0
        %v4073 = vmax.f32 %v4019, 0.0
        %v4074 = vmax.f32 %v4021, 0.0
        %v4075 = vmax.f32 %v4023, 0.0
        %v4076 = vmax.f32 %v4025, 0.0
        %v4077 = vmax.f32 %v4029, 0.0
        %v4078 = vmax.f32 %v4031, 0.0
        %v4079 = vmax.f32 %v4033, 0.0
        %v4080 = vmax.f32 %v4035, 0.0
        %v4081 = vmax.f32 %v4039, 0.0
        %v4082 = vmax.f32 %v4041, 0.0
        %v4083 = vmax.f32 %v4043, 0.0
        %v4084 = vmax.f32 %v4045, 0.0
        %v4085 = vmax.f32 %v4049, 0.0
        %v4086 = vmax.f32 %v4051, 0.0
        %v4087 = vmax.f32 %v4053, 0.0
        %v4088 = vmax.f32 %v4055, 0.0
        %v4089 = vpack.c.bf16 %v4059, %v4057
        %v4090 = vpack.c.bf16 %v4060, %v4058
        %v4091 = vpack.c.bf16 %v4063, %v4061
        %v4092 = vpack.c.bf16 %v4064, %v4062
        %v4093 = vpack.c.bf16 %v4067, %v4065
        %v4094 = vpack.c.bf16 %v4068, %v4066
        %v4095 = vpack.c.bf16 %v4071, %v4069
        %v4096 = vpack.c.bf16 %v4072, %v4070
        %v4097 = vpack.c.bf16 %v4075, %v4073
        %v4098 = vpack.c.bf16 %v4076, %v4074
        %v4099 = vpack.c.bf16 %v4079, %v4077
        %v4100 = vpack.c.bf16 %v4080, %v4078
        %v4101 = vpack.c.bf16 %v4083, %v4081
        %v4102 = vpack.c.bf16 %v4084, %v4082
        %v4103 = vpack.c.bf16 %v4087, %v4085
        %v4104 = vpack.c.bf16 %v4088, %v4086
        %v4105 = vld [vmem:[#allocation10] sm:$0xf]
        %v4106 = vld [vmem:[#allocation10 + $0x4] sm:$0xf]
        %v4107 = vld [vmem:[#allocation10 + $0x8] sm:$0xf]
        %v4108 = vld [vmem:[#allocation10 + $0xc] sm:$0xf]
        %v4109 = vld [vmem:[#allocation10 + $0x10] sm:$0xf]
        %v4110 = vld [vmem:[#allocation10 + $0x14] sm:$0xf]
        %v4111 = vld [vmem:[#allocation10 + $0x18] sm:$0xf]
        %v4112 = vld [vmem:[#allocation10 + $0x1c] sm:$0xf]
        %v4113 = vld [vmem:[#allocation10 + $0x20] sm:$0xf]
        %v4114 = vld [vmem:[#allocation10 + $0x24] sm:$0xf]
        %v4115 = vld [vmem:[#allocation10 + $0x28] sm:$0xf]
        %v4116 = vld [vmem:[#allocation10 + $0x2c] sm:$0xf]
        %v4117 = vld [vmem:[#allocation10 + $0x30] sm:$0xf]
        %v4118 = vld [vmem:[#allocation10 + $0x34] sm:$0xf]
        %v4119 = vld [vmem:[#allocation10 + $0x38] sm:$0xf]
        %v4120 = vld [vmem:[#allocation10 + $0x3c] sm:$0xf]
        %v4121 = vld [vmem:[#allocation10 + $0x40] sm:$0xf]
        %v4122 = vld [vmem:[#allocation10 + $0x44] sm:$0xf]
        %v4123 = vld [vmem:[#allocation10 + $0x48] sm:$0xf]
        %v4124 = vld [vmem:[#allocation10 + $0x4c] sm:$0xf]
        %v4125 = vld [vmem:[#allocation10 + $0x50] sm:$0xf]
        %v4126 = vld [vmem:[#allocation10 + $0x54] sm:$0xf]
        %v4127 = vld [vmem:[#allocation10 + $0x58] sm:$0xf]
        %v4128 = vld [vmem:[#allocation10 + $0x5c] sm:$0xf]
        %v4129 = vld [vmem:[#allocation10 + $0x60] sm:$0xf]
        %v4130 = vld [vmem:[#allocation10 + $0x64] sm:$0xf]
        %v4131 = vld [vmem:[#allocation10 + $0x68] sm:$0xf]
        %v4132 = vld [vmem:[#allocation10 + $0x6c] sm:$0xf]
        %v4133 = vld [vmem:[#allocation10 + $0x70] sm:$0xf]
        %v4134 = vld [vmem:[#allocation10 + $0x74] sm:$0xf]
        %v4135 = vld [vmem:[#allocation10 + $0x78] sm:$0xf]
        %v4136 = vld [vmem:[#allocation10 + $0x7c] sm:$0xf]
        %v4137 = vld [vmem:[%s13] sm:$0x1]
        %v4139 = vlaneseq
        %v4140 = vshrl.u32 %v4139, 7
        %v4141 = vsub.s32 0, %v4140
        %v4142 = vrot.slane %v4137, %v4141
        %v4176 = vunpack.c.l.b16 %v4105
        %v4177 = vunpack.c.l.b16 %v4106
        %v4178 = vunpack.c.l.b16 %v4107
        %v4179 = vunpack.c.l.b16 %v4108
        %v4180 = vunpack.c.l.b16 %v4109
        %v4181 = vunpack.c.l.b16 %v4110
        %v4182 = vunpack.c.l.b16 %v4111
        %v4183 = vunpack.c.l.b16 %v4112
        %v4184 = vunpack.c.l.b16 %v4113
        %v4185 = vunpack.c.l.b16 %v4114
        %v4186 = vunpack.c.l.b16 %v4115
        %v4187 = vunpack.c.l.b16 %v4116
        %v4188 = vunpack.c.l.b16 %v4117
        %v4189 = vunpack.c.l.b16 %v4118
        %v4190 = vunpack.c.l.b16 %v4119
        %v4191 = vunpack.c.l.b16 %v4120
        %v4192 = vunpack.c.l.b16 %v4121
        %v4193 = vunpack.c.l.b16 %v4122
        %v4194 = vunpack.c.l.b16 %v4123
        %v4195 = vunpack.c.l.b16 %v4124
        %v4196 = vunpack.c.l.b16 %v4125
        %v4197 = vunpack.c.l.b16 %v4126
        %v4198 = vunpack.c.l.b16 %v4127
        %v4199 = vunpack.c.l.b16 %v4128
        %v4200 = vunpack.c.l.b16 %v4129
        %v4201 = vunpack.c.l.b16 %v4130
        %v4202 = vunpack.c.l.b16 %v4131
        %v4203 = vunpack.c.l.b16 %v4132
        %v4204 = vunpack.c.l.b16 %v4133
        %v4205 = vunpack.c.l.b16 %v4134
        %v4206 = vunpack.c.l.b16 %v4135
        %v4207 = vunpack.c.l.b16 %v4136
        %v4208 = vpack.c.b16 %v4177, %v4176
        %v4209 = vpack.c.b16 %v4179, %v4178
        %v4210 = vpack.c.b16 %v4181, %v4180
        %v4211 = vpack.c.b16 %v4183, %v4182
        %v4212 = vpack.c.b16 %v4185, %v4184
        %v4213 = vpack.c.b16 %v4187, %v4186
        %v4214 = vpack.c.b16 %v4189, %v4188
        %v4215 = vpack.c.b16 %v4191, %v4190
        %v4216 = vpack.c.b16 %v4193, %v4192
        %v4217 = vpack.c.b16 %v4195, %v4194
        %v4218 = vpack.c.b16 %v4197, %v4196
        %v4219 = vpack.c.b16 %v4199, %v4198
        %v4220 = vpack.c.b16 %v4201, %v4200
        %v4221 = vpack.c.b16 %v4203, %v4202
        %v4222 = vpack.c.b16 %v4205, %v4204
        %v4223 = vpack.c.b16 %v4207, %v4206
        %4240 = vmatprep.subr.bf16.mxu0 0
        %4241 = vmatpush1.bf16.msra.mxu0 %v4208
        %4242 = vmatprep.subr.bf16.mxu0 0
        %4243 = vmatpush1.bf16.msra.mxu0 %v4209
        %4244 = vmatprep.subr.bf16.mxu0 0
        %4245 = vmatpush1.bf16.msra.mxu0 %v4210
        %4246 = vmatprep.subr.bf16.mxu0 0
        %4247 = vmatpush1.bf16.msra.mxu0 %v4211
        %4248 = vmatprep.subr.bf16.mxu0 0
        %4249 = vmatpush1.bf16.msra.mxu0 %v4212
        %4250 = vmatprep.subr.bf16.mxu0 0
        %4251 = vmatpush1.bf16.msra.mxu0 %v4213
        %4252 = vmatprep.subr.bf16.mxu0 0
        %4253 = vmatpush1.bf16.msra.mxu0 %v4214
        %4254 = vmatprep.subr.bf16.mxu0 0
        %4255 = vmatpush1.bf16.msra.mxu0 %v4215
        %4256 = vmatprep.subr.bf16.mxu0 0
        %4257 = vmatpush1.bf16.msra.mxu0 %v4216
        %4258 = vmatprep.subr.bf16.mxu0 0
        %4259 = vmatpush1.bf16.msra.mxu0 %v4217
        %4260 = vmatprep.subr.bf16.mxu0 0
        %4261 = vmatpush1.bf16.msra.mxu0 %v4218
        %4262 = vmatprep.subr.bf16.mxu0 0
        %4263 = vmatpush1.bf16.msra.mxu0 %v4219
        %4264 = vmatprep.subr.bf16.mxu0 0
        %4265 = vmatpush1.bf16.msra.mxu0 %v4220
        %4266 = vmatprep.subr.bf16.mxu0 0
        %4267 = vmatpush1.bf16.msra.mxu0 %v4221
        %4268 = vmatprep.subr.bf16.mxu0 0
        %4269 = vmatpush1.bf16.msra.mxu0 %v4222
        %4270 = vmatprep.subr.bf16.mxu0 0
        %4271 = vmatpush1.bf16.msra.mxu0 %v4223
        %4272 = vmatprep.mubr.bf16.mxu0 %v4090
        %4273 = vmatmul.mubr.bf16.gmra.mrb[0].mxu0 %v4089
        %v4274 = vpop.f32.mrb[0].mxu0
        %v4275 = vadd.f32 %v4142, %v4274
        %v4276 = vpop.f32.mrb[0].mxu0
        %v4277 = vpop.f32.mrb[0].mxu0
        %v4278 = vadd.f32 %v4142, %v4277
        %v4279 = vpop.f32.mrb[0].mxu0
        %4280 = vmatprep.mubr.bf16.mxu0 %v4092
        %4281 = vmatmul.mubr.bf16.gmra.mrb[0].mxu0 %v4091
        %v4282 = vpop.f32.mrb[0].mxu0
        %v4283 = vadd.f32 %v4142, %v4282
        %v4284 = vpop.f32.mrb[0].mxu0
        %v4285 = vpop.f32.mrb[0].mxu0
        %v4286 = vadd.f32 %v4142, %v4285
        %v4287 = vpop.f32.mrb[0].mxu0
        %4288 = vmatprep.mubr.bf16.mxu0 %v4094
        %4289 = vmatmul.mubr.bf16.gmra.mrb[0].mxu0 %v4093
        %v4290 = vpop.f32.mrb[0].mxu0
        %v4291 = vadd.f32 %v4142, %v4290
        %v4292 = vpop.f32.mrb[0].mxu0
        %v4293 = vpop.f32.mrb[0].mxu0
        %v4294 = vadd.f32 %v4142, %v4293
        %v4295 = vpop.f32.mrb[0].mxu0
        %4296 = vmatprep.mubr.bf16.mxu0 %v4096
        %4297 = vmatmul.mubr.bf16.gmra.mrb[0].mxu0 %v4095
        %v4298 = vpop.f32.mrb[0].mxu0
        %v4299 = vadd.f32 %v4142, %v4298
        %v4300 = vpop.f32.mrb[0].mxu0
        %v4301 = vpop.f32.mrb[0].mxu0
        %v4302 = vadd.f32 %v4142, %v4301
        %v4303 = vpop.f32.mrb[0].mxu0
        %4304 = vmatprep.mubr.bf16.mxu0 %v4098
        %4305 = vmatmul.mubr.bf16.gmra.mrb[0].mxu0 %v4097
        %v4306 = vpop.f32.mrb[0].mxu0
        %v4307 = vadd.f32 %v4142, %v4306
        %v4308 = vpop.f32.mrb[0].mxu0
        %v4309 = vpop.f32.mrb[0].mxu0
        %v4310 = vadd.f32 %v4142, %v4309
        %v4311 = vpop.f32.mrb[0].mxu0
        %4312 = vmatprep.mubr.bf16.mxu0 %v4100
        %4313 = vmatmul.mubr.bf16.gmra.mrb[0].mxu0 %v4099
        %v4314 = vpop.f32.mrb[0].mxu0
        %v4315 = vadd.f32 %v4142, %v4314
        %v4316 = vpop.f32.mrb[0].mxu0
        %v4317 = vpop.f32.mrb[0].mxu0
        %v4318 = vadd.f32 %v4142, %v4317
        %v4319 = vpop.f32.mrb[0].mxu0
        %4320 = vmatprep.mubr.bf16.mxu0 %v4102
        %4321 = vmatmul.mubr.bf16.gmra.mrb[0].mxu0 %v4101
        %v4322 = vpop.f32.mrb[0].mxu0
        %v4323 = vadd.f32 %v4142, %v4322
        %v4324 = vpop.f32.mrb[0].mxu0
        %v4325 = vpop.f32.mrb[0].mxu0
        %v4326 = vadd.f32 %v4142, %v4325
        %v4327 = vpop.f32.mrb[0].mxu0
        %4328 = vmatprep.mubr.bf16.mxu0 %v4104
        %4329 = vmatmul.mubr.bf16.gmra.mrb[0].mxu0 %v4103
        %v4330 = vpop.f32.mrb[0].mxu0
        %v4331 = vadd.f32 %v4142, %v4330
        %v4332 = vpop.f32.mrb[0].mxu0
        %v4333 = vpop.f32.mrb[0].mxu0
        %v4334 = vadd.f32 %v4142, %v4333
        %v4335 = vpop.f32.mrb[0].mxu0
        %4336 = vdwg.mxu0
        %v4337 = vadd.f32 %v3812, %v4275
        %v4338 = vadd.f32 %v3813, %v4278
        %v4339 = vadd.f32 %v3814, %v4283
        %v4340 = vadd.f32 %v3815, %v4286
        %v4341 = vadd.f32 %v3816, %v4291
        %v4342 = vadd.f32 %v3817, %v4294
        %v4343 = vadd.f32 %v3818, %v4299
        %v4344 = vadd.f32 %v3819, %v4302
        %v4345 = vadd.f32 %v3820, %v4307
        %v4346 = vadd.f32 %v3821, %v4310
        %v4347 = vadd.f32 %v3822, %v4315
        %v4348 = vadd.f32 %v3823, %v4318
        %v4349 = vadd.f32 %v3824, %v4323
        %v4350 = vadd.f32 %v3825, %v4326
        %v4351 = vadd.f32 %v3826, %v4331
        %v4352 = vadd.f32 %v3827, %v4334
        %v4353 = vmul.f32 %v4337, %v665
        %v4354 = vmul.f32 %v4338, %v666
        %v4355 = vmul.f32 %v4339, %v667
        %v4356 = vmul.f32 %v4340, %v668
        %v4357 = vmul.f32 %v4341, %v669
        %v4358 = vmul.f32 %v4342, %v670
        %v4359 = vmul.f32 %v4343, %v671
        %v4360 = vmul.f32 %v4344, %v672
        %v4361 = vmul.f32 %v4345, %v673
        %v4362 = vmul.f32 %v4346, %v674
        %v4363 = vmul.f32 %v4347, %v675
        %v4364 = vmul.f32 %v4348, %v676
        %v4365 = vmul.f32 %v4349, %v677
        %v4366 = vmul.f32 %v4350, %v678
        %v4367 = vmul.f32 %v4351, %v679
        %v4368 = vmul.f32 %v4352, %v680
        %v4369 = vmul.f32 %v4353, %v4353
        %v4370 = vmul.f32 %v4354, %v4354
        %v4371 = vmul.f32 %v4355, %v4355
        %v4372 = vmul.f32 %v4356, %v4356
        %v4373 = vmul.f32 %v4357, %v4357
        %v4374 = vmul.f32 %v4358, %v4358
        %v4375 = vmul.f32 %v4359, %v4359
        %v4376 = vmul.f32 %v4360, %v4360
        %v4377 = vmul.f32 %v4361, %v4361
        %v4378 = vmul.f32 %v4362, %v4362
        %v4379 = vmul.f32 %v4363, %v4363
        %v4380 = vmul.f32 %v4364, %v4364
        %v4381 = vmul.f32 %v4365, %v4365
        %v4382 = vmul.f32 %v4366, %v4366
        %v4383 = vmul.f32 %v4367, %v4367
        %v4384 = vmul.f32 %v4368, %v4368
        %v4385 = vadd.f32 %v4353, %v4354
        %v4386 = vadd.f32 %v4385, %v4355
        %v4387 = vadd.f32 %v4386, %v4356
        %v4388 = vadd.f32 %v4387, %v4357
        %v4389 = vadd.f32 %v4388, %v4358
        %v4390 = vadd.f32 %v4389, %v4359
        %v4391 = vadd.f32 %v4390, %v4360
        %v4392 = vadd.f32 %v4391, %v4361
        %v4393 = vadd.f32 %v4392, %v4362
        %v4394 = vadd.f32 %v4393, %v4363
        %v4395 = vadd.f32 %v4394, %v4364
        %v4396 = vadd.f32 %v4395, %v4365
        %v4397 = vadd.f32 %v4396, %v4366
        %v4398 = vadd.f32 %v4397, %v4367
        %v4399 = vadd.f32 %v4398, %v4368
        %v4400 = vrot.slane %v4399, 4
        %v4401 = vadd.f32 %v4399, %v4400
        %v4402 = vrot.slane %v4401, 2
        %v4403 = vadd.f32 %v4401, %v4402
        %v4404 = vrot.slane %v4403, 1
        %v4405 = vadd.f32 %v4403, %v4404
        %v4406 = vadd.f32 %v4369, %v4370
        %v4407 = vadd.f32 %v4406, %v4371
        %v4408 = vadd.f32 %v4407, %v4372
        %v4409 = vadd.f32 %v4408, %v4373
        %v4410 = vadd.f32 %v4409, %v4374
        %v4411 = vadd.f32 %v4410, %v4375
        %v4412 = vadd.f32 %v4411, %v4376
        %v4413 = vadd.f32 %v4412, %v4377
        %v4414 = vadd.f32 %v4413, %v4378
        %v4415 = vadd.f32 %v4414, %v4379
        %v4416 = vadd.f32 %v4415, %v4380
        %v4417 = vadd.f32 %v4416, %v4381
        %v4418 = vadd.f32 %v4417, %v4382
        %v4419 = vadd.f32 %v4418, %v4383
        %v4420 = vadd.f32 %v4419, %v4384
        %v4421 = vrot.slane %v4420, 4
        %v4422 = vadd.f32 %v4420, %v4421
        %v4423 = vrot.slane %v4422, 2
        %v4424 = vadd.f32 %v4422, %v4423
        %v4425 = vrot.slane %v4424, 1
        %v4426 = vadd.f32 %v4424, %v4425
        %v4427 = vmul.f32 %v4405, %v3743
        %v4428 = vmul.f32 %v4426, %v3743
        %v4429 = vmul.f32 %v4427, %v4427
        %v4430 = vsub.f32 %v4428, %v4429
        %v4431 = vsub.f32 %v4337, %v4427
        %v4432 = vsub.f32 %v4338, %v4427
        %v4433 = vsub.f32 %v4339, %v4427
        %v4434 = vsub.f32 %v4340, %v4427
        %v4435 = vsub.f32 %v4341, %v4427
        %v4436 = vsub.f32 %v4342, %v4427
        %v4437 = vsub.f32 %v4343, %v4427
        %v4438 = vsub.f32 %v4344, %v4427
        %v4439 = vsub.f32 %v4345, %v4427
        %v4440 = vsub.f32 %v4346, %v4427
        %v4441 = vsub.f32 %v4347, %v4427
        %v4442 = vsub.f32 %v4348, %v4427
        %v4443 = vsub.f32 %v4349, %v4427
        %v4444 = vsub.f32 %v4350, %v4427
        %v4445 = vsub.f32 %v4351, %v4427
        %v4446 = vsub.f32 %v4352, %v4427
        %v4447 = vadd.f32 %v4430, 1e-05
        %v4448 = vrsqrt.pop %v4447
        %v4449 = vmul.f32 %v4431, %v4448
        %v4450 = vmul.f32 %v4432, %v4448
        %v4451 = vmul.f32 %v4433, %v4448
        %v4452 = vmul.f32 %v4434, %v4448
        %v4453 = vmul.f32 %v4435, %v4448
        %v4454 = vmul.f32 %v4436, %v4448
        %v4455 = vmul.f32 %v4437, %v4448
        %v4456 = vmul.f32 %v4438, %v4448
        %v4457 = vmul.f32 %v4439, %v4448
        %v4458 = vmul.f32 %v4440, %v4448
        %v4459 = vmul.f32 %v4441, %v4448
        %v4460 = vmul.f32 %v4442, %v4448
        %v4461 = vmul.f32 %v4443, %v4448
        %v4462 = vmul.f32 %v4444, %v4448
        %v4463 = vmul.f32 %v4445, %v4448
        %v4464 = vmul.f32 %v4446, %v4448
        %v4465 = vld [vmem:[%s14] sm:$0x1]
        %v4467 = vlaneseq
        %v4468 = vshrl.u32 %v4467, 7
        %v4469 = vsub.s32 0, %v4468
        %v4470 = vrot.slane %v4465, %v4469
        %v4472 = vmul.f32 %v4449, %v4470
        %v4473 = vmul.f32 %v4450, %v4470
        %v4474 = vmul.f32 %v4451, %v4470
        %v4475 = vmul.f32 %v4452, %v4470
        %v4476 = vmul.f32 %v4453, %v4470
        %v4477 = vmul.f32 %v4454, %v4470
        %v4478 = vmul.f32 %v4455, %v4470
        %v4479 = vmul.f32 %v4456, %v4470
        %v4480 = vmul.f32 %v4457, %v4470
        %v4481 = vmul.f32 %v4458, %v4470
        %v4482 = vmul.f32 %v4459, %v4470
        %v4483 = vmul.f32 %v4460, %v4470
        %v4484 = vmul.f32 %v4461, %v4470
        %v4485 = vmul.f32 %v4462, %v4470
        %v4486 = vmul.f32 %v4463, %v4470
        %v4487 = vmul.f32 %v4464, %v4470
        %v4488 = vld [vmem:[%s15] sm:$0x1]
        %v4490 = vlaneseq
        %v4491 = vshrl.u32 %v4490, 7
        %v4492 = vsub.s32 0, %v4491
        %v4493 = vrot.slane %v4488, %v4492
        %v4495 = vadd.f32 %v4472, %v4493
        %v4496 = vadd.f32 %v4473, %v4493
        %v4497 = vadd.f32 %v4474, %v4493
        %v4498 = vadd.f32 %v4475, %v4493
        %v4499 = vadd.f32 %v4476, %v4493
        %v4500 = vadd.f32 %v4477, %v4493
        %v4501 = vadd.f32 %v4478, %v4493
        %v4502 = vadd.f32 %v4479, %v4493
        %v4503 = vadd.f32 %v4480, %v4493
        %v4504 = vadd.f32 %v4481, %v4493
        %v4505 = vadd.f32 %v4482, %v4493
        %v4506 = vadd.f32 %v4483, %v4493
        %v4507 = vadd.f32 %v4484, %v4493
        %v4508 = vadd.f32 %v4485, %v4493
        %v4509 = vadd.f32 %v4486, %v4493
        %v4510 = vadd.f32 %v4487, %v4493
        %4511 = vst [vmem:[%s579] sm:$0xff] %v4495
        %4512 = vst [vmem:[%s579 + $0x8] sm:$0xff] %v4496
        %4513 = vst [vmem:[%s579 + $0x10] sm:$0xff] %v4497
        %4514 = vst [vmem:[%s579 + $0x18] sm:$0xff] %v4498
        %4515 = vst [vmem:[%s579 + $0x20] sm:$0xff] %v4499
        %4516 = vst [vmem:[%s579 + $0x28] sm:$0xff] %v4500
        %4517 = vst [vmem:[%s579 + $0x30] sm:$0xff] %v4501
        %4518 = vst [vmem:[%s579 + $0x38] sm:$0xff] %v4502
        %4519 = vst [vmem:[%s579 + $0x40] sm:$0xff] %v4503
        %4520 = vst [vmem:[%s579 + $0x48] sm:$0xff] %v4504
        %4521 = vst [vmem:[%s579 + $0x50] sm:$0xff] %v4505
        %4522 = vst [vmem:[%s579 + $0x58] sm:$0xff] %v4506
        %4523 = vst [vmem:[%s579 + $0x60] sm:$0xff] %v4507
        %4524 = vst [vmem:[%s579 + $0x68] sm:$0xff] %v4508
        %4525 = vst [vmem:[%s579 + $0x70] sm:$0xff] %v4509
        %4526 = vst [vmem:[%s579 + $0x78] sm:$0xff] %v4510
        %s4527 = sand.u32 %s377, 1
        %s4528 = scalar_lea.sflag [#allocation6], %s4527
        %s4529 = sand.u32 %s377, 1
        %s4530 = smul.addr %s4529, 128
        %s4531 = scalar_lea.vmem [#allocation12], %s4530
        // Predicated region
        $region97: #{tpu_custom_call.1} parent=79 // pred_check
          %p4532 = pneg %p387
        $region98: #{tpu_custom_call.1} parent=79 // pred_check_branch
          %4534 = sbr.rel (%p4532) target = $region100
        $region99: #{tpu_custom_call.1} parent=79 // pred_region
          %s4536 = ssub.s32 2048, 2048
          %4537 = vsyncadd %s4528, %s4536
          %s4538 = smul.addr %s39, 16
          %s4539 = smul.addr %s4538, 128
          %s4540 = scalar_lea.hbm %s16, %s4539
          %s4541 = sshll.u32 %s4531, 4
          %s4542 = int_to_ptr.vmem [resolvable:$true] %s4541
          %4547 = dma.vmem_to_hbm [thread:$0]  %s4542, 2048, %s4540, %s4528, 128, 128, 8
        $region100: #{tpu_custom_call.1} parent=79 // pred_fallthru
          _
      $region80: #{tpu_custom_call.1} parent=5 // pred_fallthru
        _
      %p4548 = scmp.le.s32.totalorder 2, %s34
      // Predicated region
      $region101: #{tpu_custom_call.1} parent=5 // pred_check
        %p4549 = pneg %p4548
      $region102: #{tpu_custom_call.1} parent=5 // pred_check_branch
        %4551 = sbr.rel (%p4549) target = $region104
      $region103: #{tpu_custom_call.1} parent=5 // pred_region
        %s4552 = ssub.s32 %s34, 2
        // Predicated region
        $region105: #{tpu_custom_call.1} parent=103 // pred_check
          %p4553 = pneg %p393
        $region106: #{tpu_custom_call.1} parent=103 // pred_check_branch
          %4555 = sbr.rel (%p4553) target = $region108
        $region107: #{tpu_custom_call.1} parent=103 // pred_region
          %s4556 = sand.u32 %s378, 1
          %s4557 = scalar_lea.sflag [#allocation6], %s4556
          %s4558 = sand.u32 %s378, 1
          %s4559 = smul.addr %s4558, 128
          %s4560 = scalar_lea.vmem [#allocation12], %s4559
          %4561 = dma.done %s4557, 2048
        $region108: #{tpu_custom_call.1} parent=103 // pred_fallthru
          _
      $region104: #{tpu_custom_call.1} parent=5 // pred_fallthru
        _
    $region6: #{tpu_custom_call.1} parent=1 // loop_footer
      %s38 = sadd.s32 1, %s34
    $region7: #{tpu_custom_call.1} parent=1 // loop_footer_branch
      %33 = sbr.rel target = $region3
    $region8: #{tpu_custom_call.1} parent=1 // loop_exit
      _
    %4562 = vsyncpa [#allocation5], 1
    %s4563 = scalar_lea.sflag [#allocation5], 1
    %4564 = vsyncpa %s4563, 1
    %4565 = vsyncpa [#allocation8], 1
    %4566 = vsyncpa [#allocation11], 1
    %4567 = vsyncpa [#allocation6], 1
    %s4568 = scalar_lea.sflag [#allocation6], 1
    %4569 = vsyncpa %s4568, 1

</llo_original>
